<compile_context>
chip_gen: v7x
topology: tpu7x:2x2x1
jax: 0.10.0
libtpu: 0.0.40
codegen_flags: <defaults>
</compile_context>

<pallas_src>
import functools

import jax
import jax.numpy as jnp
from jax.experimental import pallas as pl
from jax.experimental.pallas import tpu as pltpu


# ------------------------------- helpers ------------------------------------

def _round_up(x, m):
    return (x + m - 1) // m * m


def _pad_to(a, shape):
    return jnp.pad(a, [(0, s - d) for s, d in zip(shape, a.shape)])


def _fold_bn(gamma, beta, mean, var, eps=1e-5):
    scale = gamma / jnp.sqrt(var + eps)
    shift = beta - mean * scale
    return scale, shift


def _pick_images_per_block(n_images, rows_per_image, target_rows=512):
    """Images per grid block: keep ~target rows, >=2 blocks for megacore."""
    divisors = [d for d in range(1, n_images + 1) if n_images % d == 0]
    fitting = [d for d in divisors if d * rows_per_image <= target_rows] or [1]
    tb = max(fitting)
    if n_images >= 2 and n_images // tb < 2:
        two_plus = [d for d in fitting if n_images // d >= 2]
        if two_plus:
            tb = max(two_plus)
    # row tile must be sublane-aligned (multiple of 8) unless it is the full M
    if (tb * rows_per_image) % 8 != 0 and tb != n_images:
        tb = n_images
    return tb


# ------------------------------ fused kernel --------------------------------

def _bottleneck_kernel(x_ref, hh_ref, ww_ref, w1_ref, w2_ref, w3_ref,
                       b1_ref, b2_ref, b3_ref, o_ref, a1pad_ref,
                       *, H, W, dilation, pad, Cp, padr):
    TM = x_ref.shape[0]
    x_bf = x_ref[...]                                     # (TM, Cin_p) bf16

    # ---- conv1 (1x1) + bn1 + relu  (BN scale folded into w1) ---------------
    a1 = jnp.dot(x_bf, w1_ref[...], preferred_element_type=jnp.float32)
    a1 = jnp.maximum(a1 + b1_ref[...], 0.0)               # (TM, Cp) f32

    # stage conv1 output into a haloed row buffer for the 3x3 taps
    a1pad_ref[padr:padr + TM, :] = a1

    hh = hh_ref[...]                                      # (TM, 1) int32, h coord
    ww = ww_ref[...]                                      # (TM, 1) int32, w coord

    # ---- conv2 (3x3, dilated) + bn2 + relu: accumulate 9 shifted taps ------
    acc = jnp.zeros_like(a1)
    for t in range(9):
        kh, kw = divmod(t, 3)
        dh = kh * dilation - pad
        dw = kw * dilation - pad
        off = dh * W + dw                                 # static row offset
        src = a1pad_ref[padr + off:padr + off + TM, :]    # shifted window
        valid = ((hh + dh >= 0) & (hh + dh < H) &
                 (ww + dw >= 0) & (ww + dw < W))
        src = jnp.where(valid, src, 0.0).astype(jnp.bfloat16)
        acc = acc + jnp.dot(src, w2_ref[t * Cp:(t + 1) * Cp, :],
                            preferred_element_type=jnp.float32)
    a2 = jnp.maximum(acc + b2_ref[...], 0.0)              # (TM, Cp) f32

    # ---- conv3 (1x1) + bn3 + identity residual + relu ----------------------
    a3 = jnp.dot(a2.astype(jnp.bfloat16), w3_ref[...],
                 preferred_element_type=jnp.float32)
    a3 = a3 + b3_ref[...] + x_bf.astype(jnp.float32)
    o_ref[...] = jnp.maximum(a3, 0.0).astype(o_ref.dtype)


# ------------------------------- wrapper -------------------------------------

def bottleneck_forward(x_nchw, p, stride=1, dilation=1, target_rows=512):
    """Bottleneck forward (downsample=None).  x_nchw: (N, inplanes, H, W)."""
    # NOTE: in a full network keep activations NHWC end-to-end; this transpose
    # only adapts the PyTorch-style NCHW test input.
    x = jnp.transpose(x_nchw, (0, 2, 3, 1)).astype(jnp.float32)   # NHWC
    if stride != 1:
        # TODO(synk): stride>1 needs a downsample branch for the residual.
        x = x[:, ::stride, ::stride, :]
    Nb, H, W, Cin = x.shape
    planes = p["w1"].shape[0]
    Cout = 4 * planes
    assert Cin == Cout, "identity residual requires inplanes == planes * 4"
    pad = {1: 1, 2: 2, 4: 4}[dilation]

    # channel widths padded to lane multiples of 128
    Cin_p = max(128, _round_up(Cin, 128))
    Cp = max(128, _round_up(planes, 128))
    Cout_p = max(128, _round_up(Cout, 128))
    assert Cin_p == Cout_p

    # fold BN (inference mode) into weights / per-channel shifts
    s1, b1 = _fold_bn(p["g1"], p["b1"], p["m1"], p["v1"])
    s2, b2 = _fold_bn(p["g2"], p["b2"], p["m2"], p["v2"])
    s3, b3 = _fold_bn(p["g3"], p["b3"], p["m3"], p["v3"])

    w1 = jnp.transpose(p["w1"].reshape(planes, Cin), (1, 0)) * s1[None, :]
    w2 = (jnp.transpose(p["w2"], (2, 3, 1, 0)).reshape(9, planes, planes)
          * s2[None, None, :])
    w3 = jnp.transpose(p["w3"].reshape(Cout, planes), (1, 0)) * s3[None, :]

    w1p = _pad_to(w1, (Cin_p, Cp)).astype(jnp.bfloat16)
    w2p = jnp.pad(w2, ((0, 0), (0, Cp - planes), (0, Cp - planes)))
    w2p = w2p.reshape(9 * Cp, Cp).astype(jnp.bfloat16)
    w3p = _pad_to(w3, (Cp, Cout_p)).astype(jnp.bfloat16)
    b1p = _pad_to(b1.reshape(1, planes), (1, Cp)).astype(jnp.float32)
    b2p = _pad_to(b2.reshape(1, planes), (1, Cp)).astype(jnp.float32)
    b3p = _pad_to(b3.reshape(1, Cout), (1, Cout_p)).astype(jnp.float32)

    M = Nb * H * W
    x2d = _pad_to(x.reshape(M, Cin), (M, Cin_p)).astype(jnp.bfloat16)

    # per-row (h, w) coordinates (precomputed so the kernel needs no vector div/mod)
    hw = jnp.arange(H * W, dtype=jnp.int32)
    hh_all = jnp.tile(hw // W, (Nb,)).reshape(M, 1)
    ww_all = jnp.tile(hw % W, (Nb,)).reshape(M, 1)

    TB = _pick_images_per_block(Nb, H * W, target_rows)
    TM = TB * H * W
    grid = (Nb // TB,)
    padr = _round_up(pad * W + pad, 8)        # sublane-aligned halo rows

    kernel = functools.partial(_bottleneck_kernel, H=H, W=W, dilation=dilation,
                               pad=pad, Cp=Cp, padr=padr)

    out2d = pl.pallas_call(
        kernel,
        out_shape=jax.ShapeDtypeStruct((M, Cout_p), jnp.float32),
        grid=grid,
        in_specs=[
            pl.BlockSpec((TM, Cin_p), lambda i: (i, 0)),      # x rows
            pl.BlockSpec((TM, 1), lambda i: (i, 0)),          # h coords
            pl.BlockSpec((TM, 1), lambda i: (i, 0)),          # w coords
            pl.BlockSpec((Cin_p, Cp), lambda i: (0, 0)),      # w1 (resident)
            pl.BlockSpec((9 * Cp, Cp), lambda i: (0, 0)),     # w2 taps (resident)
            pl.BlockSpec((Cp, Cout_p), lambda i: (0, 0)),     # w3 (resident)
            pl.BlockSpec((1, Cp), lambda i: (0, 0)),          # bn1 shift
            pl.BlockSpec((1, Cp), lambda i: (0, 0)),          # bn2 shift
            pl.BlockSpec((1, Cout_p), lambda i: (0, 0)),      # bn3 shift
        ],
        out_specs=pl.BlockSpec((TM, Cout_p), lambda i: (i, 0)),
        scratch_shapes=[pltpu.VMEM((TM + 2 * padr, Cp), jnp.float32)],
        compiler_params=pltpu.CompilerParams(
            dimension_semantics=("parallel",),
            vmem_limit_bytes=48 * 1024 * 1024),
    )(x2d, hh_all, ww_all, w1p, w2p, w3p, b1p, b2p, b3p)

    out = out2d[:, :Cout].reshape(Nb, H, W, Cout)
    return jnp.transpose(out, (0, 3, 1, 2))                   # back to NCHW


# ------------------------------- reference ----------------------------------

def bottleneck_ref(x, p, stride=1, dilation=1):
    def conv(x, w, stride=1, dilation=1, padding=0):
        return jax.lax.conv_general_dilated(
            x, w, window_strides=(stride, stride),
            padding=[(padding, padding), (padding, padding)],
            rhs_dilation=(dilation, dilation),
            dimension_numbers=("NCHW", "OIHW", "NCHW"))

    def bn(x, g, b, m, v, eps=1e-5):
        s = g / jnp.sqrt(v + eps)
        return x * s[None, :, None, None] + (b - m * s)[None, :, None, None]

    pad = {1: 1, 2: 2, 4: 4}[dilation]
    out = jnp.maximum(bn(conv(x, p["w1"], stride=stride),
                         p["g1"], p["b1"], p["m1"], p["v1"]), 0.0)
    out = jnp.maximum(bn(conv(out, p["w2"], dilation=dilation, padding=pad),
                         p["g2"], p["b2"], p["m2"], p["v2"]), 0.0)
    out = bn(conv(out, p["w3"]), p["g3"], p["b3"], p["m3"], p["v3"])
    out = out + x
    return jnp.maximum(out, 0.0)


# --------------------------------- main --------------------------------------

if __name__ == "__main__":
    # identity residual requires inplanes == planes * 4 and stride == 1
    Nb, planes, stride, dilation = 2, 4, 1, 1
    inplanes = planes * 4          # 16
    H = W = 8

    key = jax.random.PRNGKey(0)
    ks = jax.random.split(key, 16)

    params = {
        "w1": 0.1 * jax.random.normal(ks[0], (planes, inplanes, 1, 1), jnp.float32),
        "w2": 0.1 * jax.random.normal(ks[1], (planes, planes, 3, 3), jnp.float32),
        "w3": 0.1 * jax.random.normal(ks[2], (planes * 4, planes, 1, 1), jnp.float32),
        "g1": 1.0 + 0.1 * jax.random.normal(ks[3], (planes,), jnp.float32),
        "b1": 0.1 * jax.random.normal(ks[4], (planes,), jnp.float32),
        "m1": 0.1 * jax.random.normal(ks[5], (planes,), jnp.float32),
        "v1": jnp.abs(1.0 + 0.1 * jax.random.normal(ks[6], (planes,), jnp.float32)),
        "g2": 1.0 + 0.1 * jax.random.normal(ks[7], (planes,), jnp.float32),
        "b2": 0.1 * jax.random.normal(ks[8], (planes,), jnp.float32),
        "m2": 0.1 * jax.random.normal(ks[9], (planes,), jnp.float32),
        "v2": jnp.abs(1.0 + 0.1 * jax.random.normal(ks[10], (planes,), jnp.float32)),
        "g3": 1.0 + 0.1 * jax.random.normal(ks[11], (planes * 4,), jnp.float32),
        "b3": 0.1 * jax.random.normal(ks[12], (planes * 4,), jnp.float32),
        "m3": 0.1 * jax.random.normal(ks[13], (planes * 4,), jnp.float32),
        "v3": jnp.abs(1.0 + 0.1 * jax.random.normal(ks[14], (planes * 4,), jnp.float32)),
    }

    x = jax.random.normal(ks[15], (Nb, inplanes, H, W), jnp.float32)

    out = bottleneck_forward(x, params, stride=stride, dilation=dilation)
    out = jax.block_until_ready(out)

    ref = bottleneck_ref(x, params, stride=stride, dilation=dilation)
    assert out.shape == ref.shape == (Nb, planes * 4, H, W)
    # bf16 matmul operands (f32 accumulation) => slightly looser tolerance
    err = float(jnp.max(jnp.abs(out - ref)))
    assert jnp.allclose(out, ref, atol=3e-2, rtol=3e-2), err

    print("KERNEL_OK")
</pallas_src>

<mosaic_0001>
module attributes {stable_mosaic.version = 11 : i64} {
  func.func @_bottleneck_kernel(%arg0: i32, %arg1: memref<64x128xbf16, #tpu.memory_space<vmem>>, %arg2: memref<64x1xi32, #tpu.memory_space<vmem>>, %arg3: memref<64x1xi32, #tpu.memory_space<vmem>>, %arg4: memref<128x128xbf16, #tpu.memory_space<vmem>>, %arg5: memref<1152x128xbf16, #tpu.memory_space<vmem>>, %arg6: memref<128x128xbf16, #tpu.memory_space<vmem>>, %arg7: memref<1x128xf32, #tpu.memory_space<vmem>>, %arg8: memref<1x128xf32, #tpu.memory_space<vmem>>, %arg9: memref<1x128xf32, #tpu.memory_space<vmem>>, %arg10: memref<64x128xf32, #tpu.memory_space<vmem>>, %arg11: memref<96x128xf32, #tpu.memory_space<vmem>>) attributes {dimension_semantics = [#tpu.dimension_semantics<parallel>], iteration_bounds = array<i64: 2>, scalar_prefetch = 0 : i64, scratch_operands = 1 : i64, tpu.core_type = #tpu.core_type<tc>, window_params = [{transform_indices = @transform_0, window_bounds = array<i64: 64, 128>}, {transform_indices = @transform_1, window_bounds = array<i64: 64, 1>}, {transform_indices = @transform_2, window_bounds = array<i64: 64, 1>}, {pipeline_mode = #tpu.pipeline_mode<synchronous>, transform_indices = @transform_3, window_bounds = array<i64: 128, 128>}, {pipeline_mode = #tpu.pipeline_mode<synchronous>, transform_indices = @transform_4, window_bounds = array<i64: 1152, 128>}, {pipeline_mode = #tpu.pipeline_mode<synchronous>, transform_indices = @transform_5, window_bounds = array<i64: 128, 128>}, {pipeline_mode = #tpu.pipeline_mode<synchronous>, transform_indices = @transform_6, window_bounds = array<i64: 1, 128>}, {pipeline_mode = #tpu.pipeline_mode<synchronous>, transform_indices = @transform_7, window_bounds = array<i64: 1, 128>}, {pipeline_mode = #tpu.pipeline_mode<synchronous>, transform_indices = @transform_8, window_bounds = array<i64: 1, 128>}, {transform_indices = @transform_9, window_bounds = array<i64: 64, 128>}]} {
    %c0 = arith.constant 0 : index
    %c0_0 = arith.constant 0 : index
    %0 = vector.load %arg1[%c0, %c0_0] : memref<64x128xbf16, #tpu.memory_space<vmem>>, vector<64x128xbf16>
    %c0_1 = arith.constant 0 : index
    %c0_2 = arith.constant 0 : index
    %1 = vector.load %arg4[%c0_1, %c0_2] : memref<128x128xbf16, #tpu.memory_space<vmem>>, vector<128x128xbf16>
    %cst = arith.constant dense<0.000000e+00> : vector<64x128xf32>
    %2 = tpu.matmul %0, %1, %cst {dimension_numbers = #tpu.dot_dimension_numbers<[1], [0], [0], [1], [0, 0, 1, 1], [], []>} : vector<64x128xbf16>, vector<128x128xbf16>, vector<64x128xf32> -> vector<64x128xf32>
    %c0_3 = arith.constant 0 : index
    %c0_4 = arith.constant 0 : index
    %3 = vector.load %arg7[%c0_3, %c0_4] : memref<1x128xf32, #tpu.memory_space<vmem>>, vector<1x128xf32>
    %4 = vector.broadcast %3 : vector<1x128xf32> to vector<64x128xf32>
    %5 = arith.addf %2, %4 : vector<64x128xf32>
    %cst_5 = arith.constant 0.000000e+00 : f32
    %6 = vector.broadcast %cst_5 : f32 to vector<64x128xf32>
    %7 = arith.maximumf %5, %6 : vector<64x128xf32>
    %c16 = arith.constant 16 : index
    %c0_6 = arith.constant 0 : index
    %8 = vector.load %arg11[%c16, %c0_6] : memref<96x128xf32, #tpu.memory_space<vmem>>, vector<64x128xf32>
    tpu.vector_store %arg11[%c16, %c0_6], %7 {strides = array<i32>} : memref<96x128xf32, #tpu.memory_space<vmem>>, vector<64x128xf32>,
    %c0_7 = arith.constant 0 : index
    %c0_8 = arith.constant 0 : index
    %9 = vector.load %arg2[%c0_7, %c0_8] : memref<64x1xi32, #tpu.memory_space<vmem>>, vector<64x1xi32>
    %c0_9 = arith.constant 0 : index
    %c0_10 = arith.constant 0 : index
    %10 = vector.load %arg3[%c0_9, %c0_10] : memref<64x1xi32, #tpu.memory_space<vmem>>, vector<64x1xi32>
    %cst_11 = arith.constant 0.000000e+00 : f32
    %11 = vector.broadcast %cst_11 : f32 to vector<64x128xf32>
    %c7 = arith.constant 7 : index
    %c0_12 = arith.constant 0 : index
    %12 = vector.load %arg11[%c7, %c0_12] : memref<96x128xf32, #tpu.memory_space<vmem>>, vector<64x128xf32>
    %c-1_i32 = arith.constant -1 : i32
    %13 = vector.broadcast %c-1_i32 : i32 to vector<64x1xi32>
    %14 = arith.addi %9, %13 : vector<64x1xi32>
    %c0_i32 = arith.constant 0 : i32
    %15 = vector.broadcast %c0_i32 : i32 to vector<64x1xi32>
    %16 = arith.cmpi sge, %14, %15 : vector<64x1xi32>
    %c-1_i32_13 = arith.constant -1 : i32
    %17 = vector.broadcast %c-1_i32_13 : i32 to vector<64x1xi32>
    %18 = arith.addi %9, %17 : vector<64x1xi32>
    %c8_i32 = arith.constant 8 : i32
    %19 = vector.broadcast %c8_i32 : i32 to vector<64x1xi32>
    %20 = arith.cmpi slt, %18, %19 : vector<64x1xi32>
    %21 = arith.andi %16, %20 : vector<64x1xi1>
    %c-1_i32_14 = arith.constant -1 : i32
    %22 = vector.broadcast %c-1_i32_14 : i32 to vector<64x1xi32>
    %23 = arith.addi %10, %22 : vector<64x1xi32>
    %c0_i32_15 = arith.constant 0 : i32
    %24 = vector.broadcast %c0_i32_15 : i32 to vector<64x1xi32>
    %25 = arith.cmpi sge, %23, %24 : vector<64x1xi32>
    %26 = arith.andi %21, %25 : vector<64x1xi1>
    %c-1_i32_16 = arith.constant -1 : i32
    %27 = vector.broadcast %c-1_i32_16 : i32 to vector<64x1xi32>
    %28 = arith.addi %10, %27 : vector<64x1xi32>
    %c8_i32_17 = arith.constant 8 : i32
    %29 = vector.broadcast %c8_i32_17 : i32 to vector<64x1xi32>
    %30 = arith.cmpi slt, %28, %29 : vector<64x1xi32>
    %31 = arith.andi %26, %30 : vector<64x1xi1>
    %cst_18 = arith.constant 0.000000e+00 : f32
    %32 = vector.shape_cast %31 : vector<64x1xi1> to vector<64x1xi1>
    %33 = vector.broadcast %32 : vector<64x1xi1> to vector<64x128xi1>
    %34 = vector.broadcast %cst_18 : f32 to vector<64x128xf32>
    %35 = arith.select %33, %12, %34 : vector<64x128xi1>, vector<64x128xf32>
    %36 = arith.truncf %35 : vector<64x128xf32> to vector<64x128xbf16>
    %c0_19 = arith.constant 0 : index
    %c0_20 = arith.constant 0 : index
    %37 = vector.load %arg5[%c0_19, %c0_20] : memref<1152x128xbf16, #tpu.memory_space<vmem>>, vector<128x128xbf16>
    %cst_21 = arith.constant dense<0.000000e+00> : vector<64x128xf32>
    %38 = tpu.matmul %36, %37, %cst_21 {dimension_numbers = #tpu.dot_dimension_numbers<[1], [0], [0], [1], [0, 0, 1, 1], [], []>} : vector<64x128xbf16>, vector<128x128xbf16>, vector<64x128xf32> -> vector<64x128xf32>
    %39 = arith.addf %11, %38 : vector<64x128xf32>
    %c8 = arith.constant 8 : index
    %c0_22 = arith.constant 0 : index
    %40 = vector.load %arg11[%c8, %c0_22] : memref<96x128xf32, #tpu.memory_space<vmem>>, vector<64x128xf32>
    %c-1_i32_23 = arith.constant -1 : i32
    %41 = vector.broadcast %c-1_i32_23 : i32 to vector<64x1xi32>
    %42 = arith.addi %9, %41 : vector<64x1xi32>
    %c0_i32_24 = arith.constant 0 : i32
    %43 = vector.broadcast %c0_i32_24 : i32 to vector<64x1xi32>
    %44 = arith.cmpi sge, %42, %43 : vector<64x1xi32>
    %c-1_i32_25 = arith.constant -1 : i32
    %45 = vector.broadcast %c-1_i32_25 : i32 to vector<64x1xi32>
    %46 = arith.addi %9, %45 : vector<64x1xi32>
    %c8_i32_26 = arith.constant 8 : i32
    %47 = vector.broadcast %c8_i32_26 : i32 to vector<64x1xi32>
    %48 = arith.cmpi slt, %46, %47 : vector<64x1xi32>
    %49 = arith.andi %44, %48 : vector<64x1xi1>
    %c0_i32_27 = arith.constant 0 : i32
    %50 = vector.broadcast %c0_i32_27 : i32 to vector<64x1xi32>
    %51 = arith.addi %10, %50 : vector<64x1xi32>
    %c0_i32_28 = arith.constant 0 : i32
    %52 = vector.broadcast %c0_i32_28 : i32 to vector<64x1xi32>
    %53 = arith.cmpi sge, %51, %52 : vector<64x1xi32>
    %54 = arith.andi %49, %53 : vector<64x1xi1>
    %c0_i32_29 = arith.constant 0 : i32
    %55 = vector.broadcast %c0_i32_29 : i32 to vector<64x1xi32>
    %56 = arith.addi %10, %55 : vector<64x1xi32>
    %c8_i32_30 = arith.constant 8 : i32
    %57 = vector.broadcast %c8_i32_30 : i32 to vector<64x1xi32>
    %58 = arith.cmpi slt, %56, %57 : vector<64x1xi32>
    %59 = arith.andi %54, %58 : vector<64x1xi1>
    %cst_31 = arith.constant 0.000000e+00 : f32
    %60 = vector.shape_cast %59 : vector<64x1xi1> to vector<64x1xi1>
    %61 = vector.broadcast %60 : vector<64x1xi1> to vector<64x128xi1>
    %62 = vector.broadcast %cst_31 : f32 to vector<64x128xf32>
    %63 = arith.select %61, %40, %62 : vector<64x128xi1>, vector<64x128xf32>
    %64 = arith.truncf %63 : vector<64x128xf32> to vector<64x128xbf16>
    %c128 = arith.constant 128 : index
    %c0_32 = arith.constant 0 : index
    %65 = vector.load %arg5[%c128, %c0_32] : memref<1152x128xbf16, #tpu.memory_space<vmem>>, vector<128x128xbf16>
    %cst_33 = arith.constant dense<0.000000e+00> : vector<64x128xf32>
    %66 = tpu.matmul %64, %65, %cst_33 {dimension_numbers = #tpu.dot_dimension_numbers<[1], [0], [0], [1], [0, 0, 1, 1], [], []>} : vector<64x128xbf16>, vector<128x128xbf16>, vector<64x128xf32> -> vector<64x128xf32>
    %67 = arith.addf %39, %66 : vector<64x128xf32>
    %c9 = arith.constant 9 : index
    %c0_34 = arith.constant 0 : index
    %68 = vector.load %arg11[%c9, %c0_34] : memref<96x128xf32, #tpu.memory_space<vmem>>, vector<64x128xf32>
    %c-1_i32_35 = arith.constant -1 : i32
    %69 = vector.broadcast %c-1_i32_35 : i32 to vector<64x1xi32>
    %70 = arith.addi %9, %69 : vector<64x1xi32>
    %c0_i32_36 = arith.constant 0 : i32
    %71 = vector.broadcast %c0_i32_36 : i32 to vector<64x1xi32>
    %72 = arith.cmpi sge, %70, %71 : vector<64x1xi32>
    %c-1_i32_37 = arith.constant -1 : i32
    %73 = vector.broadcast %c-1_i32_37 : i32 to vector<64x1xi32>
    %74 = arith.addi %9, %73 : vector<64x1xi32>
    %c8_i32_38 = arith.constant 8 : i32
    %75 = vector.broadcast %c8_i32_38 : i32 to vector<64x1xi32>
    %76 = arith.cmpi slt, %74, %75 : vector<64x1xi32>
    %77 = arith.andi %72, %76 : vector<64x1xi1>
    %c1_i32 = arith.constant 1 : i32
    %78 = vector.broadcast %c1_i32 : i32 to vector<64x1xi32>
    %79 = arith.addi %10, %78 : vector<64x1xi32>
    %c0_i32_39 = arith.constant 0 : i32
    %80 = vector.broadcast %c0_i32_39 : i32 to vector<64x1xi32>
    %81 = arith.cmpi sge, %79, %80 : vector<64x1xi32>
    %82 = arith.andi %77, %81 : vector<64x1xi1>
    %c1_i32_40 = arith.constant 1 : i32
    %83 = vector.broadcast %c1_i32_40 : i32 to vector<64x1xi32>
    %84 = arith.addi %10, %83 : vector<64x1xi32>
    %c8_i32_41 = arith.constant 8 : i32
    %85 = vector.broadcast %c8_i32_41 : i32 to vector<64x1xi32>
    %86 = arith.cmpi slt, %84, %85 : vector<64x1xi32>
    %87 = arith.andi %82, %86 : vector<64x1xi1>
    %cst_42 = arith.constant 0.000000e+00 : f32
    %88 = vector.shape_cast %87 : vector<64x1xi1> to vector<64x1xi1>
    %89 = vector.broadcast %88 : vector<64x1xi1> to vector<64x128xi1>
    %90 = vector.broadcast %cst_42 : f32 to vector<64x128xf32>
    %91 = arith.select %89, %68, %90 : vector<64x128xi1>, vector<64x128xf32>
    %92 = arith.truncf %91 : vector<64x128xf32> to vector<64x128xbf16>
    %c256 = arith.constant 256 : index
    %c0_43 = arith.constant 0 : index
    %93 = vector.load %arg5[%c256, %c0_43] : memref<1152x128xbf16, #tpu.memory_space<vmem>>, vector<128x128xbf16>
    %cst_44 = arith.constant dense<0.000000e+00> : vector<64x128xf32>
    %94 = tpu.matmul %92, %93, %cst_44 {dimension_numbers = #tpu.dot_dimension_numbers<[1], [0], [0], [1], [0, 0, 1, 1], [], []>} : vector<64x128xbf16>, vector<128x128xbf16>, vector<64x128xf32> -> vector<64x128xf32>
    %95 = arith.addf %67, %94 : vector<64x128xf32>
    %c15 = arith.constant 15 : index
    %c0_45 = arith.constant 0 : index
    %96 = vector.load %arg11[%c15, %c0_45] : memref<96x128xf32, #tpu.memory_space<vmem>>, vector<64x128xf32>
    %c0_i32_46 = arith.constant 0 : i32
    %97 = vector.broadcast %c0_i32_46 : i32 to vector<64x1xi32>
    %98 = arith.addi %9, %97 : vector<64x1xi32>
    %c0_i32_47 = arith.constant 0 : i32
    %99 = vector.broadcast %c0_i32_47 : i32 to vector<64x1xi32>
    %100 = arith.cmpi sge, %98, %99 : vector<64x1xi32>
    %c0_i32_48 = arith.constant 0 : i32
    %101 = vector.broadcast %c0_i32_48 : i32 to vector<64x1xi32>
    %102 = arith.addi %9, %101 : vector<64x1xi32>
    %c8_i32_49 = arith.constant 8 : i32
    %103 = vector.broadcast %c8_i32_49 : i32 to vector<64x1xi32>
    %104 = arith.cmpi slt, %102, %103 : vector<64x1xi32>
    %105 = arith.andi %100, %104 : vector<64x1xi1>
    %c-1_i32_50 = arith.constant -1 : i32
    %106 = vector.broadcast %c-1_i32_50 : i32 to vector<64x1xi32>
    %107 = arith.addi %10, %106 : vector<64x1xi32>
    %c0_i32_51 = arith.constant 0 : i32
    %108 = vector.broadcast %c0_i32_51 : i32 to vector<64x1xi32>
    %109 = arith.cmpi sge, %107, %108 : vector<64x1xi32>
    %110 = arith.andi %105, %109 : vector<64x1xi1>
    %c-1_i32_52 = arith.constant -1 : i32
    %111 = vector.broadcast %c-1_i32_52 : i32 to vector<64x1xi32>
    %112 = arith.addi %10, %111 : vector<64x1xi32>
    %c8_i32_53 = arith.constant 8 : i32
    %113 = vector.broadcast %c8_i32_53 : i32 to vector<64x1xi32>
    %114 = arith.cmpi slt, %112, %113 : vector<64x1xi32>
    %115 = arith.andi %110, %114 : vector<64x1xi1>
    %cst_54 = arith.constant 0.000000e+00 : f32
    %116 = vector.shape_cast %115 : vector<64x1xi1> to vector<64x1xi1>
    %117 = vector.broadcast %116 : vector<64x1xi1> to vector<64x128xi1>
    %118 = vector.broadcast %cst_54 : f32 to vector<64x128xf32>
    %119 = arith.select %117, %96, %118 : vector<64x128xi1>, vector<64x128xf32>
    %120 = arith.truncf %119 : vector<64x128xf32> to vector<64x128xbf16>
    %c384 = arith.constant 384 : index
    %c0_55 = arith.constant 0 : index
    %121 = vector.load %arg5[%c384, %c0_55] : memref<1152x128xbf16, #tpu.memory_space<vmem>>, vector<128x128xbf16>
    %cst_56 = arith.constant dense<0.000000e+00> : vector<64x128xf32>
    %122 = tpu.matmul %120, %121, %cst_56 {dimension_numbers = #tpu.dot_dimension_numbers<[1], [0], [0], [1], [0, 0, 1, 1], [], []>} : vector<64x128xbf16>, vector<128x128xbf16>, vector<64x128xf32> -> vector<64x128xf32>
    %123 = arith.addf %95, %122 : vector<64x128xf32>
    %c16_57 = arith.constant 16 : index
    %c0_58 = arith.constant 0 : index
    %124 = vector.load %arg11[%c16_57, %c0_58] : memref<96x128xf32, #tpu.memory_space<vmem>>, vector<64x128xf32>
    %c0_i32_59 = arith.constant 0 : i32
    %125 = vector.broadcast %c0_i32_59 : i32 to vector<64x1xi32>
    %126 = arith.addi %9, %125 : vector<64x1xi32>
    %c0_i32_60 = arith.constant 0 : i32
    %127 = vector.broadcast %c0_i32_60 : i32 to vector<64x1xi32>
    %128 = arith.cmpi sge, %126, %127 : vector<64x1xi32>
    %c0_i32_61 = arith.constant 0 : i32
    %129 = vector.broadcast %c0_i32_61 : i32 to vector<64x1xi32>
    %130 = arith.addi %9, %129 : vector<64x1xi32>
    %c8_i32_62 = arith.constant 8 : i32
    %131 = vector.broadcast %c8_i32_62 : i32 to vector<64x1xi32>
    %132 = arith.cmpi slt, %130, %131 : vector<64x1xi32>
    %133 = arith.andi %128, %132 : vector<64x1xi1>
    %c0_i32_63 = arith.constant 0 : i32
    %134 = vector.broadcast %c0_i32_63 : i32 to vector<64x1xi32>
    %135 = arith.addi %10, %134 : vector<64x1xi32>
    %c0_i32_64 = arith.constant 0 : i32
    %136 = vector.broadcast %c0_i32_64 : i32 to vector<64x1xi32>
    %137 = arith.cmpi sge, %135, %136 : vector<64x1xi32>
    %138 = arith.andi %133, %137 : vector<64x1xi1>
    %c0_i32_65 = arith.constant 0 : i32
    %139 = vector.broadcast %c0_i32_65 : i32 to vector<64x1xi32>
    %140 = arith.addi %10, %139 : vector<64x1xi32>
    %c8_i32_66 = arith.constant 8 : i32
    %141 = vector.broadcast %c8_i32_66 : i32 to vector<64x1xi32>
    %142 = arith.cmpi slt, %140, %141 : vector<64x1xi32>
    %143 = arith.andi %138, %142 : vector<64x1xi1>
    %cst_67 = arith.constant 0.000000e+00 : f32
    %144 = vector.shape_cast %143 : vector<64x1xi1> to vector<64x1xi1>
    %145 = vector.broadcast %144 : vector<64x1xi1> to vector<64x128xi1>
    %146 = vector.broadcast %cst_67 : f32 to vector<64x128xf32>
    %147 = arith.select %145, %124, %146 : vector<64x128xi1>, vector<64x128xf32>
    %148 = arith.truncf %147 : vector<64x128xf32> to vector<64x128xbf16>
    %c512 = arith.constant 512 : index
    %c0_68 = arith.constant 0 : index
    %149 = vector.load %arg5[%c512, %c0_68] : memref<1152x128xbf16, #tpu.memory_space<vmem>>, vector<128x128xbf16>
    %cst_69 = arith.constant dense<0.000000e+00> : vector<64x128xf32>
    %150 = tpu.matmul %148, %149, %cst_69 {dimension_numbers = #tpu.dot_dimension_numbers<[1], [0], [0], [1], [0, 0, 1, 1], [], []>} : vector<64x128xbf16>, vector<128x128xbf16>, vector<64x128xf32> -> vector<64x128xf32>
    %151 = arith.addf %123, %150 : vector<64x128xf32>
    %c17 = arith.constant 17 : index
    %c0_70 = arith.constant 0 : index
    %152 = vector.load %arg11[%c17, %c0_70] : memref<96x128xf32, #tpu.memory_space<vmem>>, vector<64x128xf32>
    %c0_i32_71 = arith.constant 0 : i32
    %153 = vector.broadcast %c0_i32_71 : i32 to vector<64x1xi32>
    %154 = arith.addi %9, %153 : vector<64x1xi32>
    %c0_i32_72 = arith.constant 0 : i32
    %155 = vector.broadcast %c0_i32_72 : i32 to vector<64x1xi32>
    %156 = arith.cmpi sge, %154, %155 : vector<64x1xi32>
    %c0_i32_73 = arith.constant 0 : i32
    %157 = vector.broadcast %c0_i32_73 : i32 to vector<64x1xi32>
    %158 = arith.addi %9, %157 : vector<64x1xi32>
    %c8_i32_74 = arith.constant 8 : i32
    %159 = vector.broadcast %c8_i32_74 : i32 to vector<64x1xi32>
    %160 = arith.cmpi slt, %158, %159 : vector<64x1xi32>
    %161 = arith.andi %156, %160 : vector<64x1xi1>
    %c1_i32_75 = arith.constant 1 : i32
    %162 = vector.broadcast %c1_i32_75 : i32 to vector<64x1xi32>
    %163 = arith.addi %10, %162 : vector<64x1xi32>
    %c0_i32_76 = arith.constant 0 : i32
    %164 = vector.broadcast %c0_i32_76 : i32 to vector<64x1xi32>
    %165 = arith.cmpi sge, %163, %164 : vector<64x1xi32>
    %166 = arith.andi %161, %165 : vector<64x1xi1>
    %c1_i32_77 = arith.constant 1 : i32
    %167 = vector.broadcast %c1_i32_77 : i32 to vector<64x1xi32>
    %168 = arith.addi %10, %167 : vector<64x1xi32>
    %c8_i32_78 = arith.constant 8 : i32
    %169 = vector.broadcast %c8_i32_78 : i32 to vector<64x1xi32>
    %170 = arith.cmpi slt, %168, %169 : vector<64x1xi32>
    %171 = arith.andi %166, %170 : vector<64x1xi1>
    %cst_79 = arith.constant 0.000000e+00 : f32
    %172 = vector.shape_cast %171 : vector<64x1xi1> to vector<64x1xi1>
    %173 = vector.broadcast %172 : vector<64x1xi1> to vector<64x128xi1>
    %174 = vector.broadcast %cst_79 : f32 to vector<64x128xf32>
    %175 = arith.select %173, %152, %174 : vector<64x128xi1>, vector<64x128xf32>
    %176 = arith.truncf %175 : vector<64x128xf32> to vector<64x128xbf16>
    %c640 = arith.constant 640 : index
    %c0_80 = arith.constant 0 : index
    %177 = vector.load %arg5[%c640, %c0_80] : memref<1152x128xbf16, #tpu.memory_space<vmem>>, vector<128x128xbf16>
    %cst_81 = arith.constant dense<0.000000e+00> : vector<64x128xf32>
    %178 = tpu.matmul %176, %177, %cst_81 {dimension_numbers = #tpu.dot_dimension_numbers<[1], [0], [0], [1], [0, 0, 1, 1], [], []>} : vector<64x128xbf16>, vector<128x128xbf16>, vector<64x128xf32> -> vector<64x128xf32>
    %179 = arith.addf %151, %178 : vector<64x128xf32>
    %c23 = arith.constant 23 : index
    %c0_82 = arith.constant 0 : index
    %180 = vector.load %arg11[%c23, %c0_82] : memref<96x128xf32, #tpu.memory_space<vmem>>, vector<64x128xf32>
    %c1_i32_83 = arith.constant 1 : i32
    %181 = vector.broadcast %c1_i32_83 : i32 to vector<64x1xi32>
    %182 = arith.addi %9, %181 : vector<64x1xi32>
    %c0_i32_84 = arith.constant 0 : i32
    %183 = vector.broadcast %c0_i32_84 : i32 to vector<64x1xi32>
    %184 = arith.cmpi sge, %182, %183 : vector<64x1xi32>
    %c1_i32_85 = arith.constant 1 : i32
    %185 = vector.broadcast %c1_i32_85 : i32 to vector<64x1xi32>
    %186 = arith.addi %9, %185 : vector<64x1xi32>
    %c8_i32_86 = arith.constant 8 : i32
    %187 = vector.broadcast %c8_i32_86 : i32 to vector<64x1xi32>
    %188 = arith.cmpi slt, %186, %187 : vector<64x1xi32>
    %189 = arith.andi %184, %188 : vector<64x1xi1>
    %c-1_i32_87 = arith.constant -1 : i32
    %190 = vector.broadcast %c-1_i32_87 : i32 to vector<64x1xi32>
    %191 = arith.addi %10, %190 : vector<64x1xi32>
    %c0_i32_88 = arith.constant 0 : i32
    %192 = vector.broadcast %c0_i32_88 : i32 to vector<64x1xi32>
    %193 = arith.cmpi sge, %191, %192 : vector<64x1xi32>
    %194 = arith.andi %189, %193 : vector<64x1xi1>
    %c-1_i32_89 = arith.constant -1 : i32
    %195 = vector.broadcast %c-1_i32_89 : i32 to vector<64x1xi32>
    %196 = arith.addi %10, %195 : vector<64x1xi32>
    %c8_i32_90 = arith.constant 8 : i32
    %197 = vector.broadcast %c8_i32_90 : i32 to vector<64x1xi32>
    %198 = arith.cmpi slt, %196, %197 : vector<64x1xi32>
    %199 = arith.andi %194, %198 : vector<64x1xi1>
    %cst_91 = arith.constant 0.000000e+00 : f32
    %200 = vector.shape_cast %199 : vector<64x1xi1> to vector<64x1xi1>
    %201 = vector.broadcast %200 : vector<64x1xi1> to vector<64x128xi1>
    %202 = vector.broadcast %cst_91 : f32 to vector<64x128xf32>
    %203 = arith.select %201, %180, %202 : vector<64x128xi1>, vector<64x128xf32>
    %204 = arith.truncf %203 : vector<64x128xf32> to vector<64x128xbf16>
    %c768 = arith.constant 768 : index
    %c0_92 = arith.constant 0 : index
    %205 = vector.load %arg5[%c768, %c0_92] : memref<1152x128xbf16, #tpu.memory_space<vmem>>, vector<128x128xbf16>
    %cst_93 = arith.constant dense<0.000000e+00> : vector<64x128xf32>
    %206 = tpu.matmul %204, %205, %cst_93 {dimension_numbers = #tpu.dot_dimension_numbers<[1], [0], [0], [1], [0, 0, 1, 1], [], []>} : vector<64x128xbf16>, vector<128x128xbf16>, vector<64x128xf32> -> vector<64x128xf32>
    %207 = arith.addf %179, %206 : vector<64x128xf32>
    %c24 = arith.constant 24 : index
    %c0_94 = arith.constant 0 : index
    %208 = vector.load %arg11[%c24, %c0_94] : memref<96x128xf32, #tpu.memory_space<vmem>>, vector<64x128xf32>
    %c1_i32_95 = arith.constant 1 : i32
    %209 = vector.broadcast %c1_i32_95 : i32 to vector<64x1xi32>
    %210 = arith.addi %9, %209 : vector<64x1xi32>
    %c0_i32_96 = arith.constant 0 : i32
    %211 = vector.broadcast %c0_i32_96 : i32 to vector<64x1xi32>
    %212 = arith.cmpi sge, %210, %211 : vector<64x1xi32>
    %c1_i32_97 = arith.constant 1 : i32
    %213 = vector.broadcast %c1_i32_97 : i32 to vector<64x1xi32>
    %214 = arith.addi %9, %213 : vector<64x1xi32>
    %c8_i32_98 = arith.constant 8 : i32
    %215 = vector.broadcast %c8_i32_98 : i32 to vector<64x1xi32>
    %216 = arith.cmpi slt, %214, %215 : vector<64x1xi32>
    %217 = arith.andi %212, %216 : vector<64x1xi1>
    %c0_i32_99 = arith.constant 0 : i32
    %218 = vector.broadcast %c0_i32_99 : i32 to vector<64x1xi32>
    %219 = arith.addi %10, %218 : vector<64x1xi32>
    %c0_i32_100 = arith.constant 0 : i32
    %220 = vector.broadcast %c0_i32_100 : i32 to vector<64x1xi32>
    %221 = arith.cmpi sge, %219, %220 : vector<64x1xi32>
    %222 = arith.andi %217, %221 : vector<64x1xi1>
    %c0_i32_101 = arith.constant 0 : i32
    %223 = vector.broadcast %c0_i32_101 : i32 to vector<64x1xi32>
    %224 = arith.addi %10, %223 : vector<64x1xi32>
    %c8_i32_102 = arith.constant 8 : i32
    %225 = vector.broadcast %c8_i32_102 : i32 to vector<64x1xi32>
    %226 = arith.cmpi slt, %224, %225 : vector<64x1xi32>
    %227 = arith.andi %222, %226 : vector<64x1xi1>
    %cst_103 = arith.constant 0.000000e+00 : f32
    %228 = vector.shape_cast %227 : vector<64x1xi1> to vector<64x1xi1>
    %229 = vector.broadcast %228 : vector<64x1xi1> to vector<64x128xi1>
    %230 = vector.broadcast %cst_103 : f32 to vector<64x128xf32>
    %231 = arith.select %229, %208, %230 : vector<64x128xi1>, vector<64x128xf32>
    %232 = arith.truncf %231 : vector<64x128xf32> to vector<64x128xbf16>
    %c896 = arith.constant 896 : index
    %c0_104 = arith.constant 0 : index
    %233 = vector.load %arg5[%c896, %c0_104] : memref<1152x128xbf16, #tpu.memory_space<vmem>>, vector<128x128xbf16>
    %cst_105 = arith.constant dense<0.000000e+00> : vector<64x128xf32>
    %234 = tpu.matmul %232, %233, %cst_105 {dimension_numbers = #tpu.dot_dimension_numbers<[1], [0], [0], [1], [0, 0, 1, 1], [], []>} : vector<64x128xbf16>, vector<128x128xbf16>, vector<64x128xf32> -> vector<64x128xf32>
    %235 = arith.addf %207, %234 : vector<64x128xf32>
    %c25 = arith.constant 25 : index
    %c0_106 = arith.constant 0 : index
    %236 = vector.load %arg11[%c25, %c0_106] : memref<96x128xf32, #tpu.memory_space<vmem>>, vector<64x128xf32>
    %c1_i32_107 = arith.constant 1 : i32
    %237 = vector.broadcast %c1_i32_107 : i32 to vector<64x1xi32>
    %238 = arith.addi %9, %237 : vector<64x1xi32>
    %c0_i32_108 = arith.constant 0 : i32
    %239 = vector.broadcast %c0_i32_108 : i32 to vector<64x1xi32>
    %240 = arith.cmpi sge, %238, %239 : vector<64x1xi32>
    %c1_i32_109 = arith.constant 1 : i32
    %241 = vector.broadcast %c1_i32_109 : i32 to vector<64x1xi32>
    %242 = arith.addi %9, %241 : vector<64x1xi32>
    %c8_i32_110 = arith.constant 8 : i32
    %243 = vector.broadcast %c8_i32_110 : i32 to vector<64x1xi32>
    %244 = arith.cmpi slt, %242, %243 : vector<64x1xi32>
    %245 = arith.andi %240, %244 : vector<64x1xi1>
    %c1_i32_111 = arith.constant 1 : i32
    %246 = vector.broadcast %c1_i32_111 : i32 to vector<64x1xi32>
    %247 = arith.addi %10, %246 : vector<64x1xi32>
    %c0_i32_112 = arith.constant 0 : i32
    %248 = vector.broadcast %c0_i32_112 : i32 to vector<64x1xi32>
    %249 = arith.cmpi sge, %247, %248 : vector<64x1xi32>
    %250 = arith.andi %245, %249 : vector<64x1xi1>
    %c1_i32_113 = arith.constant 1 : i32
    %251 = vector.broadcast %c1_i32_113 : i32 to vector<64x1xi32>
    %252 = arith.addi %10, %251 : vector<64x1xi32>
    %c8_i32_114 = arith.constant 8 : i32
    %253 = vector.broadcast %c8_i32_114 : i32 to vector<64x1xi32>
    %254 = arith.cmpi slt, %252, %253 : vector<64x1xi32>
    %255 = arith.andi %250, %254 : vector<64x1xi1>
    %cst_115 = arith.constant 0.000000e+00 : f32
    %256 = vector.shape_cast %255 : vector<64x1xi1> to vector<64x1xi1>
    %257 = vector.broadcast %256 : vector<64x1xi1> to vector<64x128xi1>
    %258 = vector.broadcast %cst_115 : f32 to vector<64x128xf32>
    %259 = arith.select %257, %236, %258 : vector<64x128xi1>, vector<64x128xf32>
    %260 = arith.truncf %259 : vector<64x128xf32> to vector<64x128xbf16>
    %c1024 = arith.constant 1024 : index
    %c0_116 = arith.constant 0 : index
    %261 = vector.load %arg5[%c1024, %c0_116] : memref<1152x128xbf16, #tpu.memory_space<vmem>>, vector<128x128xbf16>
    %cst_117 = arith.constant dense<0.000000e+00> : vector<64x128xf32>
    %262 = tpu.matmul %260, %261, %cst_117 {dimension_numbers = #tpu.dot_dimension_numbers<[1], [0], [0], [1], [0, 0, 1, 1], [], []>} : vector<64x128xbf16>, vector<128x128xbf16>, vector<64x128xf32> -> vector<64x128xf32>
    %263 = arith.addf %235, %262 : vector<64x128xf32>
    %c0_118 = arith.constant 0 : index
    %c0_119 = arith.constant 0 : index
    %264 = vector.load %arg8[%c0_118, %c0_119] : memref<1x128xf32, #tpu.memory_space<vmem>>, vector<1x128xf32>
    %265 = vector.broadcast %264 : vector<1x128xf32> to vector<64x128xf32>
    %266 = arith.addf %263, %265 : vector<64x128xf32>
    %cst_120 = arith.constant 0.000000e+00 : f32
    %267 = vector.broadcast %cst_120 : f32 to vector<64x128xf32>
    %268 = arith.maximumf %266, %267 : vector<64x128xf32>
    %269 = arith.truncf %268 : vector<64x128xf32> to vector<64x128xbf16>
    %c0_121 = arith.constant 0 : index
    %c0_122 = arith.constant 0 : index
    %270 = vector.load %arg6[%c0_121, %c0_122] : memref<128x128xbf16, #tpu.memory_space<vmem>>, vector<128x128xbf16>
    %cst_123 = arith.constant dense<0.000000e+00> : vector<64x128xf32>
    %271 = tpu.matmul %269, %270, %cst_123 {dimension_numbers = #tpu.dot_dimension_numbers<[1], [0], [0], [1], [0, 0, 1, 1], [], []>} : vector<64x128xbf16>, vector<128x128xbf16>, vector<64x128xf32> -> vector<64x128xf32>
    %c0_124 = arith.constant 0 : index
    %c0_125 = arith.constant 0 : index
    %272 = vector.load %arg9[%c0_124, %c0_125] : memref<1x128xf32, #tpu.memory_space<vmem>>, vector<1x128xf32>
    %273 = vector.broadcast %272 : vector<1x128xf32> to vector<64x128xf32>
    %274 = arith.addf %271, %273 : vector<64x128xf32>
    %275 = arith.extf %0 : vector<64x128xbf16> to vector<64x128xf32>
    %276 = arith.addf %274, %275 : vector<64x128xf32>
    %cst_126 = arith.constant 0.000000e+00 : f32
    %277 = vector.broadcast %cst_126 : f32 to vector<64x128xf32>
    %278 = arith.maximumf %276, %277 : vector<64x128xf32>
    %c0_127 = arith.constant 0 : index
    %c0_128 = arith.constant 0 : index
    %279 = vector.load %arg10[%c0_127, %c0_128] : memref<64x128xf32, #tpu.memory_space<vmem>>, vector<64x128xf32>
    tpu.vector_store %arg10[%c0_127, %c0_128], %278 {strides = array<i32>} : memref<64x128xf32, #tpu.memory_space<vmem>>, vector<64x128xf32>,
    return
  }
  func.func @transform_0(%arg0: i32) -> (i32, i32) {
    %c0_i32 = arith.constant 0 : i32
    %c0_i32_0 = arith.constant 0 : i32
    return %arg0, %c0_i32 : i32, i32
  }
  func.func @transform_1(%arg0: i32) -> (i32, i32) {
    %c0_i32 = arith.constant 0 : i32
    %c0_i32_0 = arith.constant 0 : i32
    return %arg0, %c0_i32 : i32, i32
  }
  func.func @transform_2(%arg0: i32) -> (i32, i32) {
    %c0_i32 = arith.constant 0 : i32
    %c0_i32_0 = arith.constant 0 : i32
    return %arg0, %c0_i32 : i32, i32
  }
  func.func @transform_3(%arg0: i32) -> (i32, i32) {
    %c0_i32 = arith.constant 0 : i32
    %c0_i32_0 = arith.constant 0 : i32
    %c0_i32_1 = arith.constant 0 : i32
    return %c0_i32, %c0_i32_0 : i32, i32
  }
  func.func @transform_4(%arg0: i32) -> (i32, i32) {
    %c0_i32 = arith.constant 0 : i32
    %c0_i32_0 = arith.constant 0 : i32
    %c0_i32_1 = arith.constant 0 : i32
    return %c0_i32, %c0_i32_0 : i32, i32
  }
  func.func @transform_5(%arg0: i32) -> (i32, i32) {
    %c0_i32 = arith.constant 0 : i32
    %c0_i32_0 = arith.constant 0 : i32
    %c0_i32_1 = arith.constant 0 : i32
    return %c0_i32, %c0_i32_0 : i32, i32
  }
  func.func @transform_6(%arg0: i32) -> (i32, i32) {
    %c0_i32 = arith.constant 0 : i32
    %c0_i32_0 = arith.constant 0 : i32
    %c0_i32_1 = arith.constant 0 : i32
    return %c0_i32, %c0_i32_0 : i32, i32
  }
  func.func @transform_7(%arg0: i32) -> (i32, i32) {
    %c0_i32 = arith.constant 0 : i32
    %c0_i32_0 = arith.constant 0 : i32
    %c0_i32_1 = arith.constant 0 : i32
    return %c0_i32, %c0_i32_0 : i32, i32
  }
  func.func @transform_8(%arg0: i32) -> (i32, i32) {
    %c0_i32 = arith.constant 0 : i32
    %c0_i32_0 = arith.constant 0 : i32
    %c0_i32_1 = arith.constant 0 : i32
    return %c0_i32, %c0_i32_0 : i32, i32
  }
  func.func @transform_9(%arg0: i32) -> (i32, i32) {
    %c0_i32 = arith.constant 0 : i32
    %c0_i32_0 = arith.constant 0 : i32
    return %arg0, %c0_i32 : i32, i32
  }
}

</mosaic_0001>

<llo_original>
// kernel: tpu_custom_call.1
$region0: #{tpu_custom_call.1}
  #allocation0 [shape = 'u32[]', space=smem, size = 0x4, offset = 0x4, fixed_abs, tag = 'smem constant byte address 0x4 - core index']
  #allocation1 [shape = 'u32[144,128]{1,0:T(1,128)}', space=vmem, size = 0x12000, scoped, tag = 'internal scratch']
  #allocation2 [shape = 'f32[96,128]{1,0:T(8,128)}', space=vmem, size = 0xc000, scoped, tag = 'scratch operand']
  %s0 = inlined_call_operand.vmem [shape: bf16[128,128], index: 0, kind: input, shape index: {}]
  %s1 = inlined_call_operand.vmem [shape: s32[128,1], index: 1, kind: input, shape index: {}]
  %s2 = inlined_call_operand.vmem [shape: s32[128,1], index: 2, kind: input, shape index: {}]
  %s3 = inlined_call_operand.vmem [shape: bf16[128,128], index: 3, kind: input, shape index: {}]
  %s4 = inlined_call_operand.hbm [shape: bf16[1152,128], index: 4, kind: input, shape index: {}]
  %s5 = inlined_call_operand.vmem [shape: bf16[128,128], index: 5, kind: input, shape index: {}]
  %s6 = inlined_call_operand.vmem [shape: f32[1,128], index: 6, kind: input, shape index: {}]
  %s7 = inlined_call_operand.vmem [shape: f32[1,128], index: 7, kind: input, shape index: {}]
  %s8 = inlined_call_operand.vmem [shape: f32[1,128], index: 8, kind: input, shape index: {}]
  %s9 = inlined_call_operand.hbm [shape: f32[128,128], index: 9, kind: output, shape index: {}]
  %s10 = sld [smem:[#allocation0]]
  $region73: #{tpu_custom_call.1} parent=0
    _
  %s12 = ssub.s32 1, %s10
  %s13 = scalar_select 0, %s12, %s10
  $region1: #{tpu_custom_call.1} parent=0
    #allocation3 [shape = 'u8[294912]{0}', space=vmem, size = 0x48000, scoped, tag = 'input window, operand 4, single buffered']
    #allocation4 [shape = 's32[2]{0}', space=sflag, size = 0x8, scoped, tag = 'scoped memory for tpu_custom_call.1']
    #allocation5 [shape = 's32[2]{0}', space=sflag, size = 0x8, scoped, tag = 'scoped memory for tpu_custom_call.1']
    #allocation6 [shape = 'u8[65536]{0}', space=vmem, size = 0x10000, scoped, tag = 'output window, operand 0']
    %14 = vsyncpa [#allocation4], 0
    %15 = vsyncpa [#allocation5], 0
    %s16 = scalar_lea.sflag [#allocation5], 1
    %17 = vsyncpa %s16, 0
    loop: start=0, step=1, limit=4
    $region2: #{tpu_custom_call.1} parent=1 // loop_pre_header
      _
    $region3: #{tpu_custom_call.1} parent=1 // loop_header
      %s19 = sphi 0, %s23
      %p20 = scmp.ge.s32.totalorder %s19, 4
      %s29 = sphi 0, %s31
      %s32 = sphi 0, %s29
      %s33 = sphi 0, %s32
      %s49 = sphi 0, %s33
      %s55 = sphi 0, %s57
      %s58 = sphi 0, %s55
      %s59 = sphi 0, %s58
      %s75 = sphi 0, %s59
      %s81 = sphi 0, %s83
      %s84 = sphi 0, %s81
      %s85 = sphi 0, %s84
      %s101 = sphi 0, %s85
      %s105 = sphi 0, %s105
      %s107 = sphi 0, %s105
      %s108 = sphi 0, %s107
      %s122 = sphi 0, %s108
      %s126 = sphi 0, %s126
      %s128 = sphi 0, %s126
      %s129 = sphi 0, %s128
      %s143 = sphi 0, %s129
      %s147 = sphi 0, %s147
      %s149 = sphi 0, %s147
      %s150 = sphi 0, %s149
      %s164 = sphi 0, %s150
      %s168 = sphi 0, %s168
      %s170 = sphi 0, %s168
      %s171 = sphi 0, %s170
      %s185 = sphi 0, %s171
      %s189 = sphi 0, %s189
      %s191 = sphi 0, %s189
      %s192 = sphi 0, %s191
      %s206 = sphi 0, %s192
      %s210 = sphi 0, %s210
      %s212 = sphi 0, %s210
      %s213 = sphi 0, %s212
      %s227 = sphi 0, %s213
      %s233 = sphi 0, %s235
      %s236 = sphi 0, %s233
      %s237 = sphi 0, %s236
      %s253 = sphi 0, %s237
    $region4: #{tpu_custom_call.1} parent=1 // loop_header_branch
      %22 = sbr.rel (%p20) target = $region8
    $region5: #{tpu_custom_call.1} parent=1 // loop_body
      %s24 = ssub.s32 %s19, 1
      %s25 = ssub.s32 %s19, 2
      %s26 = sadd.s32 %s19, 1
      %s27 = ssub.s32 %s19, %s26
      %p28 = scmp.eq.s32.totalorder %s27, 0
      %s30 = sadd.s32 %s29, 1
      %s31 = scalar_select %p28, %s29, %s30
      %p34 = pneg %p28
      %p35 = scmp.eq.s32.totalorder %s19, 1
      %p36 = por %p34, %p35
      %p37 = scmp.ne.s32.totalorder %s29, %s32
      %p38 = scmp.eq.s32.totalorder %s19, 0
      %p39 = por %p37, %p38
      %p40 = scmp.ne.s32.totalorder %s29, %s32
      %p41 = scmp.eq.s32.totalorder %s24, 1
      %p42 = por %p40, %p41
      %p43 = scmp.ne.s32.totalorder %s32, %s33
      %p44 = scmp.eq.s32.totalorder %s24, 0
      %p45 = por %p43, %p44
      %p46 = scmp.ne.s32.totalorder %s32, %s33
      %p47 = scmp.eq.s32.totalorder %s25, 1
      %p48 = por %p46, %p47
      %p50 = scmp.ne.s32.totalorder %s33, %s49
      %p51 = scmp.eq.s32.totalorder %s25, 0
      %p52 = por %p50, %p51
      %s53 = ssub.s32 %s19, %s26
      %p54 = scmp.eq.s32.totalorder %s53, 0
      %s56 = sadd.s32 %s55, 1
      %s57 = scalar_select %p54, %s55, %s56
      %p60 = pneg %p54
      %p61 = scmp.eq.s32.totalorder %s19, 1
      %p62 = por %p60, %p61
      %p63 = scmp.ne.s32.totalorder %s55, %s58
      %p64 = scmp.eq.s32.totalorder %s19, 0
      %p65 = por %p63, %p64
      %p66 = scmp.ne.s32.totalorder %s55, %s58
      %p67 = scmp.eq.s32.totalorder %s24, 1
      %p68 = por %p66, %p67
      %p69 = scmp.ne.s32.totalorder %s58, %s59
      %p70 = scmp.eq.s32.totalorder %s24, 0
      %p71 = por %p69, %p70
      %p72 = scmp.ne.s32.totalorder %s58, %s59
      %p73 = scmp.eq.s32.totalorder %s25, 1
      %p74 = por %p72, %p73
      %p76 = scmp.ne.s32.totalorder %s59, %s75
      %p77 = scmp.eq.s32.totalorder %s25, 0
      %p78 = por %p76, %p77
      %s79 = ssub.s32 %s19, %s26
      %p80 = scmp.eq.s32.totalorder %s79, 0
      %s82 = sadd.s32 %s81, 1
      %s83 = scalar_select %p80, %s81, %s82
      %p86 = pneg %p80
      %p87 = scmp.eq.s32.totalorder %s19, 1
      %p88 = por %p86, %p87
      %p89 = scmp.ne.s32.totalorder %s81, %s84
      %p90 = scmp.eq.s32.totalorder %s19, 0
      %p91 = por %p89, %p90
      %p92 = scmp.ne.s32.totalorder %s81, %s84
      %p93 = scmp.eq.s32.totalorder %s24, 1
      %p94 = por %p92, %p93
      %p95 = scmp.ne.s32.totalorder %s84, %s85
      %p96 = scmp.eq.s32.totalorder %s24, 0
      %p97 = por %p95, %p96
      %p98 = scmp.ne.s32.totalorder %s84, %s85
      %p99 = scmp.eq.s32.totalorder %s25, 1
      %p100 = por %p98, %p99
      %p102 = scmp.ne.s32.totalorder %s85, %s101
      %p103 = scmp.eq.s32.totalorder %s25, 0
      %p104 = por %p102, %p103
      %s106 = sadd.s32 %s105, 1
      %p109 = scmp.eq.s32.totalorder %s19, 1
      %p110 = scmp.ne.s32.totalorder %s105, %s107
      %p111 = scmp.eq.s32.totalorder %s19, 0
      %p112 = por %p110, %p111
      %p113 = scmp.ne.s32.totalorder %s105, %s107
      %p114 = scmp.eq.s32.totalorder %s24, 1
      %p115 = por %p113, %p114
      %p116 = scmp.ne.s32.totalorder %s107, %s108
      %p117 = scmp.eq.s32.totalorder %s24, 0
      %p118 = por %p116, %p117
      %p119 = scmp.ne.s32.totalorder %s107, %s108
      %p120 = scmp.eq.s32.totalorder %s25, 1
      %p121 = por %p119, %p120
      %p123 = scmp.ne.s32.totalorder %s108, %s122
      %p124 = scmp.eq.s32.totalorder %s25, 0
      %p125 = por %p123, %p124
      %s127 = sadd.s32 %s126, 1
      %p130 = scmp.eq.s32.totalorder %s19, 1
      %p131 = scmp.ne.s32.totalorder %s126, %s128
      %p132 = scmp.eq.s32.totalorder %s19, 0
      %p133 = por %p131, %p132
      %p134 = scmp.ne.s32.totalorder %s126, %s128
      %p135 = scmp.eq.s32.totalorder %s24, 1
      %p136 = por %p134, %p135
      %p137 = scmp.ne.s32.totalorder %s128, %s129
      %p138 = scmp.eq.s32.totalorder %s24, 0
      %p139 = por %p137, %p138
      %p140 = scmp.ne.s32.totalorder %s128, %s129
      %p141 = scmp.eq.s32.totalorder %s25, 1
      %p142 = por %p140, %p141
      %p144 = scmp.ne.s32.totalorder %s129, %s143
      %p145 = scmp.eq.s32.totalorder %s25, 0
      %p146 = por %p144, %p145
      %s148 = sadd.s32 %s147, 1
      %p151 = scmp.eq.s32.totalorder %s19, 1
      %p152 = scmp.ne.s32.totalorder %s147, %s149
      %p153 = scmp.eq.s32.totalorder %s19, 0
      %p154 = por %p152, %p153
      %p155 = scmp.ne.s32.totalorder %s147, %s149
      %p156 = scmp.eq.s32.totalorder %s24, 1
      %p157 = por %p155, %p156
      %p158 = scmp.ne.s32.totalorder %s149, %s150
      %p159 = scmp.eq.s32.totalorder %s24, 0
      %p160 = por %p158, %p159
      %p161 = scmp.ne.s32.totalorder %s149, %s150
      %p162 = scmp.eq.s32.totalorder %s25, 1
      %p163 = por %p161, %p162
      %p165 = scmp.ne.s32.totalorder %s150, %s164
      %p166 = scmp.eq.s32.totalorder %s25, 0
      %p167 = por %p165, %p166
      %s169 = sadd.s32 %s168, 1
      %p172 = scmp.eq.s32.totalorder %s19, 1
      %p173 = scmp.ne.s32.totalorder %s168, %s170
      %p174 = scmp.eq.s32.totalorder %s19, 0
      %p175 = por %p173, %p174
      %p176 = scmp.ne.s32.totalorder %s168, %s170
      %p177 = scmp.eq.s32.totalorder %s24, 1
      %p178 = por %p176, %p177
      %p179 = scmp.ne.s32.totalorder %s170, %s171
      %p180 = scmp.eq.s32.totalorder %s24, 0
      %p181 = por %p179, %p180
      %p182 = scmp.ne.s32.totalorder %s170, %s171
      %p183 = scmp.eq.s32.totalorder %s25, 1
      %p184 = por %p182, %p183
      %p186 = scmp.ne.s32.totalorder %s171, %s185
      %p187 = scmp.eq.s32.totalorder %s25, 0
      %p188 = por %p186, %p187
      %s190 = sadd.s32 %s189, 1
      %p193 = scmp.eq.s32.totalorder %s19, 1
      %p194 = scmp.ne.s32.totalorder %s189, %s191
      %p195 = scmp.eq.s32.totalorder %s19, 0
      %p196 = por %p194, %p195
      %p197 = scmp.ne.s32.totalorder %s189, %s191
      %p198 = scmp.eq.s32.totalorder %s24, 1
      %p199 = por %p197, %p198
      %p200 = scmp.ne.s32.totalorder %s191, %s192
      %p201 = scmp.eq.s32.totalorder %s24, 0
      %p202 = por %p200, %p201
      %p203 = scmp.ne.s32.totalorder %s191, %s192
      %p204 = scmp.eq.s32.totalorder %s25, 1
      %p205 = por %p203, %p204
      %p207 = scmp.ne.s32.totalorder %s192, %s206
      %p208 = scmp.eq.s32.totalorder %s25, 0
      %p209 = por %p207, %p208
      %s211 = sadd.s32 %s210, 1
      %p214 = scmp.eq.s32.totalorder %s19, 1
      %p215 = scmp.ne.s32.totalorder %s210, %s212
      %p216 = scmp.eq.s32.totalorder %s19, 0
      %p217 = por %p215, %p216
      %p218 = scmp.ne.s32.totalorder %s210, %s212
      %p219 = scmp.eq.s32.totalorder %s24, 1
      %p220 = por %p218, %p219
      %p221 = scmp.ne.s32.totalorder %s212, %s213
      %p222 = scmp.eq.s32.totalorder %s24, 0
      %p223 = por %p221, %p222
      %p224 = scmp.ne.s32.totalorder %s212, %s213
      %p225 = scmp.eq.s32.totalorder %s25, 1
      %p226 = por %p224, %p225
      %p228 = scmp.ne.s32.totalorder %s213, %s227
      %p229 = scmp.eq.s32.totalorder %s25, 0
      %p230 = por %p228, %p229
      %s231 = ssub.s32 %s19, %s26
      %p232 = scmp.eq.s32.totalorder %s231, 0
      %s234 = sadd.s32 %s233, 1
      %s235 = scalar_select %p232, %s233, %s234
      %p238 = pneg %p232
      %p239 = scmp.eq.s32.totalorder %s19, 1
      %p240 = por %p238, %p239
      %p241 = scmp.ne.s32.totalorder %s233, %s236
      %p242 = scmp.eq.s32.totalorder %s19, 0
      %p243 = por %p241, %p242
      %p244 = scmp.ne.s32.totalorder %s233, %s236
      %p245 = scmp.eq.s32.totalorder %s24, 1
      %p246 = por %p244, %p245
      %p247 = scmp.ne.s32.totalorder %s236, %s237
      %p248 = scmp.eq.s32.totalorder %s24, 0
      %p249 = por %p247, %p248
      %p250 = scmp.ne.s32.totalorder %s236, %s237
      %p251 = scmp.eq.s32.totalorder %s25, 1
      %p252 = por %p250, %p251
      %p254 = scmp.ne.s32.totalorder %s237, %s253
      %p255 = scmp.eq.s32.totalorder %s25, 0
      %p256 = por %p254, %p255
      %p257 = scmp.le.s32.totalorder 1, %s19
      %p258 = scmp.lt.s32.totalorder %s19, 3
      %p259 = pnand %p257, %p258
      %p260 = pneg %p259
      // Predicated region
      $region9: #{tpu_custom_call.1} parent=5 // pred_check
        _
      $region10: #{tpu_custom_call.1} parent=5 // pred_check_branch
        %262 = sbr.rel (%p259) target = $region12
      $region11: #{tpu_custom_call.1} parent=5 // pred_region
        %s263 = ssub.s32 %s19, 1
        // Predicated region
        $region13: #{tpu_custom_call.1} parent=11 // pred_check
          %p264 = pneg %p118
        $region14: #{tpu_custom_call.1} parent=11 // pred_check_branch
          %266 = sbr.rel (%p264) target = $region16
        $region15: #{tpu_custom_call.1} parent=11 // pred_region
          _
        $region16: #{tpu_custom_call.1} parent=11 // pred_fallthru
          _
        // Predicated region
        $region17: #{tpu_custom_call.1} parent=11 // pred_check
          %p267 = pneg %p139
        $region18: #{tpu_custom_call.1} parent=11 // pred_check_branch
          %269 = sbr.rel (%p267) target = $region20
        $region19: #{tpu_custom_call.1} parent=11 // pred_region
          %s271 = ssub.s32 9216, 9216
          %272 = vsyncadd [#allocation4], %s271
          %s273 = sshll.u32 [#allocation3], 4
          %s274 = int_to_ptr.vmem [resolvable:$true] %s273
          %279 = dma.hbm_to_vmem [thread:$0]  %s4, 9216, %s274, [#allocation4], 64, 64, 4
        $region20: #{tpu_custom_call.1} parent=11 // pred_fallthru
          _
        // Predicated region
        $region21: #{tpu_custom_call.1} parent=11 // pred_check
          %p280 = pneg %p160
        $region22: #{tpu_custom_call.1} parent=11 // pred_check_branch
          %282 = sbr.rel (%p280) target = $region24
        $region23: #{tpu_custom_call.1} parent=11 // pred_region
          _
        $region24: #{tpu_custom_call.1} parent=11 // pred_fallthru
          _
        // Predicated region
        $region25: #{tpu_custom_call.1} parent=11 // pred_check
          %p283 = pneg %p181
        $region26: #{tpu_custom_call.1} parent=11 // pred_check_branch
          %285 = sbr.rel (%p283) target = $region28
        $region27: #{tpu_custom_call.1} parent=11 // pred_region
          _
        $region28: #{tpu_custom_call.1} parent=11 // pred_fallthru
          _
        // Predicated region
        $region29: #{tpu_custom_call.1} parent=11 // pred_check
          %p286 = pneg %p202
        $region30: #{tpu_custom_call.1} parent=11 // pred_check_branch
          %288 = sbr.rel (%p286) target = $region32
        $region31: #{tpu_custom_call.1} parent=11 // pred_region
          _
        $region32: #{tpu_custom_call.1} parent=11 // pred_fallthru
          _
        // Predicated region
        $region33: #{tpu_custom_call.1} parent=11 // pred_check
          %p289 = pneg %p223
        $region34: #{tpu_custom_call.1} parent=11 // pred_check_branch
          %291 = sbr.rel (%p289) target = $region36
        $region35: #{tpu_custom_call.1} parent=11 // pred_region
          _
        $region36: #{tpu_custom_call.1} parent=11 // pred_fallthru
          _
      $region12: #{tpu_custom_call.1} parent=5 // pred_fallthru
        _
      %p292 = scmp.lt.s32.totalorder %s19, 2
      // Predicated region
      $region37: #{tpu_custom_call.1} parent=5 // pred_check
        %p293 = pneg %p292
      $region38: #{tpu_custom_call.1} parent=5 // pred_check_branch
        %295 = sbr.rel (%p293) target = $region40
      $region39: #{tpu_custom_call.1} parent=5 // pred_region
        // Predicated region
        $region41: #{tpu_custom_call.1} parent=39 // pred_check
          %p296 = pneg %p39
        $region42: #{tpu_custom_call.1} parent=39 // pred_check_branch
          %298 = sbr.rel (%p296) target = $region44
        $region43: #{tpu_custom_call.1} parent=39 // pred_region
          %s299 = smul.u32 8, %s19
          %p300 = scmp.lt.s32.totalorder %s299, 15
          %s301 = scalar_select %p300, %s299, 15
          %s302 = smul.addr %s301, 4
          %s303 = scalar_lea.vmem %s0, %s302
          %s304 = smul.u32 8, %s19
        $region44: #{tpu_custom_call.1} parent=39 // pred_fallthru
          _
        // Predicated region
        $region45: #{tpu_custom_call.1} parent=39 // pred_check
          %p305 = pneg %p65
        $region46: #{tpu_custom_call.1} parent=39 // pred_check_branch
          %307 = sbr.rel (%p305) target = $region48
        $region47: #{tpu_custom_call.1} parent=39 // pred_region
          %s308 = smul.u32 8, %s19
          %p309 = scmp.lt.s32.totalorder %s308, 15
          %s310 = scalar_select %p309, %s308, 15
          %s311 = smul.addr %s310, 8
          %s312 = scalar_lea.vmem %s1, %s311
          %s313 = smul.u32 8, %s19
        $region48: #{tpu_custom_call.1} parent=39 // pred_fallthru
          _
        // Predicated region
        $region49: #{tpu_custom_call.1} parent=39 // pred_check
          %p314 = pneg %p91
        $region50: #{tpu_custom_call.1} parent=39 // pred_check_branch
          %316 = sbr.rel (%p314) target = $region52
        $region51: #{tpu_custom_call.1} parent=39 // pred_region
          %s317 = smul.u32 8, %s19
          %p318 = scmp.lt.s32.totalorder %s317, 15
          %s319 = scalar_select %p318, %s317, 15
          %s320 = smul.addr %s319, 8
          %s321 = scalar_lea.vmem %s2, %s320
          %s322 = smul.u32 8, %s19
        $region52: #{tpu_custom_call.1} parent=39 // pred_fallthru
          _
      $region40: #{tpu_custom_call.1} parent=5 // pred_fallthru
        _
      %p323 = scmp.le.s32.totalorder 1, %s19
      %p324 = scmp.lt.s32.totalorder %s19, 3
      %p325 = pnand %p323, %p324
      %p326 = pneg %p325
      // Predicated region
      $region53: #{tpu_custom_call.1} parent=5 // pred_check
        _
      $region54: #{tpu_custom_call.1} parent=5 // pred_check_branch
        %328 = sbr.rel (%p325) target = $region56
      $region55: #{tpu_custom_call.1} parent=5 // pred_region
        %s329 = ssub.s32 %s19, 1
        // Predicated region
        $region57: #{tpu_custom_call.1} parent=55 // pred_check
          %p330 = pneg %p139
        $region58: #{tpu_custom_call.1} parent=55 // pred_check_branch
          %332 = sbr.rel (%p330) target = $region60
        $region59: #{tpu_custom_call.1} parent=55 // pred_region
          %333 = dma.done [#allocation4], 9216
        $region60: #{tpu_custom_call.1} parent=55 // pred_fallthru
          _
        %s334 = smul.u32 8, %s24
        %p335 = scmp.lt.s32.totalorder %s334, 15
        %s336 = scalar_select %p335, %s334, 15
        %s337 = smul.addr %s336, 4
        %s338 = scalar_lea.vmem %s0, %s337
        %p339 = pneg %p45
        %p340 = pneg %p42
        %s341 = smul.u32 8, %s24
        %p342 = scmp.lt.s32.totalorder %s341, 15
        %s343 = scalar_select %p342, %s341, 15
        %s344 = smul.addr %s343, 8
        %s345 = scalar_lea.vmem %s1, %s344
        %p346 = pneg %p71
        %p347 = pneg %p68
        %s348 = smul.u32 8, %s24
        %p349 = scmp.lt.s32.totalorder %s348, 15
        %s350 = scalar_select %p349, %s348, 15
        %s351 = smul.addr %s350, 8
        %s352 = scalar_lea.vmem %s2, %s351
        %p353 = pneg %p97
        %p354 = pneg %p94
        %p355 = pneg %p118
        %p356 = pneg %p115
        %p357 = pneg %p139
        %p358 = pneg %p136
        %p359 = pneg %p160
        %p360 = pneg %p157
        %p361 = pneg %p181
        %p362 = pneg %p178
        %p363 = pneg %p202
        %p364 = pneg %p199
        %p365 = pneg %p223
        %p366 = pneg %p220
        %p367 = pneg %p249
        %p368 = pneg %p246
        %s369 = sand.u32 %s236, 1
        %s370 = scalar_lea.sflag [#allocation5], %s369
        %s371 = sand.u32 %s236, 1
        %s372 = smul.addr %s371, 64
        %s373 = scalar_lea.vmem [#allocation6], %s372
        %s374 = smul.u32 8, %s24
        %p375 = scmp.lt.s32.totalorder %s374, 15
        %s376 = scalar_select %p375, %s374, 15
        %s377 = smul.addr %s376, 4
        %s378 = scalar_lea.vmem %s0, %s377
        %s379 = smul.u32 8, %s24
        %s380 = smul.u32 8, %s24
        %p381 = scmp.lt.s32.totalorder %s380, 15
        %s382 = scalar_select %p381, %s380, 15
        %s383 = smul.addr %s382, 8
        %s384 = scalar_lea.vmem %s1, %s383
        %s385 = smul.u32 8, %s24
        %s386 = smul.u32 8, %s24
        %p387 = scmp.lt.s32.totalorder %s386, 15
        %s388 = scalar_select %p387, %s386, 15
        %s389 = smul.addr %s388, 8
        %s390 = scalar_lea.vmem %s2, %s389
        %s391 = smul.u32 8, %s24
        %s392 = smul.u32 8, %s24
        %v394 = vld [vmem:[%s378] sm:$0xf]
        %v395 = vld [vmem:[%s378 + $0x4] sm:$0xf]
        %v396 = vld [vmem:[%s378 + $0x8] sm:$0xf]
        %v397 = vld [vmem:[%s378 + $0xc] sm:$0xf]
        %v398 = vld [vmem:[%s378 + $0x10] sm:$0xf]
        %v399 = vld [vmem:[%s378 + $0x14] sm:$0xf]
        %v400 = vld [vmem:[%s378 + $0x18] sm:$0xf]
        %v401 = vld [vmem:[%s378 + $0x1c] sm:$0xf]
        %v402 = vld [vmem:[%s3] sm:$0xf]
        %v403 = vld [vmem:[%s3 + $0x4] sm:$0xf]
        %v404 = vld [vmem:[%s3 + $0x8] sm:$0xf]
        %v405 = vld [vmem:[%s3 + $0xc] sm:$0xf]
        %v406 = vld [vmem:[%s3 + $0x10] sm:$0xf]
        %v407 = vld [vmem:[%s3 + $0x14] sm:$0xf]
        %v408 = vld [vmem:[%s3 + $0x18] sm:$0xf]
        %v409 = vld [vmem:[%s3 + $0x1c] sm:$0xf]
        %v410 = vld [vmem:[%s3 + $0x20] sm:$0xf]
        %v411 = vld [vmem:[%s3 + $0x24] sm:$0xf]
        %v412 = vld [vmem:[%s3 + $0x28] sm:$0xf]
        %v413 = vld [vmem:[%s3 + $0x2c] sm:$0xf]
        %v414 = vld [vmem:[%s3 + $0x30] sm:$0xf]
        %v415 = vld [vmem:[%s3 + $0x34] sm:$0xf]
        %v416 = vld [vmem:[%s3 + $0x38] sm:$0xf]
        %v417 = vld [vmem:[%s3 + $0x3c] sm:$0xf]
        %v418 = vld [vmem:[%s6] sm:$0x1]
        %v420 = vlaneseq
        %v421 = vshrl.u32 %v420, 7
        %v422 = vsub.s32 0, %v421
        %v423 = vrot.slane %v418, %v422
        %v433 = vunpack.c.l.b16 %v394
        %v434 = vunpack.c.l.b16 %v395
        %v435 = vunpack.c.l.b16 %v396
        %v436 = vunpack.c.l.b16 %v397
        %v437 = vunpack.c.l.b16 %v398
        %v438 = vunpack.c.l.b16 %v399
        %v439 = vunpack.c.l.b16 %v400
        %v440 = vunpack.c.l.b16 %v401
        %v441 = vpack.c.b16 %v434, %v433
        %v442 = vpack.c.b16 %v436, %v435
        %v443 = vpack.c.b16 %v438, %v437
        %v444 = vpack.c.b16 %v440, %v439
        %v465 = vunpack.c.l.b16 %v402
        %v466 = vunpack.c.l.b16 %v403
        %v467 = vunpack.c.l.b16 %v404
        %v468 = vunpack.c.l.b16 %v405
        %v469 = vunpack.c.l.b16 %v406
        %v470 = vunpack.c.l.b16 %v407
        %v471 = vunpack.c.l.b16 %v408
        %v472 = vunpack.c.l.b16 %v409
        %v473 = vunpack.c.l.b16 %v410
        %v474 = vunpack.c.l.b16 %v411
        %v475 = vunpack.c.l.b16 %v412
        %v476 = vunpack.c.l.b16 %v413
        %v477 = vunpack.c.l.b16 %v414
        %v478 = vunpack.c.l.b16 %v415
        %v479 = vunpack.c.l.b16 %v416
        %v480 = vunpack.c.l.b16 %v417
        %v481 = vpack.c.b16 %v466, %v465
        %v482 = vpack.c.b16 %v468, %v467
        %v483 = vpack.c.b16 %v470, %v469
        %v484 = vpack.c.b16 %v472, %v471
        %v485 = vpack.c.b16 %v474, %v473
        %v486 = vpack.c.b16 %v476, %v475
        %v487 = vpack.c.b16 %v478, %v477
        %v488 = vpack.c.b16 %v480, %v479
        %497 = vmatprep.subr.bf16.mxu0 0
        %498 = vmatpush1.bf16.msra.mxu0 %v481
        %499 = vmatprep.subr.bf16.mxu0 0
        %500 = vmatpush1.bf16.msra.mxu0 %v482
        %501 = vmatprep.subr.bf16.mxu0 0
        %502 = vmatpush1.bf16.msra.mxu0 %v483
        %503 = vmatprep.subr.bf16.mxu0 0
        %504 = vmatpush1.bf16.msra.mxu0 %v484
        %505 = vmatprep.subr.bf16.mxu0 0
        %506 = vmatpush1.bf16.msra.mxu0 %v485
        %507 = vmatprep.subr.bf16.mxu0 0
        %508 = vmatpush1.bf16.msra.mxu0 %v486
        %509 = vmatprep.subr.bf16.mxu0 0
        %510 = vmatpush1.bf16.msra.mxu0 %v487
        %511 = vmatprep.subr.bf16.mxu0 0
        %512 = vmatpush1.bf16.msra.mxu0 %v488
        %513 = vmatprep.subr.bf16.mxu0 0
        %514 = vmatpush1.bf16.msra.mxu0 0
        %515 = vmatprep.subr.bf16.mxu0 0
        %516 = vmatpush1.bf16.msra.mxu0 0
        %517 = vmatprep.subr.bf16.mxu0 0
        %518 = vmatpush1.bf16.msra.mxu0 0
        %519 = vmatprep.subr.bf16.mxu0 0
        %520 = vmatpush1.bf16.msra.mxu0 0
        %521 = vmatprep.subr.bf16.mxu0 0
        %522 = vmatpush1.bf16.msra.mxu0 0
        %523 = vmatprep.subr.bf16.mxu0 0
        %524 = vmatpush1.bf16.msra.mxu0 0
        %525 = vmatprep.subr.bf16.mxu0 0
        %526 = vmatpush1.bf16.msra.mxu0 0
        %527 = vmatprep.subr.bf16.mxu0 0
        %528 = vmatpush1.bf16.msra.mxu0 0
        %529 = vmatprep.mubr.bf16.mxu0 0
        %530 = vmatmul.mubr.bf16.gmra.mrb[0].mxu0 %v441
        %v531 = vpop.f32.mrb[0].mxu0
        %v532 = vadd.f32 %v423, %v531
        %v533 = vpop.f32.mrb[0].mxu0
        %v534 = vpop.f32.mrb[0].mxu0
        %v535 = vadd.f32 %v423, %v534
        %v536 = vpop.f32.mrb[0].mxu0
        %537 = vmatprep.mubr.bf16.mxu0 0
        %538 = vmatmul.mubr.bf16.gmra.mrb[0].mxu0 %v442
        %v539 = vpop.f32.mrb[0].mxu0
        %v540 = vadd.f32 %v423, %v539
        %v541 = vpop.f32.mrb[0].mxu0
        %v542 = vpop.f32.mrb[0].mxu0
        %v543 = vadd.f32 %v423, %v542
        %v544 = vpop.f32.mrb[0].mxu0
        %545 = vmatprep.mubr.bf16.mxu0 0
        %546 = vmatmul.mubr.bf16.gmra.mrb[0].mxu0 %v443
        %v547 = vpop.f32.mrb[0].mxu0
        %v548 = vadd.f32 %v423, %v547
        %v549 = vpop.f32.mrb[0].mxu0
        %v550 = vpop.f32.mrb[0].mxu0
        %v551 = vadd.f32 %v423, %v550
        %v552 = vpop.f32.mrb[0].mxu0
        %553 = vmatprep.mubr.bf16.mxu0 0
        %554 = vmatmul.mubr.bf16.gmra.mrb[0].mxu0 %v444
        %v555 = vpop.f32.mrb[0].mxu0
        %v556 = vadd.f32 %v423, %v555
        %v557 = vpop.f32.mrb[0].mxu0
        %v558 = vpop.f32.mrb[0].mxu0
        %v559 = vadd.f32 %v423, %v558
        %v560 = vpop.f32.mrb[0].mxu0
        %561 = vdwg.mxu0
        %v562 = vmax.f32 %v532, 0.0
        %v563 = vmax.f32 %v535, 0.0
        %v564 = vmax.f32 %v540, 0.0
        %v565 = vmax.f32 %v543, 0.0
        %v566 = vmax.f32 %v548, 0.0
        %v567 = vmax.f32 %v551, 0.0
        %v568 = vmax.f32 %v556, 0.0
        %v569 = vmax.f32 %v559, 0.0
        %570 = vst [vmem:[#allocation2 + $0x10] sm:$0xff] %v562
        %571 = vst [vmem:[#allocation2 + $0x18] sm:$0xff] %v563
        %572 = vst [vmem:[#allocation2 + $0x20] sm:$0xff] %v564
        %573 = vst [vmem:[#allocation2 + $0x28] sm:$0xff] %v565
        %574 = vst [vmem:[#allocation2 + $0x30] sm:$0xff] %v566
        %575 = vst [vmem:[#allocation2 + $0x38] sm:$0xff] %v567
        %576 = vst [vmem:[#allocation2 + $0x40] sm:$0xff] %v568
        %577 = vst [vmem:[#allocation2 + $0x48] sm:$0xff] %v569
        %v578 = vld [vmem:[%s384] sm:$0xff]
        %v579 = vld [vmem:[%s384 + $0x8] sm:$0xff]
        %v580 = vld [vmem:[%s384 + $0x10] sm:$0xff]
        %v581 = vld [vmem:[%s384 + $0x18] sm:$0xff]
        %v582 = vld [vmem:[%s384 + $0x20] sm:$0xff]
        %v583 = vld [vmem:[%s384 + $0x28] sm:$0xff]
        %v584 = vld [vmem:[%s384 + $0x30] sm:$0xff]
        %v585 = vld [vmem:[%s384 + $0x38] sm:$0xff]
        %v586 = vld [vmem:[%s390] sm:$0xff]
        %v587 = vld [vmem:[%s390 + $0x8] sm:$0xff]
        %v588 = vld [vmem:[%s390 + $0x10] sm:$0xff]
        %v589 = vld [vmem:[%s390 + $0x18] sm:$0xff]
        %v590 = vld [vmem:[%s390 + $0x20] sm:$0xff]
        %v591 = vld [vmem:[%s390 + $0x28] sm:$0xff]
        %v592 = vld [vmem:[%s390 + $0x30] sm:$0xff]
        %v593 = vld [vmem:[%s390 + $0x38] sm:$0xff]
        %v594 = vld [vmem:[#allocation2 + $0x7] sm:$0xff]
        %v595 = vld [vmem:[#allocation2 + $0xf] sm:$0xff]
        %v596 = vld [vmem:[#allocation2 + $0x17] sm:$0xff]
        %v597 = vld [vmem:[#allocation2 + $0x1f] sm:$0xff]
        %v598 = vld [vmem:[#allocation2 + $0x27] sm:$0xff]
        %v599 = vld [vmem:[#allocation2 + $0x2f] sm:$0xff]
        %v600 = vld [vmem:[#allocation2 + $0x37] sm:$0xff]
        %v601 = vld [vmem:[#allocation2 + $0x3f] sm:$0xff]
        %v602 = vadd.s32 %v578, 4294967295
        %v603 = vadd.s32 %v579, 4294967295
        %v604 = vadd.s32 %v580, 4294967295
        %v605 = vadd.s32 %v581, 4294967295
        %v606 = vadd.s32 %v582, 4294967295
        %v607 = vadd.s32 %v583, 4294967295
        %v608 = vadd.s32 %v584, 4294967295
        %v609 = vadd.s32 %v585, 4294967295
        %vm610 = vcmp.ge.s32.totalorder %v602, 0
        %vm611 = vcmp.ge.s32.totalorder %v603, 0
        %vm612 = vcmp.ge.s32.totalorder %v604, 0
        %vm613 = vcmp.ge.s32.totalorder %v605, 0
        %vm614 = vcmp.ge.s32.totalorder %v606, 0
        %vm615 = vcmp.ge.s32.totalorder %v607, 0
        %vm616 = vcmp.ge.s32.totalorder %v608, 0
        %vm617 = vcmp.ge.s32.totalorder %v609, 0
        %vm618 = vcmp.lt.s32.totalorder %v602, 8
        %vm619 = vcmp.lt.s32.totalorder %v603, 8
        %vm620 = vcmp.lt.s32.totalorder %v604, 8
        %vm621 = vcmp.lt.s32.totalorder %v605, 8
        %vm622 = vcmp.lt.s32.totalorder %v606, 8
        %vm623 = vcmp.lt.s32.totalorder %v607, 8
        %vm624 = vcmp.lt.s32.totalorder %v608, 8
        %vm625 = vcmp.lt.s32.totalorder %v609, 8
        %vm626 = vmand %vm610, %vm618
        %vm627 = vmand %vm611, %vm619
        %vm628 = vmand %vm612, %vm620
        %vm629 = vmand %vm613, %vm621
        %vm630 = vmand %vm614, %vm622
        %vm631 = vmand %vm615, %vm623
        %vm632 = vmand %vm616, %vm624
        %vm633 = vmand %vm617, %vm625
        %v634 = vadd.s32 %v586, 4294967295
        %v635 = vadd.s32 %v587, 4294967295
        %v636 = vadd.s32 %v588, 4294967295
        %v637 = vadd.s32 %v589, 4294967295
        %v638 = vadd.s32 %v590, 4294967295
        %v639 = vadd.s32 %v591, 4294967295
        %v640 = vadd.s32 %v592, 4294967295
        %v641 = vadd.s32 %v593, 4294967295
        %vm642 = vcmp.ge.s32.totalorder %v634, 0
        %vm643 = vcmp.ge.s32.totalorder %v635, 0
        %vm644 = vcmp.ge.s32.totalorder %v636, 0
        %vm645 = vcmp.ge.s32.totalorder %v637, 0
        %vm646 = vcmp.ge.s32.totalorder %v638, 0
        %vm647 = vcmp.ge.s32.totalorder %v639, 0
        %vm648 = vcmp.ge.s32.totalorder %v640, 0
        %vm649 = vcmp.ge.s32.totalorder %v641, 0
        %vm650 = vmand %vm626, %vm642
        %vm651 = vmand %vm627, %vm643
        %vm652 = vmand %vm628, %vm644
        %vm653 = vmand %vm629, %vm645
        %vm654 = vmand %vm630, %vm646
        %vm655 = vmand %vm631, %vm647
        %vm656 = vmand %vm632, %vm648
        %vm657 = vmand %vm633, %vm649
        %vm658 = vcmp.lt.s32.totalorder %v634, 8
        %vm659 = vcmp.lt.s32.totalorder %v635, 8
        %vm660 = vcmp.lt.s32.totalorder %v636, 8
        %vm661 = vcmp.lt.s32.totalorder %v637, 8
        %vm662 = vcmp.lt.s32.totalorder %v638, 8
        %vm663 = vcmp.lt.s32.totalorder %v639, 8
        %vm664 = vcmp.lt.s32.totalorder %v640, 8
        %vm665 = vcmp.lt.s32.totalorder %v641, 8
        %vm666 = vmand %vm650, %vm658
        %vm667 = vmand %vm651, %vm659
        %vm668 = vmand %vm652, %vm660
        %vm669 = vmand %vm653, %vm661
        %vm670 = vmand %vm654, %vm662
        %vm671 = vmand %vm655, %vm663
        %vm672 = vmand %vm656, %vm664
        %vm673 = vmand %vm657, %vm665
        %v674 = vsel %vm666, 1, 0
        %v675 = vsel %vm667, 1, 0
        %v676 = vsel %vm668, 1, 0
        %v677 = vsel %vm669, 1, 0
        %v678 = vsel %vm670, 1, 0
        %v679 = vsel %vm671, 1, 0
        %v680 = vsel %vm672, 1, 0
        %v681 = vsel %vm673, 1, 0
        %682 = vset.pattern.permute.xlu0 0
        %683 = vperm.xlu0 %682, %v674
        %v684 = vpop.permute.xlu0 %683
        %685 = vset.pattern.permute.xlu0 0
        %686 = vperm.xlu0 %685, %v675
        %v687 = vpop.permute.xlu0 %686
        %688 = vset.pattern.permute.xlu0 0
        %689 = vperm.xlu0 %688, %v676
        %v690 = vpop.permute.xlu0 %689
        %691 = vset.pattern.permute.xlu0 0
        %692 = vperm.xlu0 %691, %v677
        %v693 = vpop.permute.xlu0 %692
        %694 = vset.pattern.permute.xlu0 0
        %695 = vperm.xlu0 %694, %v678
        %v696 = vpop.permute.xlu0 %695
        %697 = vset.pattern.permute.xlu0 0
        %698 = vperm.xlu0 %697, %v679
        %v699 = vpop.permute.xlu0 %698
        %700 = vset.pattern.permute.xlu0 0
        %701 = vperm.xlu0 %700, %v680
        %v702 = vpop.permute.xlu0 %701
        %703 = vset.pattern.permute.xlu0 0
        %704 = vperm.xlu0 %703, %v681
        %v705 = vpop.permute.xlu0 %704
        %vm706 = vcmp.eq.s32.totalorder %v684, 1
        %vm707 = vcmp.eq.s32.totalorder %v687, 1
        %vm708 = vcmp.eq.s32.totalorder %v690, 1
        %vm709 = vcmp.eq.s32.totalorder %v693, 1
        %vm710 = vcmp.eq.s32.totalorder %v696, 1
        %vm711 = vcmp.eq.s32.totalorder %v699, 1
        %vm712 = vcmp.eq.s32.totalorder %v702, 1
        %vm713 = vcmp.eq.s32.totalorder %v705, 1
        %v714 = vsel %vm706, %v594, 0.0
        %v715 = vsel %vm707, %v595, 0.0
        %v716 = vsel %vm708, %v596, 0.0
        %v717 = vsel %vm709, %v597, 0.0
        %v718 = vsel %vm710, %v598, 0.0
        %v719 = vsel %vm711, %v599, 0.0
        %v720 = vsel %vm712, %v600, 0.0
        %v721 = vsel %vm713, %v601, 0.0
        %v722 = vpack.c.bf16 %v715, %v714
        %v723 = vpack.c.bf16 %v717, %v716
        %v724 = vpack.c.bf16 %v719, %v718
        %v725 = vpack.c.bf16 %v721, %v720
        %v726 = vld [vmem:[#allocation3] sm:$0xf]
        %v727 = vld [vmem:[#allocation3 + $0x4] sm:$0xf]
        %v728 = vld [vmem:[#allocation3 + $0x8] sm:$0xf]
        %v729 = vld [vmem:[#allocation3 + $0xc] sm:$0xf]
        %v730 = vld [vmem:[#allocation3 + $0x10] sm:$0xf]
        %v731 = vld [vmem:[#allocation3 + $0x14] sm:$0xf]
        %v732 = vld [vmem:[#allocation3 + $0x18] sm:$0xf]
        %v733 = vld [vmem:[#allocation3 + $0x1c] sm:$0xf]
        %v734 = vld [vmem:[#allocation3 + $0x20] sm:$0xf]
        %v735 = vld [vmem:[#allocation3 + $0x24] sm:$0xf]
        %v736 = vld [vmem:[#allocation3 + $0x28] sm:$0xf]
        %v737 = vld [vmem:[#allocation3 + $0x2c] sm:$0xf]
        %v738 = vld [vmem:[#allocation3 + $0x30] sm:$0xf]
        %v739 = vld [vmem:[#allocation3 + $0x34] sm:$0xf]
        %v740 = vld [vmem:[#allocation3 + $0x38] sm:$0xf]
        %v741 = vld [vmem:[#allocation3 + $0x3c] sm:$0xf]
        %v742 = vld [vmem:[#allocation2 + $0x8] sm:$0xff]
        %v743 = vld [vmem:[#allocation2 + $0x10] sm:$0xff]
        %v744 = vld [vmem:[#allocation2 + $0x18] sm:$0xff]
        %v745 = vld [vmem:[#allocation2 + $0x20] sm:$0xff]
        %v746 = vld [vmem:[#allocation2 + $0x28] sm:$0xff]
        %v747 = vld [vmem:[#allocation2 + $0x30] sm:$0xff]
        %v748 = vld [vmem:[#allocation2 + $0x38] sm:$0xff]
        %v749 = vld [vmem:[#allocation2 + $0x40] sm:$0xff]
        %vm750 = vcmp.ge.s32.totalorder %v586, 0
        %vm751 = vcmp.ge.s32.totalorder %v587, 0
        %vm752 = vcmp.ge.s32.totalorder %v588, 0
        %vm753 = vcmp.ge.s32.totalorder %v589, 0
        %vm754 = vcmp.ge.s32.totalorder %v590, 0
        %vm755 = vcmp.ge.s32.totalorder %v591, 0
        %vm756 = vcmp.ge.s32.totalorder %v592, 0
        %vm757 = vcmp.ge.s32.totalorder %v593, 0
        %vm758 = vmand %vm626, %vm750
        %vm759 = vmand %vm627, %vm751
        %vm760 = vmand %vm628, %vm752
        %vm761 = vmand %vm629, %vm753
        %vm762 = vmand %vm630, %vm754
        %vm763 = vmand %vm631, %vm755
        %vm764 = vmand %vm632, %vm756
        %vm765 = vmand %vm633, %vm757
        %vm766 = vcmp.lt.s32.totalorder %v586, 8
        %vm767 = vcmp.lt.s32.totalorder %v587, 8
        %vm768 = vcmp.lt.s32.totalorder %v588, 8
        %vm769 = vcmp.lt.s32.totalorder %v589, 8
        %vm770 = vcmp.lt.s32.totalorder %v590, 8
        %vm771 = vcmp.lt.s32.totalorder %v591, 8
        %vm772 = vcmp.lt.s32.totalorder %v592, 8
        %vm773 = vcmp.lt.s32.totalorder %v593, 8
        %vm774 = vmand %vm758, %vm766
        %vm775 = vmand %vm759, %vm767
        %vm776 = vmand %vm760, %vm768
        %vm777 = vmand %vm761, %vm769
        %vm778 = vmand %vm762, %vm770
        %vm779 = vmand %vm763, %vm771
        %vm780 = vmand %vm764, %vm772
        %vm781 = vmand %vm765, %vm773
        %v782 = vsel %vm774, 1, 0
        %v783 = vsel %vm775, 1, 0
        %v784 = vsel %vm776, 1, 0
        %v785 = vsel %vm777, 1, 0
        %v786 = vsel %vm778, 1, 0
        %v787 = vsel %vm779, 1, 0
        %v788 = vsel %vm780, 1, 0
        %v789 = vsel %vm781, 1, 0
        %790 = vset.pattern.permute.xlu0 0
        %791 = vperm.xlu0 %790, %v782
        %v792 = vpop.permute.xlu0 %791
        %793 = vset.pattern.permute.xlu0 0
        %794 = vperm.xlu0 %793, %v783
        %v795 = vpop.permute.xlu0 %794
        %796 = vset.pattern.permute.xlu0 0
        %797 = vperm.xlu0 %796, %v784
        %v798 = vpop.permute.xlu0 %797
        %799 = vset.pattern.permute.xlu0 0
        %800 = vperm.xlu0 %799, %v785
        %v801 = vpop.permute.xlu0 %800
        %802 = vset.pattern.permute.xlu0 0
        %803 = vperm.xlu0 %802, %v786
        %v804 = vpop.permute.xlu0 %803
        %805 = vset.pattern.permute.xlu0 0
        %806 = vperm.xlu0 %805, %v787
        %v807 = vpop.permute.xlu0 %806
        %808 = vset.pattern.permute.xlu0 0
        %809 = vperm.xlu0 %808, %v788
        %v810 = vpop.permute.xlu0 %809
        %811 = vset.pattern.permute.xlu0 0
        %812 = vperm.xlu0 %811, %v789
        %v813 = vpop.permute.xlu0 %812
        %vm814 = vcmp.eq.s32.totalorder %v792, 1
        %vm815 = vcmp.eq.s32.totalorder %v795, 1
        %vm816 = vcmp.eq.s32.totalorder %v798, 1
        %vm817 = vcmp.eq.s32.totalorder %v801, 1
        %vm818 = vcmp.eq.s32.totalorder %v804, 1
        %vm819 = vcmp.eq.s32.totalorder %v807, 1
        %vm820 = vcmp.eq.s32.totalorder %v810, 1
        %vm821 = vcmp.eq.s32.totalorder %v813, 1
        %v822 = vsel %vm814, %v742, 0.0
        %v823 = vsel %vm815, %v743, 0.0
        %v824 = vsel %vm816, %v744, 0.0
        %v825 = vsel %vm817, %v745, 0.0
        %v826 = vsel %vm818, %v746, 0.0
        %v827 = vsel %vm819, %v747, 0.0
        %v828 = vsel %vm820, %v748, 0.0
        %v829 = vsel %vm821, %v749, 0.0
        %v830 = vpack.c.bf16 %v823, %v822
        %v831 = vpack.c.bf16 %v825, %v824
        %v832 = vpack.c.bf16 %v827, %v826
        %v833 = vpack.c.bf16 %v829, %v828
        %v834 = vld [vmem:[#allocation3 + $0x40] sm:$0xf]
        %v835 = vld [vmem:[#allocation3 + $0x44] sm:$0xf]
        %v836 = vld [vmem:[#allocation3 + $0x48] sm:$0xf]
        %v837 = vld [vmem:[#allocation3 + $0x4c] sm:$0xf]
        %v838 = vld [vmem:[#allocation3 + $0x50] sm:$0xf]
        %v839 = vld [vmem:[#allocation3 + $0x54] sm:$0xf]
        %v840 = vld [vmem:[#allocation3 + $0x58] sm:$0xf]
        %v841 = vld [vmem:[#allocation3 + $0x5c] sm:$0xf]
        %v842 = vld [vmem:[#allocation3 + $0x60] sm:$0xf]
        %v843 = vld [vmem:[#allocation3 + $0x64] sm:$0xf]
        %v844 = vld [vmem:[#allocation3 + $0x68] sm:$0xf]
        %v845 = vld [vmem:[#allocation3 + $0x6c] sm:$0xf]
        %v846 = vld [vmem:[#allocation3 + $0x70] sm:$0xf]
        %v847 = vld [vmem:[#allocation3 + $0x74] sm:$0xf]
        %v848 = vld [vmem:[#allocation3 + $0x78] sm:$0xf]
        %v849 = vld [vmem:[#allocation3 + $0x7c] sm:$0xf]
        %v866 = vunpack.c.l.b16 %v834
        %v867 = vunpack.c.l.b16 %v835
        %v868 = vunpack.c.l.b16 %v836
        %v869 = vunpack.c.l.b16 %v837
        %v870 = vunpack.c.l.b16 %v838
        %v871 = vunpack.c.l.b16 %v839
        %v872 = vunpack.c.l.b16 %v840
        %v873 = vunpack.c.l.b16 %v841
        %v874 = vunpack.c.l.b16 %v842
        %v875 = vunpack.c.l.b16 %v843
        %v876 = vunpack.c.l.b16 %v844
        %v877 = vunpack.c.l.b16 %v845
        %v878 = vunpack.c.l.b16 %v846
        %v879 = vunpack.c.l.b16 %v847
        %v880 = vunpack.c.l.b16 %v848
        %v881 = vunpack.c.l.b16 %v849
        %v882 = vpack.c.b16 %v867, %v866
        %v883 = vpack.c.b16 %v869, %v868
        %v884 = vpack.c.b16 %v871, %v870
        %v885 = vpack.c.b16 %v873, %v872
        %v886 = vpack.c.b16 %v875, %v874
        %v887 = vpack.c.b16 %v877, %v876
        %v888 = vpack.c.b16 %v879, %v878
        %v889 = vpack.c.b16 %v881, %v880
        %898 = vmatprep.subr.bf16.mxu0 0
        %899 = vmatpush1.bf16.msra.mxu0 %v882
        %900 = vmatprep.subr.bf16.mxu0 0
        %901 = vmatpush1.bf16.msra.mxu0 %v883
        %902 = vmatprep.subr.bf16.mxu0 0
        %903 = vmatpush1.bf16.msra.mxu0 %v884
        %904 = vmatprep.subr.bf16.mxu0 0
        %905 = vmatpush1.bf16.msra.mxu0 %v885
        %906 = vmatprep.subr.bf16.mxu0 0
        %907 = vmatpush1.bf16.msra.mxu0 %v886
        %908 = vmatprep.subr.bf16.mxu0 0
        %909 = vmatpush1.bf16.msra.mxu0 %v887
        %910 = vmatprep.subr.bf16.mxu0 0
        %911 = vmatpush1.bf16.msra.mxu0 %v888
        %912 = vmatprep.subr.bf16.mxu0 0
        %913 = vmatpush1.bf16.msra.mxu0 %v889
        %914 = vmatprep.subr.bf16.mxu0 0
        %915 = vmatpush1.bf16.msra.mxu0 0
        %916 = vmatprep.subr.bf16.mxu0 0
        %917 = vmatpush1.bf16.msra.mxu0 0
        %918 = vmatprep.subr.bf16.mxu0 0
        %919 = vmatpush1.bf16.msra.mxu0 0
        %920 = vmatprep.subr.bf16.mxu0 0
        %921 = vmatpush1.bf16.msra.mxu0 0
        %922 = vmatprep.subr.bf16.mxu0 0
        %923 = vmatpush1.bf16.msra.mxu0 0
        %924 = vmatprep.subr.bf16.mxu0 0
        %925 = vmatpush1.bf16.msra.mxu0 0
        %926 = vmatprep.subr.bf16.mxu0 0
        %927 = vmatpush1.bf16.msra.mxu0 0
        %928 = vmatprep.subr.bf16.mxu0 0
        %929 = vmatpush1.bf16.msra.mxu0 0
        %930 = vmatprep.mubr.bf16.mxu0 0
        %931 = vmatmul.mubr.bf16.gmra.mrb[0].mxu0 %v830
        %v932 = vpop.f32.mrb[0].mxu0
        %v933 = vadd.f32 0.0, %v932
        %v934 = vpop.f32.mrb[0].mxu0
        %v935 = vpop.f32.mrb[0].mxu0
        %v936 = vadd.f32 0.0, %v935
        %v937 = vpop.f32.mrb[0].mxu0
        %938 = vmatprep.mubr.bf16.mxu0 0
        %939 = vmatmul.mubr.bf16.gmra.mrb[0].mxu0 %v831
        %v940 = vpop.f32.mrb[0].mxu0
        %v941 = vadd.f32 0.0, %v940
        %v942 = vpop.f32.mrb[0].mxu0
        %v943 = vpop.f32.mrb[0].mxu0
        %v944 = vadd.f32 0.0, %v943
        %v945 = vpop.f32.mrb[0].mxu0
        %946 = vmatprep.mubr.bf16.mxu0 0
        %947 = vmatmul.mubr.bf16.gmra.mrb[0].mxu0 %v832
        %v948 = vpop.f32.mrb[0].mxu0
        %v949 = vadd.f32 0.0, %v948
        %v950 = vpop.f32.mrb[0].mxu0
        %v951 = vpop.f32.mrb[0].mxu0
        %v952 = vadd.f32 0.0, %v951
        %v953 = vpop.f32.mrb[0].mxu0
        %954 = vmatprep.mubr.bf16.mxu0 0
        %955 = vmatmul.mubr.bf16.gmra.mrb[0].mxu0 %v833
        %v956 = vpop.f32.mrb[0].mxu0
        %v957 = vadd.f32 0.0, %v956
        %v958 = vpop.f32.mrb[0].mxu0
        %v959 = vpop.f32.mrb[0].mxu0
        %v960 = vadd.f32 0.0, %v959
        %v961 = vpop.f32.mrb[0].mxu0
        %962 = vdwg.mxu0
        %v979 = vunpack.c.l.b16 %v726
        %v980 = vunpack.c.l.b16 %v727
        %v981 = vunpack.c.l.b16 %v728
        %v982 = vunpack.c.l.b16 %v729
        %v983 = vunpack.c.l.b16 %v730
        %v984 = vunpack.c.l.b16 %v731
        %v985 = vunpack.c.l.b16 %v732
        %v986 = vunpack.c.l.b16 %v733
        %v987 = vunpack.c.l.b16 %v734
        %v988 = vunpack.c.l.b16 %v735
        %v989 = vunpack.c.l.b16 %v736
        %v990 = vunpack.c.l.b16 %v737
        %v991 = vunpack.c.l.b16 %v738
        %v992 = vunpack.c.l.b16 %v739
        %v993 = vunpack.c.l.b16 %v740
        %v994 = vunpack.c.l.b16 %v741
        %v995 = vpack.c.b16 %v980, %v979
        %v996 = vpack.c.b16 %v982, %v981
        %v997 = vpack.c.b16 %v984, %v983
        %v998 = vpack.c.b16 %v986, %v985
        %v999 = vpack.c.b16 %v988, %v987
        %v1000 = vpack.c.b16 %v990, %v989
        %v1001 = vpack.c.b16 %v992, %v991
        %v1002 = vpack.c.b16 %v994, %v993
        %1011 = vmatprep.subr.bf16.mxu0 0
        %1012 = vmatpush1.bf16.msra.mxu0 %v995
        %1013 = vmatprep.subr.bf16.mxu0 0
        %1014 = vmatpush1.bf16.msra.mxu0 %v996
        %1015 = vmatprep.subr.bf16.mxu0 0
        %1016 = vmatpush1.bf16.msra.mxu0 %v997
        %1017 = vmatprep.subr.bf16.mxu0 0
        %1018 = vmatpush1.bf16.msra.mxu0 %v998
        %1019 = vmatprep.subr.bf16.mxu0 0
        %1020 = vmatpush1.bf16.msra.mxu0 %v999
        %1021 = vmatprep.subr.bf16.mxu0 0
        %1022 = vmatpush1.bf16.msra.mxu0 %v1000
        %1023 = vmatprep.subr.bf16.mxu0 0
        %1024 = vmatpush1.bf16.msra.mxu0 %v1001
        %1025 = vmatprep.subr.bf16.mxu0 0
        %1026 = vmatpush1.bf16.msra.mxu0 %v1002
        %1027 = vmatprep.subr.bf16.mxu0 0
        %1028 = vmatpush1.bf16.msra.mxu0 0
        %1029 = vmatprep.subr.bf16.mxu0 0
        %1030 = vmatpush1.bf16.msra.mxu0 0
        %1031 = vmatprep.subr.bf16.mxu0 0
        %1032 = vmatpush1.bf16.msra.mxu0 0
        %1033 = vmatprep.subr.bf16.mxu0 0
        %1034 = vmatpush1.bf16.msra.mxu0 0
        %1035 = vmatprep.subr.bf16.mxu0 0
        %1036 = vmatpush1.bf16.msra.mxu0 0
        %1037 = vmatprep.subr.bf16.mxu0 0
        %1038 = vmatpush1.bf16.msra.mxu0 0
        %1039 = vmatprep.subr.bf16.mxu0 0
        %1040 = vmatpush1.bf16.msra.mxu0 0
        %1041 = vmatprep.subr.bf16.mxu0 0
        %1042 = vmatpush1.bf16.msra.mxu0 0
        %1043 = vmatprep.mubr.bf16.mxu0 0
        %1044 = vmatmul.mubr.bf16.gmra.mrb[0].mxu0 %v722
        %v1045 = vpop.f32.mrb[0].mxu0
        %v1046 = vadd.f32 %v933, %v1045
        %v1047 = vpop.f32.mrb[0].mxu0
        %v1048 = vpop.f32.mrb[0].mxu0
        %v1049 = vadd.f32 %v936, %v1048
        %v1050 = vpop.f32.mrb[0].mxu0
        %1051 = vmatprep.mubr.bf16.mxu0 0
        %1052 = vmatmul.mubr.bf16.gmra.mrb[0].mxu0 %v723
        %v1053 = vpop.f32.mrb[0].mxu0
        %v1054 = vadd.f32 %v941, %v1053
        %v1055 = vpop.f32.mrb[0].mxu0
        %v1056 = vpop.f32.mrb[0].mxu0
        %v1057 = vadd.f32 %v944, %v1056
        %v1058 = vpop.f32.mrb[0].mxu0
        %1059 = vmatprep.mubr.bf16.mxu0 0
        %1060 = vmatmul.mubr.bf16.gmra.mrb[0].mxu0 %v724
        %v1061 = vpop.f32.mrb[0].mxu0
        %v1062 = vadd.f32 %v949, %v1061
        %v1063 = vpop.f32.mrb[0].mxu0
        %v1064 = vpop.f32.mrb[0].mxu0
        %v1065 = vadd.f32 %v952, %v1064
        %v1066 = vpop.f32.mrb[0].mxu0
        %1067 = vmatprep.mubr.bf16.mxu0 0
        %1068 = vmatmul.mubr.bf16.gmra.mrb[0].mxu0 %v725
        %v1069 = vpop.f32.mrb[0].mxu0
        %v1070 = vadd.f32 %v957, %v1069
        %v1071 = vpop.f32.mrb[0].mxu0
        %v1072 = vpop.f32.mrb[0].mxu0
        %v1073 = vadd.f32 %v960, %v1072
        %v1074 = vpop.f32.mrb[0].mxu0
        %1075 = vdwg.mxu0
        %v1076 = vld [vmem:[#allocation2 + $0x9] sm:$0xff]
        %v1077 = vld [vmem:[#allocation2 + $0x11] sm:$0xff]
        %v1078 = vld [vmem:[#allocation2 + $0x19] sm:$0xff]
        %v1079 = vld [vmem:[#allocation2 + $0x21] sm:$0xff]
        %v1080 = vld [vmem:[#allocation2 + $0x29] sm:$0xff]
        %v1081 = vld [vmem:[#allocation2 + $0x31] sm:$0xff]
        %v1082 = vld [vmem:[#allocation2 + $0x39] sm:$0xff]
        %v1083 = vld [vmem:[#allocation2 + $0x41] sm:$0xff]
        %v1084 = vadd.s32 %v586, 1
        %v1085 = vadd.s32 %v587, 1
        %v1086 = vadd.s32 %v588, 1
        %v1087 = vadd.s32 %v589, 1
        %v1088 = vadd.s32 %v590, 1
        %v1089 = vadd.s32 %v591, 1
        %v1090 = vadd.s32 %v592, 1
        %v1091 = vadd.s32 %v593, 1
        %vm1092 = vcmp.ge.s32.totalorder %v1084, 0
        %vm1093 = vcmp.ge.s32.totalorder %v1085, 0
        %vm1094 = vcmp.ge.s32.totalorder %v1086, 0
        %vm1095 = vcmp.ge.s32.totalorder %v1087, 0
        %vm1096 = vcmp.ge.s32.totalorder %v1088, 0
        %vm1097 = vcmp.ge.s32.totalorder %v1089, 0
        %vm1098 = vcmp.ge.s32.totalorder %v1090, 0
        %vm1099 = vcmp.ge.s32.totalorder %v1091, 0
        %vm1100 = vmand %vm626, %vm1092
        %vm1101 = vmand %vm627, %vm1093
        %vm1102 = vmand %vm628, %vm1094
        %vm1103 = vmand %vm629, %vm1095
        %vm1104 = vmand %vm630, %vm1096
        %vm1105 = vmand %vm631, %vm1097
        %vm1106 = vmand %vm632, %vm1098
        %vm1107 = vmand %vm633, %vm1099
        %vm1108 = vcmp.lt.s32.totalorder %v1084, 8
        %vm1109 = vcmp.lt.s32.totalorder %v1085, 8
        %vm1110 = vcmp.lt.s32.totalorder %v1086, 8
        %vm1111 = vcmp.lt.s32.totalorder %v1087, 8
        %vm1112 = vcmp.lt.s32.totalorder %v1088, 8
        %vm1113 = vcmp.lt.s32.totalorder %v1089, 8
        %vm1114 = vcmp.lt.s32.totalorder %v1090, 8
        %vm1115 = vcmp.lt.s32.totalorder %v1091, 8
        %vm1116 = vmand %vm1100, %vm1108
        %vm1117 = vmand %vm1101, %vm1109
        %vm1118 = vmand %vm1102, %vm1110
        %vm1119 = vmand %vm1103, %vm1111
        %vm1120 = vmand %vm1104, %vm1112
        %vm1121 = vmand %vm1105, %vm1113
        %vm1122 = vmand %vm1106, %vm1114
        %vm1123 = vmand %vm1107, %vm1115
        %v1124 = vsel %vm1116, 1, 0
        %v1125 = vsel %vm1117, 1, 0
        %v1126 = vsel %vm1118, 1, 0
        %v1127 = vsel %vm1119, 1, 0
        %v1128 = vsel %vm1120, 1, 0
        %v1129 = vsel %vm1121, 1, 0
        %v1130 = vsel %vm1122, 1, 0
        %v1131 = vsel %vm1123, 1, 0
        %1132 = vset.pattern.permute.xlu0 0
        %1133 = vperm.xlu0 %1132, %v1124
        %v1134 = vpop.permute.xlu0 %1133
        %1135 = vset.pattern.permute.xlu0 0
        %1136 = vperm.xlu0 %1135, %v1125
        %v1137 = vpop.permute.xlu0 %1136
        %1138 = vset.pattern.permute.xlu0 0
        %1139 = vperm.xlu0 %1138, %v1126
        %v1140 = vpop.permute.xlu0 %1139
        %1141 = vset.pattern.permute.xlu0 0
        %1142 = vperm.xlu0 %1141, %v1127
        %v1143 = vpop.permute.xlu0 %1142
        %1144 = vset.pattern.permute.xlu0 0
        %1145 = vperm.xlu0 %1144, %v1128
        %v1146 = vpop.permute.xlu0 %1145
        %1147 = vset.pattern.permute.xlu0 0
        %1148 = vperm.xlu0 %1147, %v1129
        %v1149 = vpop.permute.xlu0 %1148
        %1150 = vset.pattern.permute.xlu0 0
        %1151 = vperm.xlu0 %1150, %v1130
        %v1152 = vpop.permute.xlu0 %1151
        %1153 = vset.pattern.permute.xlu0 0
        %1154 = vperm.xlu0 %1153, %v1131
        %v1155 = vpop.permute.xlu0 %1154
        %vm1156 = vcmp.eq.s32.totalorder %v1134, 1
        %vm1157 = vcmp.eq.s32.totalorder %v1137, 1
        %vm1158 = vcmp.eq.s32.totalorder %v1140, 1
        %vm1159 = vcmp.eq.s32.totalorder %v1143, 1
        %vm1160 = vcmp.eq.s32.totalorder %v1146, 1
        %vm1161 = vcmp.eq.s32.totalorder %v1149, 1
        %vm1162 = vcmp.eq.s32.totalorder %v1152, 1
        %vm1163 = vcmp.eq.s32.totalorder %v1155, 1
        %v1164 = vsel %vm1156, %v1076, 0.0
        %v1165 = vsel %vm1157, %v1077, 0.0
        %v1166 = vsel %vm1158, %v1078, 0.0
        %v1167 = vsel %vm1159, %v1079, 0.0
        %v1168 = vsel %vm1160, %v1080, 0.0
        %v1169 = vsel %vm1161, %v1081, 0.0
        %v1170 = vsel %vm1162, %v1082, 0.0
        %v1171 = vsel %vm1163, %v1083, 0.0
        %v1172 = vpack.c.bf16 %v1165, %v1164
        %v1173 = vpack.c.bf16 %v1167, %v1166
        %v1174 = vpack.c.bf16 %v1169, %v1168
        %v1175 = vpack.c.bf16 %v1171, %v1170
        %v1176 = vld [vmem:[#allocation3 + $0x80] sm:$0xf]
        %v1177 = vld [vmem:[#allocation3 + $0x84] sm:$0xf]
        %v1178 = vld [vmem:[#allocation3 + $0x88] sm:$0xf]
        %v1179 = vld [vmem:[#allocation3 + $0x8c] sm:$0xf]
        %v1180 = vld [vmem:[#allocation3 + $0x90] sm:$0xf]
        %v1181 = vld [vmem:[#allocation3 + $0x94] sm:$0xf]
        %v1182 = vld [vmem:[#allocation3 + $0x98] sm:$0xf]
        %v1183 = vld [vmem:[#allocation3 + $0x9c] sm:$0xf]
        %v1184 = vld [vmem:[#allocation3 + $0xa0] sm:$0xf]
        %v1185 = vld [vmem:[#allocation3 + $0xa4] sm:$0xf]
        %v1186 = vld [vmem:[#allocation3 + $0xa8] sm:$0xf]
        %v1187 = vld [vmem:[#allocation3 + $0xac] sm:$0xf]
        %v1188 = vld [vmem:[#allocation3 + $0xb0] sm:$0xf]
        %v1189 = vld [vmem:[#allocation3 + $0xb4] sm:$0xf]
        %v1190 = vld [vmem:[#allocation3 + $0xb8] sm:$0xf]
        %v1191 = vld [vmem:[#allocation3 + $0xbc] sm:$0xf]
        %v1208 = vunpack.c.l.b16 %v1176
        %v1209 = vunpack.c.l.b16 %v1177
        %v1210 = vunpack.c.l.b16 %v1178
        %v1211 = vunpack.c.l.b16 %v1179
        %v1212 = vunpack.c.l.b16 %v1180
        %v1213 = vunpack.c.l.b16 %v1181
        %v1214 = vunpack.c.l.b16 %v1182
        %v1215 = vunpack.c.l.b16 %v1183
        %v1216 = vunpack.c.l.b16 %v1184
        %v1217 = vunpack.c.l.b16 %v1185
        %v1218 = vunpack.c.l.b16 %v1186
        %v1219 = vunpack.c.l.b16 %v1187
        %v1220 = vunpack.c.l.b16 %v1188
        %v1221 = vunpack.c.l.b16 %v1189
        %v1222 = vunpack.c.l.b16 %v1190
        %v1223 = vunpack.c.l.b16 %v1191
        %v1224 = vpack.c.b16 %v1209, %v1208
        %v1225 = vpack.c.b16 %v1211, %v1210
        %v1226 = vpack.c.b16 %v1213, %v1212
        %v1227 = vpack.c.b16 %v1215, %v1214
        %v1228 = vpack.c.b16 %v1217, %v1216
        %v1229 = vpack.c.b16 %v1219, %v1218
        %v1230 = vpack.c.b16 %v1221, %v1220
        %v1231 = vpack.c.b16 %v1223, %v1222
        %1240 = vmatprep.subr.bf16.mxu0 0
        %1241 = vmatpush1.bf16.msra.mxu0 %v1224
        %1242 = vmatprep.subr.bf16.mxu0 0
        %1243 = vmatpush1.bf16.msra.mxu0 %v1225
        %1244 = vmatprep.subr.bf16.mxu0 0
        %1245 = vmatpush1.bf16.msra.mxu0 %v1226
        %1246 = vmatprep.subr.bf16.mxu0 0
        %1247 = vmatpush1.bf16.msra.mxu0 %v1227
        %1248 = vmatprep.subr.bf16.mxu0 0
        %1249 = vmatpush1.bf16.msra.mxu0 %v1228
        %1250 = vmatprep.subr.bf16.mxu0 0
        %1251 = vmatpush1.bf16.msra.mxu0 %v1229
        %1252 = vmatprep.subr.bf16.mxu0 0
        %1253 = vmatpush1.bf16.msra.mxu0 %v1230
        %1254 = vmatprep.subr.bf16.mxu0 0
        %1255 = vmatpush1.bf16.msra.mxu0 %v1231
        %1256 = vmatprep.subr.bf16.mxu0 0
        %1257 = vmatpush1.bf16.msra.mxu0 0
        %1258 = vmatprep.subr.bf16.mxu0 0
        %1259 = vmatpush1.bf16.msra.mxu0 0
        %1260 = vmatprep.subr.bf16.mxu0 0
        %1261 = vmatpush1.bf16.msra.mxu0 0
        %1262 = vmatprep.subr.bf16.mxu0 0
        %1263 = vmatpush1.bf16.msra.mxu0 0
        %1264 = vmatprep.subr.bf16.mxu0 0
        %1265 = vmatpush1.bf16.msra.mxu0 0
        %1266 = vmatprep.subr.bf16.mxu0 0
        %1267 = vmatpush1.bf16.msra.mxu0 0
        %1268 = vmatprep.subr.bf16.mxu0 0
        %1269 = vmatpush1.bf16.msra.mxu0 0
        %1270 = vmatprep.subr.bf16.mxu0 0
        %1271 = vmatpush1.bf16.msra.mxu0 0
        %1272 = vmatprep.mubr.bf16.mxu0 0
        %1273 = vmatmul.mubr.bf16.gmra.mrb[0].mxu0 %v1172
        %v1274 = vpop.f32.mrb[0].mxu0
        %v1275 = vadd.f32 0.0, %v1274
        %v1276 = vpop.f32.mrb[0].mxu0
        %v1277 = vpop.f32.mrb[0].mxu0
        %v1278 = vadd.f32 0.0, %v1277
        %v1279 = vpop.f32.mrb[0].mxu0
        %1280 = vmatprep.mubr.bf16.mxu0 0
        %1281 = vmatmul.mubr.bf16.gmra.mrb[0].mxu0 %v1173
        %v1282 = vpop.f32.mrb[0].mxu0
        %v1283 = vadd.f32 0.0, %v1282
        %v1284 = vpop.f32.mrb[0].mxu0
        %v1285 = vpop.f32.mrb[0].mxu0
        %v1286 = vadd.f32 0.0, %v1285
        %v1287 = vpop.f32.mrb[0].mxu0
        %1288 = vmatprep.mubr.bf16.mxu0 0
        %1289 = vmatmul.mubr.bf16.gmra.mrb[0].mxu0 %v1174
        %v1290 = vpop.f32.mrb[0].mxu0
        %v1291 = vadd.f32 0.0, %v1290
        %v1292 = vpop.f32.mrb[0].mxu0
        %v1293 = vpop.f32.mrb[0].mxu0
        %v1294 = vadd.f32 0.0, %v1293
        %v1295 = vpop.f32.mrb[0].mxu0
        %1296 = vmatprep.mubr.bf16.mxu0 0
        %1297 = vmatmul.mubr.bf16.gmra.mrb[0].mxu0 %v1175
        %v1298 = vpop.f32.mrb[0].mxu0
        %v1299 = vadd.f32 0.0, %v1298
        %v1300 = vpop.f32.mrb[0].mxu0
        %v1301 = vpop.f32.mrb[0].mxu0
        %v1302 = vadd.f32 0.0, %v1301
        %v1303 = vpop.f32.mrb[0].mxu0
        %1304 = vdwg.mxu0
        %v1305 = vadd.f32 %v1046, %v1275
        %v1306 = vadd.f32 %v1049, %v1278
        %v1307 = vadd.f32 %v1054, %v1283
        %v1308 = vadd.f32 %v1057, %v1286
        %v1309 = vadd.f32 %v1062, %v1291
        %v1310 = vadd.f32 %v1065, %v1294
        %v1311 = vadd.f32 %v1070, %v1299
        %v1312 = vadd.f32 %v1073, %v1302
        %v1313 = vld [vmem:[#allocation2 + $0xf] sm:$0xff]
        %v1314 = vld [vmem:[#allocation2 + $0x17] sm:$0xff]
        %v1315 = vld [vmem:[#allocation2 + $0x1f] sm:$0xff]
        %v1316 = vld [vmem:[#allocation2 + $0x27] sm:$0xff]
        %v1317 = vld [vmem:[#allocation2 + $0x2f] sm:$0xff]
        %v1318 = vld [vmem:[#allocation2 + $0x37] sm:$0xff]
        %v1319 = vld [vmem:[#allocation2 + $0x3f] sm:$0xff]
        %v1320 = vld [vmem:[#allocation2 + $0x47] sm:$0xff]
        %vm1321 = vcmp.ge.s32.totalorder %v578, 0
        %vm1322 = vcmp.ge.s32.totalorder %v579, 0
        %vm1323 = vcmp.ge.s32.totalorder %v580, 0
        %vm1324 = vcmp.ge.s32.totalorder %v581, 0
        %vm1325 = vcmp.ge.s32.totalorder %v582, 0
        %vm1326 = vcmp.ge.s32.totalorder %v583, 0
        %vm1327 = vcmp.ge.s32.totalorder %v584, 0
        %vm1328 = vcmp.ge.s32.totalorder %v585, 0
        %vm1329 = vcmp.lt.s32.totalorder %v578, 8
        %vm1330 = vcmp.lt.s32.totalorder %v579, 8
        %vm1331 = vcmp.lt.s32.totalorder %v580, 8
        %vm1332 = vcmp.lt.s32.totalorder %v581, 8
        %vm1333 = vcmp.lt.s32.totalorder %v582, 8
        %vm1334 = vcmp.lt.s32.totalorder %v583, 8
        %vm1335 = vcmp.lt.s32.totalorder %v584, 8
        %vm1336 = vcmp.lt.s32.totalorder %v585, 8
        %vm1337 = vmand %vm1321, %vm1329
        %vm1338 = vmand %vm1322, %vm1330
        %vm1339 = vmand %vm1323, %vm1331
        %vm1340 = vmand %vm1324, %vm1332
        %vm1341 = vmand %vm1325, %vm1333
        %vm1342 = vmand %vm1326, %vm1334
        %vm1343 = vmand %vm1327, %vm1335
        %vm1344 = vmand %vm1328, %vm1336
        %vm1345 = vmand %vm1337, %vm642
        %vm1346 = vmand %vm1338, %vm643
        %vm1347 = vmand %vm1339, %vm644
        %vm1348 = vmand %vm1340, %vm645
        %vm1349 = vmand %vm1341, %vm646
        %vm1350 = vmand %vm1342, %vm647
        %vm1351 = vmand %vm1343, %vm648
        %vm1352 = vmand %vm1344, %vm649
        %vm1353 = vmand %vm1345, %vm658
        %vm1354 = vmand %vm1346, %vm659
        %vm1355 = vmand %vm1347, %vm660
        %vm1356 = vmand %vm1348, %vm661
        %vm1357 = vmand %vm1349, %vm662
        %vm1358 = vmand %vm1350, %vm663
        %vm1359 = vmand %vm1351, %vm664
        %vm1360 = vmand %vm1352, %vm665
        %v1361 = vsel %vm1353, 1, 0
        %v1362 = vsel %vm1354, 1, 0
        %v1363 = vsel %vm1355, 1, 0
        %v1364 = vsel %vm1356, 1, 0
        %v1365 = vsel %vm1357, 1, 0
        %v1366 = vsel %vm1358, 1, 0
        %v1367 = vsel %vm1359, 1, 0
        %v1368 = vsel %vm1360, 1, 0
        %1369 = vset.pattern.permute.xlu0 0
        %1370 = vperm.xlu0 %1369, %v1361
        %v1371 = vpop.permute.xlu0 %1370
        %1372 = vset.pattern.permute.xlu0 0
        %1373 = vperm.xlu0 %1372, %v1362
        %v1374 = vpop.permute.xlu0 %1373
        %1375 = vset.pattern.permute.xlu0 0
        %1376 = vperm.xlu0 %1375, %v1363
        %v1377 = vpop.permute.xlu0 %1376
        %1378 = vset.pattern.permute.xlu0 0
        %1379 = vperm.xlu0 %1378, %v1364
        %v1380 = vpop.permute.xlu0 %1379
        %1381 = vset.pattern.permute.xlu0 0
        %1382 = vperm.xlu0 %1381, %v1365
        %v1383 = vpop.permute.xlu0 %1382
        %1384 = vset.pattern.permute.xlu0 0
        %1385 = vperm.xlu0 %1384, %v1366
        %v1386 = vpop.permute.xlu0 %1385
        %1387 = vset.pattern.permute.xlu0 0
        %1388 = vperm.xlu0 %1387, %v1367
        %v1389 = vpop.permute.xlu0 %1388
        %1390 = vset.pattern.permute.xlu0 0
        %1391 = vperm.xlu0 %1390, %v1368
        %v1392 = vpop.permute.xlu0 %1391
        %vm1393 = vcmp.eq.s32.totalorder %v1371, 1
        %vm1394 = vcmp.eq.s32.totalorder %v1374, 1
        %vm1395 = vcmp.eq.s32.totalorder %v1377, 1
        %vm1396 = vcmp.eq.s32.totalorder %v1380, 1
        %vm1397 = vcmp.eq.s32.totalorder %v1383, 1
        %vm1398 = vcmp.eq.s32.totalorder %v1386, 1
        %vm1399 = vcmp.eq.s32.totalorder %v1389, 1
        %vm1400 = vcmp.eq.s32.totalorder %v1392, 1
        %v1401 = vsel %vm1393, %v1313, 0.0
        %v1402 = vsel %vm1394, %v1314, 0.0
        %v1403 = vsel %vm1395, %v1315, 0.0
        %v1404 = vsel %vm1396, %v1316, 0.0
        %v1405 = vsel %vm1397, %v1317, 0.0
        %v1406 = vsel %vm1398, %v1318, 0.0
        %v1407 = vsel %vm1399, %v1319, 0.0
        %v1408 = vsel %vm1400, %v1320, 0.0
        %v1409 = vpack.c.bf16 %v1402, %v1401
        %v1410 = vpack.c.bf16 %v1404, %v1403
        %v1411 = vpack.c.bf16 %v1406, %v1405
        %v1412 = vpack.c.bf16 %v1408, %v1407
        %v1413 = vld [vmem:[#allocation3 + $0xc0] sm:$0xf]
        %v1414 = vld [vmem:[#allocation3 + $0xc4] sm:$0xf]
        %v1415 = vld [vmem:[#allocation3 + $0xc8] sm:$0xf]
        %v1416 = vld [vmem:[#allocation3 + $0xcc] sm:$0xf]
        %v1417 = vld [vmem:[#allocation3 + $0xd0] sm:$0xf]
        %v1418 = vld [vmem:[#allocation3 + $0xd4] sm:$0xf]
        %v1419 = vld [vmem:[#allocation3 + $0xd8] sm:$0xf]
        %v1420 = vld [vmem:[#allocation3 + $0xdc] sm:$0xf]
        %v1421 = vld [vmem:[#allocation3 + $0xe0] sm:$0xf]
        %v1422 = vld [vmem:[#allocation3 + $0xe4] sm:$0xf]
        %v1423 = vld [vmem:[#allocation3 + $0xe8] sm:$0xf]
        %v1424 = vld [vmem:[#allocation3 + $0xec] sm:$0xf]
        %v1425 = vld [vmem:[#allocation3 + $0xf0] sm:$0xf]
        %v1426 = vld [vmem:[#allocation3 + $0xf4] sm:$0xf]
        %v1427 = vld [vmem:[#allocation3 + $0xf8] sm:$0xf]
        %v1428 = vld [vmem:[#allocation3 + $0xfc] sm:$0xf]
        %v1445 = vunpack.c.l.b16 %v1413
        %v1446 = vunpack.c.l.b16 %v1414
        %v1447 = vunpack.c.l.b16 %v1415
        %v1448 = vunpack.c.l.b16 %v1416
        %v1449 = vunpack.c.l.b16 %v1417
        %v1450 = vunpack.c.l.b16 %v1418
        %v1451 = vunpack.c.l.b16 %v1419
        %v1452 = vunpack.c.l.b16 %v1420
        %v1453 = vunpack.c.l.b16 %v1421
        %v1454 = vunpack.c.l.b16 %v1422
        %v1455 = vunpack.c.l.b16 %v1423
        %v1456 = vunpack.c.l.b16 %v1424
        %v1457 = vunpack.c.l.b16 %v1425
        %v1458 = vunpack.c.l.b16 %v1426
        %v1459 = vunpack.c.l.b16 %v1427
        %v1460 = vunpack.c.l.b16 %v1428
        %v1461 = vpack.c.b16 %v1446, %v1445
        %v1462 = vpack.c.b16 %v1448, %v1447
        %v1463 = vpack.c.b16 %v1450, %v1449
        %v1464 = vpack.c.b16 %v1452, %v1451
        %v1465 = vpack.c.b16 %v1454, %v1453
        %v1466 = vpack.c.b16 %v1456, %v1455
        %v1467 = vpack.c.b16 %v1458, %v1457
        %v1468 = vpack.c.b16 %v1460, %v1459
        %1477 = vmatprep.subr.bf16.mxu0 0
        %1478 = vmatpush1.bf16.msra.mxu0 %v1461
        %1479 = vmatprep.subr.bf16.mxu0 0
        %1480 = vmatpush1.bf16.msra.mxu0 %v1462
        %1481 = vmatprep.subr.bf16.mxu0 0
        %1482 = vmatpush1.bf16.msra.mxu0 %v1463
        %1483 = vmatprep.subr.bf16.mxu0 0
        %1484 = vmatpush1.bf16.msra.mxu0 %v1464
        %1485 = vmatprep.subr.bf16.mxu0 0
        %1486 = vmatpush1.bf16.msra.mxu0 %v1465
        %1487 = vmatprep.subr.bf16.mxu0 0
        %1488 = vmatpush1.bf16.msra.mxu0 %v1466
        %1489 = vmatprep.subr.bf16.mxu0 0
        %1490 = vmatpush1.bf16.msra.mxu0 %v1467
        %1491 = vmatprep.subr.bf16.mxu0 0
        %1492 = vmatpush1.bf16.msra.mxu0 %v1468
        %1493 = vmatprep.subr.bf16.mxu0 0
        %1494 = vmatpush1.bf16.msra.mxu0 0
        %1495 = vmatprep.subr.bf16.mxu0 0
        %1496 = vmatpush1.bf16.msra.mxu0 0
        %1497 = vmatprep.subr.bf16.mxu0 0
        %1498 = vmatpush1.bf16.msra.mxu0 0
        %1499 = vmatprep.subr.bf16.mxu0 0
        %1500 = vmatpush1.bf16.msra.mxu0 0
        %1501 = vmatprep.subr.bf16.mxu0 0
        %1502 = vmatpush1.bf16.msra.mxu0 0
        %1503 = vmatprep.subr.bf16.mxu0 0
        %1504 = vmatpush1.bf16.msra.mxu0 0
        %1505 = vmatprep.subr.bf16.mxu0 0
        %1506 = vmatpush1.bf16.msra.mxu0 0
        %1507 = vmatprep.subr.bf16.mxu0 0
        %1508 = vmatpush1.bf16.msra.mxu0 0
        %1509 = vmatprep.mubr.bf16.mxu0 0
        %1510 = vmatmul.mubr.bf16.gmra.mrb[0].mxu0 %v1409
        %v1511 = vpop.f32.mrb[0].mxu0
        %v1512 = vadd.f32 0.0, %v1511
        %v1513 = vpop.f32.mrb[0].mxu0
        %v1514 = vpop.f32.mrb[0].mxu0
        %v1515 = vadd.f32 0.0, %v1514
        %v1516 = vpop.f32.mrb[0].mxu0
        %1517 = vmatprep.mubr.bf16.mxu0 0
        %1518 = vmatmul.mubr.bf16.gmra.mrb[0].mxu0 %v1410
        %v1519 = vpop.f32.mrb[0].mxu0
        %v1520 = vadd.f32 0.0, %v1519
        %v1521 = vpop.f32.mrb[0].mxu0
        %v1522 = vpop.f32.mrb[0].mxu0
        %v1523 = vadd.f32 0.0, %v1522
        %v1524 = vpop.f32.mrb[0].mxu0
        %1525 = vmatprep.mubr.bf16.mxu0 0
        %1526 = vmatmul.mubr.bf16.gmra.mrb[0].mxu0 %v1411
        %v1527 = vpop.f32.mrb[0].mxu0
        %v1528 = vadd.f32 0.0, %v1527
        %v1529 = vpop.f32.mrb[0].mxu0
        %v1530 = vpop.f32.mrb[0].mxu0
        %v1531 = vadd.f32 0.0, %v1530
        %v1532 = vpop.f32.mrb[0].mxu0
        %1533 = vmatprep.mubr.bf16.mxu0 0
        %1534 = vmatmul.mubr.bf16.gmra.mrb[0].mxu0 %v1412
        %v1535 = vpop.f32.mrb[0].mxu0
        %v1536 = vadd.f32 0.0, %v1535
        %v1537 = vpop.f32.mrb[0].mxu0
        %v1538 = vpop.f32.mrb[0].mxu0
        %v1539 = vadd.f32 0.0, %v1538
        %v1540 = vpop.f32.mrb[0].mxu0
        %1541 = vdwg.mxu0
        %v1542 = vadd.f32 %v1305, %v1512
        %v1543 = vadd.f32 %v1306, %v1515
        %v1544 = vadd.f32 %v1307, %v1520
        %v1545 = vadd.f32 %v1308, %v1523
        %v1546 = vadd.f32 %v1309, %v1528
        %v1547 = vadd.f32 %v1310, %v1531
        %v1548 = vadd.f32 %v1311, %v1536
        %v1549 = vadd.f32 %v1312, %v1539
        %v1550 = vld [vmem:[#allocation2 + $0x10] sm:$0xff]
        %v1551 = vld [vmem:[#allocation2 + $0x18] sm:$0xff]
        %v1552 = vld [vmem:[#allocation2 + $0x20] sm:$0xff]
        %v1553 = vld [vmem:[#allocation2 + $0x28] sm:$0xff]
        %v1554 = vld [vmem:[#allocation2 + $0x30] sm:$0xff]
        %v1555 = vld [vmem:[#allocation2 + $0x38] sm:$0xff]
        %v1556 = vld [vmem:[#allocation2 + $0x40] sm:$0xff]
        %v1557 = vld [vmem:[#allocation2 + $0x48] sm:$0xff]
        %vm1558 = vmand %vm1337, %vm750
        %vm1559 = vmand %vm1338, %vm751
        %vm1560 = vmand %vm1339, %vm752
        %vm1561 = vmand %vm1340, %vm753
        %vm1562 = vmand %vm1341, %vm754
        %vm1563 = vmand %vm1342, %vm755
        %vm1564 = vmand %vm1343, %vm756
        %vm1565 = vmand %vm1344, %vm757
        %vm1566 = vmand %vm1558, %vm766
        %vm1567 = vmand %vm1559, %vm767
        %vm1568 = vmand %vm1560, %vm768
        %vm1569 = vmand %vm1561, %vm769
        %vm1570 = vmand %vm1562, %vm770
        %vm1571 = vmand %vm1563, %vm771
        %vm1572 = vmand %vm1564, %vm772
        %vm1573 = vmand %vm1565, %vm773
        %v1574 = vsel %vm1566, 1, 0
        %v1575 = vsel %vm1567, 1, 0
        %v1576 = vsel %vm1568, 1, 0
        %v1577 = vsel %vm1569, 1, 0
        %v1578 = vsel %vm1570, 1, 0
        %v1579 = vsel %vm1571, 1, 0
        %v1580 = vsel %vm1572, 1, 0
        %v1581 = vsel %vm1573, 1, 0
        %1582 = vset.pattern.permute.xlu0 0
        %1583 = vperm.xlu0 %1582, %v1574
        %v1584 = vpop.permute.xlu0 %1583
        %1585 = vset.pattern.permute.xlu0 0
        %1586 = vperm.xlu0 %1585, %v1575
        %v1587 = vpop.permute.xlu0 %1586
        %1588 = vset.pattern.permute.xlu0 0
        %1589 = vperm.xlu0 %1588, %v1576
        %v1590 = vpop.permute.xlu0 %1589
        %1591 = vset.pattern.permute.xlu0 0
        %1592 = vperm.xlu0 %1591, %v1577
        %v1593 = vpop.permute.xlu0 %1592
        %1594 = vset.pattern.permute.xlu0 0
        %1595 = vperm.xlu0 %1594, %v1578
        %v1596 = vpop.permute.xlu0 %1595
        %1597 = vset.pattern.permute.xlu0 0
        %1598 = vperm.xlu0 %1597, %v1579
        %v1599 = vpop.permute.xlu0 %1598
        %1600 = vset.pattern.permute.xlu0 0
        %1601 = vperm.xlu0 %1600, %v1580
        %v1602 = vpop.permute.xlu0 %1601
        %1603 = vset.pattern.permute.xlu0 0
        %1604 = vperm.xlu0 %1603, %v1581
        %v1605 = vpop.permute.xlu0 %1604
        %vm1606 = vcmp.eq.s32.totalorder %v1584, 1
        %vm1607 = vcmp.eq.s32.totalorder %v1587, 1
        %vm1608 = vcmp.eq.s32.totalorder %v1590, 1
        %vm1609 = vcmp.eq.s32.totalorder %v1593, 1
        %vm1610 = vcmp.eq.s32.totalorder %v1596, 1
        %vm1611 = vcmp.eq.s32.totalorder %v1599, 1
        %vm1612 = vcmp.eq.s32.totalorder %v1602, 1
        %vm1613 = vcmp.eq.s32.totalorder %v1605, 1
        %v1614 = vsel %vm1606, %v1550, 0.0
        %v1615 = vsel %vm1607, %v1551, 0.0
        %v1616 = vsel %vm1608, %v1552, 0.0
        %v1617 = vsel %vm1609, %v1553, 0.0
        %v1618 = vsel %vm1610, %v1554, 0.0
        %v1619 = vsel %vm1611, %v1555, 0.0
        %v1620 = vsel %vm1612, %v1556, 0.0
        %v1621 = vsel %vm1613, %v1557, 0.0
        %v1622 = vpack.c.bf16 %v1615, %v1614
        %v1623 = vpack.c.bf16 %v1617, %v1616
        %v1624 = vpack.c.bf16 %v1619, %v1618
        %v1625 = vpack.c.bf16 %v1621, %v1620
        %v1626 = vld [vmem:[#allocation3 + $0x100] sm:$0xf]
        %v1627 = vld [vmem:[#allocation3 + $0x104] sm:$0xf]
        %v1628 = vld [vmem:[#allocation3 + $0x108] sm:$0xf]
        %v1629 = vld [vmem:[#allocation3 + $0x10c] sm:$0xf]
        %v1630 = vld [vmem:[#allocation3 + $0x110] sm:$0xf]
        %v1631 = vld [vmem:[#allocation3 + $0x114] sm:$0xf]
        %v1632 = vld [vmem:[#allocation3 + $0x118] sm:$0xf]
        %v1633 = vld [vmem:[#allocation3 + $0x11c] sm:$0xf]
        %v1634 = vld [vmem:[#allocation3 + $0x120] sm:$0xf]
        %v1635 = vld [vmem:[#allocation3 + $0x124] sm:$0xf]
        %v1636 = vld [vmem:[#allocation3 + $0x128] sm:$0xf]
        %v1637 = vld [vmem:[#allocation3 + $0x12c] sm:$0xf]
        %v1638 = vld [vmem:[#allocation3 + $0x130] sm:$0xf]
        %v1639 = vld [vmem:[#allocation3 + $0x134] sm:$0xf]
        %v1640 = vld [vmem:[#allocation3 + $0x138] sm:$0xf]
        %v1641 = vld [vmem:[#allocation3 + $0x13c] sm:$0xf]
        %v1658 = vunpack.c.l.b16 %v1626
        %v1659 = vunpack.c.l.b16 %v1627
        %v1660 = vunpack.c.l.b16 %v1628
        %v1661 = vunpack.c.l.b16 %v1629
        %v1662 = vunpack.c.l.b16 %v1630
        %v1663 = vunpack.c.l.b16 %v1631
        %v1664 = vunpack.c.l.b16 %v1632
        %v1665 = vunpack.c.l.b16 %v1633
        %v1666 = vunpack.c.l.b16 %v1634
        %v1667 = vunpack.c.l.b16 %v1635
        %v1668 = vunpack.c.l.b16 %v1636
        %v1669 = vunpack.c.l.b16 %v1637
        %v1670 = vunpack.c.l.b16 %v1638
        %v1671 = vunpack.c.l.b16 %v1639
        %v1672 = vunpack.c.l.b16 %v1640
        %v1673 = vunpack.c.l.b16 %v1641
        %v1674 = vpack.c.b16 %v1659, %v1658
        %v1675 = vpack.c.b16 %v1661, %v1660
        %v1676 = vpack.c.b16 %v1663, %v1662
        %v1677 = vpack.c.b16 %v1665, %v1664
        %v1678 = vpack.c.b16 %v1667, %v1666
        %v1679 = vpack.c.b16 %v1669, %v1668
        %v1680 = vpack.c.b16 %v1671, %v1670
        %v1681 = vpack.c.b16 %v1673, %v1672
        %1690 = vmatprep.subr.bf16.mxu0 0
        %1691 = vmatpush1.bf16.msra.mxu0 %v1674
        %1692 = vmatprep.subr.bf16.mxu0 0
        %1693 = vmatpush1.bf16.msra.mxu0 %v1675
        %1694 = vmatprep.subr.bf16.mxu0 0
        %1695 = vmatpush1.bf16.msra.mxu0 %v1676
        %1696 = vmatprep.subr.bf16.mxu0 0
        %1697 = vmatpush1.bf16.msra.mxu0 %v1677
        %1698 = vmatprep.subr.bf16.mxu0 0
        %1699 = vmatpush1.bf16.msra.mxu0 %v1678
        %1700 = vmatprep.subr.bf16.mxu0 0
        %1701 = vmatpush1.bf16.msra.mxu0 %v1679
        %1702 = vmatprep.subr.bf16.mxu0 0
        %1703 = vmatpush1.bf16.msra.mxu0 %v1680
        %1704 = vmatprep.subr.bf16.mxu0 0
        %1705 = vmatpush1.bf16.msra.mxu0 %v1681
        %1706 = vmatprep.subr.bf16.mxu0 0
        %1707 = vmatpush1.bf16.msra.mxu0 0
        %1708 = vmatprep.subr.bf16.mxu0 0
        %1709 = vmatpush1.bf16.msra.mxu0 0
        %1710 = vmatprep.subr.bf16.mxu0 0
        %1711 = vmatpush1.bf16.msra.mxu0 0
        %1712 = vmatprep.subr.bf16.mxu0 0
        %1713 = vmatpush1.bf16.msra.mxu0 0
        %1714 = vmatprep.subr.bf16.mxu0 0
        %1715 = vmatpush1.bf16.msra.mxu0 0
        %1716 = vmatprep.subr.bf16.mxu0 0
        %1717 = vmatpush1.bf16.msra.mxu0 0
        %1718 = vmatprep.subr.bf16.mxu0 0
        %1719 = vmatpush1.bf16.msra.mxu0 0
        %1720 = vmatprep.subr.bf16.mxu0 0
        %1721 = vmatpush1.bf16.msra.mxu0 0
        %1722 = vmatprep.mubr.bf16.mxu0 0
        %1723 = vmatmul.mubr.bf16.gmra.mrb[0].mxu0 %v1622
        %v1724 = vpop.f32.mrb[0].mxu0
        %v1725 = vadd.f32 0.0, %v1724
        %v1726 = vpop.f32.mrb[0].mxu0
        %v1727 = vpop.f32.mrb[0].mxu0
        %v1728 = vadd.f32 0.0, %v1727
        %v1729 = vpop.f32.mrb[0].mxu0
        %1730 = vmatprep.mubr.bf16.mxu0 0
        %1731 = vmatmul.mubr.bf16.gmra.mrb[0].mxu0 %v1623
        %v1732 = vpop.f32.mrb[0].mxu0
        %v1733 = vadd.f32 0.0, %v1732
        %v1734 = vpop.f32.mrb[0].mxu0
        %v1735 = vpop.f32.mrb[0].mxu0
        %v1736 = vadd.f32 0.0, %v1735
        %v1737 = vpop.f32.mrb[0].mxu0
        %1738 = vmatprep.mubr.bf16.mxu0 0
        %1739 = vmatmul.mubr.bf16.gmra.mrb[0].mxu0 %v1624
        %v1740 = vpop.f32.mrb[0].mxu0
        %v1741 = vadd.f32 0.0, %v1740
        %v1742 = vpop.f32.mrb[0].mxu0
        %v1743 = vpop.f32.mrb[0].mxu0
        %v1744 = vadd.f32 0.0, %v1743
        %v1745 = vpop.f32.mrb[0].mxu0
        %1746 = vmatprep.mubr.bf16.mxu0 0
        %1747 = vmatmul.mubr.bf16.gmra.mrb[0].mxu0 %v1625
        %v1748 = vpop.f32.mrb[0].mxu0
        %v1749 = vadd.f32 0.0, %v1748
        %v1750 = vpop.f32.mrb[0].mxu0
        %v1751 = vpop.f32.mrb[0].mxu0
        %v1752 = vadd.f32 0.0, %v1751
        %v1753 = vpop.f32.mrb[0].mxu0
        %1754 = vdwg.mxu0
        %v1755 = vadd.f32 %v1542, %v1725
        %v1756 = vadd.f32 %v1543, %v1728
        %v1757 = vadd.f32 %v1544, %v1733
        %v1758 = vadd.f32 %v1545, %v1736
        %v1759 = vadd.f32 %v1546, %v1741
        %v1760 = vadd.f32 %v1547, %v1744
        %v1761 = vadd.f32 %v1548, %v1749
        %v1762 = vadd.f32 %v1549, %v1752
        %v1763 = vld [vmem:[#allocation2 + $0x11] sm:$0xff]
        %v1764 = vld [vmem:[#allocation2 + $0x19] sm:$0xff]
        %v1765 = vld [vmem:[#allocation2 + $0x21] sm:$0xff]
        %v1766 = vld [vmem:[#allocation2 + $0x29] sm:$0xff]
        %v1767 = vld [vmem:[#allocation2 + $0x31] sm:$0xff]
        %v1768 = vld [vmem:[#allocation2 + $0x39] sm:$0xff]
        %v1769 = vld [vmem:[#allocation2 + $0x41] sm:$0xff]
        %v1770 = vld [vmem:[#allocation2 + $0x49] sm:$0xff]
        %vm1771 = vmand %vm1337, %vm1092
        %vm1772 = vmand %vm1338, %vm1093
        %vm1773 = vmand %vm1339, %vm1094
        %vm1774 = vmand %vm1340, %vm1095
        %vm1775 = vmand %vm1341, %vm1096
        %vm1776 = vmand %vm1342, %vm1097
        %vm1777 = vmand %vm1343, %vm1098
        %vm1778 = vmand %vm1344, %vm1099
        %vm1779 = vmand %vm1771, %vm1108
        %vm1780 = vmand %vm1772, %vm1109
        %vm1781 = vmand %vm1773, %vm1110
        %vm1782 = vmand %vm1774, %vm1111
        %vm1783 = vmand %vm1775, %vm1112
        %vm1784 = vmand %vm1776, %vm1113
        %vm1785 = vmand %vm1777, %vm1114
        %vm1786 = vmand %vm1778, %vm1115
        %v1787 = vsel %vm1779, 1, 0
        %v1788 = vsel %vm1780, 1, 0
        %v1789 = vsel %vm1781, 1, 0
        %v1790 = vsel %vm1782, 1, 0
        %v1791 = vsel %vm1783, 1, 0
        %v1792 = vsel %vm1784, 1, 0
        %v1793 = vsel %vm1785, 1, 0
        %v1794 = vsel %vm1786, 1, 0
        %1795 = vset.pattern.permute.xlu0 0
        %1796 = vperm.xlu0 %1795, %v1787
        %v1797 = vpop.permute.xlu0 %1796
        %1798 = vset.pattern.permute.xlu0 0
        %1799 = vperm.xlu0 %1798, %v1788
        %v1800 = vpop.permute.xlu0 %1799
        %1801 = vset.pattern.permute.xlu0 0
        %1802 = vperm.xlu0 %1801, %v1789
        %v1803 = vpop.permute.xlu0 %1802
        %1804 = vset.pattern.permute.xlu0 0
        %1805 = vperm.xlu0 %1804, %v1790
        %v1806 = vpop.permute.xlu0 %1805
        %1807 = vset.pattern.permute.xlu0 0
        %1808 = vperm.xlu0 %1807, %v1791
        %v1809 = vpop.permute.xlu0 %1808
        %1810 = vset.pattern.permute.xlu0 0
        %1811 = vperm.xlu0 %1810, %v1792
        %v1812 = vpop.permute.xlu0 %1811
        %1813 = vset.pattern.permute.xlu0 0
        %1814 = vperm.xlu0 %1813, %v1793
        %v1815 = vpop.permute.xlu0 %1814
        %1816 = vset.pattern.permute.xlu0 0
        %1817 = vperm.xlu0 %1816, %v1794
        %v1818 = vpop.permute.xlu0 %1817
        %vm1819 = vcmp.eq.s32.totalorder %v1797, 1
        %vm1820 = vcmp.eq.s32.totalorder %v1800, 1
        %vm1821 = vcmp.eq.s32.totalorder %v1803, 1
        %vm1822 = vcmp.eq.s32.totalorder %v1806, 1
        %vm1823 = vcmp.eq.s32.totalorder %v1809, 1
        %vm1824 = vcmp.eq.s32.totalorder %v1812, 1
        %vm1825 = vcmp.eq.s32.totalorder %v1815, 1
        %vm1826 = vcmp.eq.s32.totalorder %v1818, 1
        %v1827 = vsel %vm1819, %v1763, 0.0
        %v1828 = vsel %vm1820, %v1764, 0.0
        %v1829 = vsel %vm1821, %v1765, 0.0
        %v1830 = vsel %vm1822, %v1766, 0.0
        %v1831 = vsel %vm1823, %v1767, 0.0
        %v1832 = vsel %vm1824, %v1768, 0.0
        %v1833 = vsel %vm1825, %v1769, 0.0
        %v1834 = vsel %vm1826, %v1770, 0.0
        %v1835 = vpack.c.bf16 %v1828, %v1827
        %v1836 = vpack.c.bf16 %v1830, %v1829
        %v1837 = vpack.c.bf16 %v1832, %v1831
        %v1838 = vpack.c.bf16 %v1834, %v1833
        %v1839 = vld [vmem:[#allocation3 + $0x140] sm:$0xf]
        %v1840 = vld [vmem:[#allocation3 + $0x144] sm:$0xf]
        %v1841 = vld [vmem:[#allocation3 + $0x148] sm:$0xf]
        %v1842 = vld [vmem:[#allocation3 + $0x14c] sm:$0xf]
        %v1843 = vld [vmem:[#allocation3 + $0x150] sm:$0xf]
        %v1844 = vld [vmem:[#allocation3 + $0x154] sm:$0xf]
        %v1845 = vld [vmem:[#allocation3 + $0x158] sm:$0xf]
        %v1846 = vld [vmem:[#allocation3 + $0x15c] sm:$0xf]
        %v1847 = vld [vmem:[#allocation3 + $0x160] sm:$0xf]
        %v1848 = vld [vmem:[#allocation3 + $0x164] sm:$0xf]
        %v1849 = vld [vmem:[#allocation3 + $0x168] sm:$0xf]
        %v1850 = vld [vmem:[#allocation3 + $0x16c] sm:$0xf]
        %v1851 = vld [vmem:[#allocation3 + $0x170] sm:$0xf]
        %v1852 = vld [vmem:[#allocation3 + $0x174] sm:$0xf]
        %v1853 = vld [vmem:[#allocation3 + $0x178] sm:$0xf]
        %v1854 = vld [vmem:[#allocation3 + $0x17c] sm:$0xf]
        %v1871 = vunpack.c.l.b16 %v1839
        %v1872 = vunpack.c.l.b16 %v1840
        %v1873 = vunpack.c.l.b16 %v1841
        %v1874 = vunpack.c.l.b16 %v1842
        %v1875 = vunpack.c.l.b16 %v1843
        %v1876 = vunpack.c.l.b16 %v1844
        %v1877 = vunpack.c.l.b16 %v1845
        %v1878 = vunpack.c.l.b16 %v1846
        %v1879 = vunpack.c.l.b16 %v1847
        %v1880 = vunpack.c.l.b16 %v1848
        %v1881 = vunpack.c.l.b16 %v1849
        %v1882 = vunpack.c.l.b16 %v1850
        %v1883 = vunpack.c.l.b16 %v1851
        %v1884 = vunpack.c.l.b16 %v1852
        %v1885 = vunpack.c.l.b16 %v1853
        %v1886 = vunpack.c.l.b16 %v1854
        %v1887 = vpack.c.b16 %v1872, %v1871
        %v1888 = vpack.c.b16 %v1874, %v1873
        %v1889 = vpack.c.b16 %v1876, %v1875
        %v1890 = vpack.c.b16 %v1878, %v1877
        %v1891 = vpack.c.b16 %v1880, %v1879
        %v1892 = vpack.c.b16 %v1882, %v1881
        %v1893 = vpack.c.b16 %v1884, %v1883
        %v1894 = vpack.c.b16 %v1886, %v1885
        %1903 = vmatprep.subr.bf16.mxu0 0
        %1904 = vmatpush1.bf16.msra.mxu0 %v1887
        %1905 = vmatprep.subr.bf16.mxu0 0
        %1906 = vmatpush1.bf16.msra.mxu0 %v1888
        %1907 = vmatprep.subr.bf16.mxu0 0
        %1908 = vmatpush1.bf16.msra.mxu0 %v1889
        %1909 = vmatprep.subr.bf16.mxu0 0
        %1910 = vmatpush1.bf16.msra.mxu0 %v1890
        %1911 = vmatprep.subr.bf16.mxu0 0
        %1912 = vmatpush1.bf16.msra.mxu0 %v1891
        %1913 = vmatprep.subr.bf16.mxu0 0
        %1914 = vmatpush1.bf16.msra.mxu0 %v1892
        %1915 = vmatprep.subr.bf16.mxu0 0
        %1916 = vmatpush1.bf16.msra.mxu0 %v1893
        %1917 = vmatprep.subr.bf16.mxu0 0
        %1918 = vmatpush1.bf16.msra.mxu0 %v1894
        %1919 = vmatprep.subr.bf16.mxu0 0
        %1920 = vmatpush1.bf16.msra.mxu0 0
        %1921 = vmatprep.subr.bf16.mxu0 0
        %1922 = vmatpush1.bf16.msra.mxu0 0
        %1923 = vmatprep.subr.bf16.mxu0 0
        %1924 = vmatpush1.bf16.msra.mxu0 0
        %1925 = vmatprep.subr.bf16.mxu0 0
        %1926 = vmatpush1.bf16.msra.mxu0 0
        %1927 = vmatprep.subr.bf16.mxu0 0
        %1928 = vmatpush1.bf16.msra.mxu0 0
        %1929 = vmatprep.subr.bf16.mxu0 0
        %1930 = vmatpush1.bf16.msra.mxu0 0
        %1931 = vmatprep.subr.bf16.mxu0 0
        %1932 = vmatpush1.bf16.msra.mxu0 0
        %1933 = vmatprep.subr.bf16.mxu0 0
        %1934 = vmatpush1.bf16.msra.mxu0 0
        %1935 = vmatprep.mubr.bf16.mxu0 0
        %1936 = vmatmul.mubr.bf16.gmra.mrb[0].mxu0 %v1835
        %v1937 = vpop.f32.mrb[0].mxu0
        %v1938 = vadd.f32 0.0, %v1937
        %v1939 = vpop.f32.mrb[0].mxu0
        %v1940 = vpop.f32.mrb[0].mxu0
        %v1941 = vadd.f32 0.0, %v1940
        %v1942 = vpop.f32.mrb[0].mxu0
        %1943 = vmatprep.mubr.bf16.mxu0 0
        %1944 = vmatmul.mubr.bf16.gmra.mrb[0].mxu0 %v1836
        %v1945 = vpop.f32.mrb[0].mxu0
        %v1946 = vadd.f32 0.0, %v1945
        %v1947 = vpop.f32.mrb[0].mxu0
        %v1948 = vpop.f32.mrb[0].mxu0
        %v1949 = vadd.f32 0.0, %v1948
        %v1950 = vpop.f32.mrb[0].mxu0
        %1951 = vmatprep.mubr.bf16.mxu0 0
        %1952 = vmatmul.mubr.bf16.gmra.mrb[0].mxu0 %v1837
        %v1953 = vpop.f32.mrb[0].mxu0
        %v1954 = vadd.f32 0.0, %v1953
        %v1955 = vpop.f32.mrb[0].mxu0
        %v1956 = vpop.f32.mrb[0].mxu0
        %v1957 = vadd.f32 0.0, %v1956
        %v1958 = vpop.f32.mrb[0].mxu0
        %1959 = vmatprep.mubr.bf16.mxu0 0
        %1960 = vmatmul.mubr.bf16.gmra.mrb[0].mxu0 %v1838
        %v1961 = vpop.f32.mrb[0].mxu0
        %v1962 = vadd.f32 0.0, %v1961
        %v1963 = vpop.f32.mrb[0].mxu0
        %v1964 = vpop.f32.mrb[0].mxu0
        %v1965 = vadd.f32 0.0, %v1964
        %v1966 = vpop.f32.mrb[0].mxu0
        %1967 = vdwg.mxu0
        %v1968 = vadd.f32 %v1755, %v1938
        %v1969 = vadd.f32 %v1756, %v1941
        %v1970 = vadd.f32 %v1757, %v1946
        %v1971 = vadd.f32 %v1758, %v1949
        %v1972 = vadd.f32 %v1759, %v1954
        %v1973 = vadd.f32 %v1760, %v1957
        %v1974 = vadd.f32 %v1761, %v1962
        %v1975 = vadd.f32 %v1762, %v1965
        %v1976 = vld [vmem:[#allocation2 + $0x17] sm:$0xff]
        %v1977 = vld [vmem:[#allocation2 + $0x1f] sm:$0xff]
        %v1978 = vld [vmem:[#allocation2 + $0x27] sm:$0xff]
        %v1979 = vld [vmem:[#allocation2 + $0x2f] sm:$0xff]
        %v1980 = vld [vmem:[#allocation2 + $0x37] sm:$0xff]
        %v1981 = vld [vmem:[#allocation2 + $0x3f] sm:$0xff]
        %v1982 = vld [vmem:[#allocation2 + $0x47] sm:$0xff]
        %v1983 = vld [vmem:[#allocation2 + $0x4f] sm:$0xff]
        %v1984 = vadd.s32 %v578, 1
        %v1985 = vadd.s32 %v579, 1
        %v1986 = vadd.s32 %v580, 1
        %v1987 = vadd.s32 %v581, 1
        %v1988 = vadd.s32 %v582, 1
        %v1989 = vadd.s32 %v583, 1
        %v1990 = vadd.s32 %v584, 1
        %v1991 = vadd.s32 %v585, 1
        %vm1992 = vcmp.ge.s32.totalorder %v1984, 0
        %vm1993 = vcmp.ge.s32.totalorder %v1985, 0
        %vm1994 = vcmp.ge.s32.totalorder %v1986, 0
        %vm1995 = vcmp.ge.s32.totalorder %v1987, 0
        %vm1996 = vcmp.ge.s32.totalorder %v1988, 0
        %vm1997 = vcmp.ge.s32.totalorder %v1989, 0
        %vm1998 = vcmp.ge.s32.totalorder %v1990, 0
        %vm1999 = vcmp.ge.s32.totalorder %v1991, 0
        %vm2000 = vcmp.lt.s32.totalorder %v1984, 8
        %vm2001 = vcmp.lt.s32.totalorder %v1985, 8
        %vm2002 = vcmp.lt.s32.totalorder %v1986, 8
        %vm2003 = vcmp.lt.s32.totalorder %v1987, 8
        %vm2004 = vcmp.lt.s32.totalorder %v1988, 8
        %vm2005 = vcmp.lt.s32.totalorder %v1989, 8
        %vm2006 = vcmp.lt.s32.totalorder %v1990, 8
        %vm2007 = vcmp.lt.s32.totalorder %v1991, 8
        %vm2008 = vmand %vm1992, %vm2000
        %vm2009 = vmand %vm1993, %vm2001
        %vm2010 = vmand %vm1994, %vm2002
        %vm2011 = vmand %vm1995, %vm2003
        %vm2012 = vmand %vm1996, %vm2004
        %vm2013 = vmand %vm1997, %vm2005
        %vm2014 = vmand %vm1998, %vm2006
        %vm2015 = vmand %vm1999, %vm2007
        %vm2016 = vmand %vm2008, %vm642
        %vm2017 = vmand %vm2009, %vm643
        %vm2018 = vmand %vm2010, %vm644
        %vm2019 = vmand %vm2011, %vm645
        %vm2020 = vmand %vm2012, %vm646
        %vm2021 = vmand %vm2013, %vm647
        %vm2022 = vmand %vm2014, %vm648
        %vm2023 = vmand %vm2015, %vm649
        %vm2024 = vmand %vm2016, %vm658
        %vm2025 = vmand %vm2017, %vm659
        %vm2026 = vmand %vm2018, %vm660
        %vm2027 = vmand %vm2019, %vm661
        %vm2028 = vmand %vm2020, %vm662
        %vm2029 = vmand %vm2021, %vm663
        %vm2030 = vmand %vm2022, %vm664
        %vm2031 = vmand %vm2023, %vm665
        %v2032 = vsel %vm2024, 1, 0
        %v2033 = vsel %vm2025, 1, 0
        %v2034 = vsel %vm2026, 1, 0
        %v2035 = vsel %vm2027, 1, 0
        %v2036 = vsel %vm2028, 1, 0
        %v2037 = vsel %vm2029, 1, 0
        %v2038 = vsel %vm2030, 1, 0
        %v2039 = vsel %vm2031, 1, 0
        %2040 = vset.pattern.permute.xlu0 0
        %2041 = vperm.xlu0 %2040, %v2032
        %v2042 = vpop.permute.xlu0 %2041
        %2043 = vset.pattern.permute.xlu0 0
        %2044 = vperm.xlu0 %2043, %v2033
        %v2045 = vpop.permute.xlu0 %2044
        %2046 = vset.pattern.permute.xlu0 0
        %2047 = vperm.xlu0 %2046, %v2034
        %v2048 = vpop.permute.xlu0 %2047
        %2049 = vset.pattern.permute.xlu0 0
        %2050 = vperm.xlu0 %2049, %v2035
        %v2051 = vpop.permute.xlu0 %2050
        %2052 = vset.pattern.permute.xlu0 0
        %2053 = vperm.xlu0 %2052, %v2036
        %v2054 = vpop.permute.xlu0 %2053
        %2055 = vset.pattern.permute.xlu0 0
        %2056 = vperm.xlu0 %2055, %v2037
        %v2057 = vpop.permute.xlu0 %2056
        %2058 = vset.pattern.permute.xlu0 0
        %2059 = vperm.xlu0 %2058, %v2038
        %v2060 = vpop.permute.xlu0 %2059
        %2061 = vset.pattern.permute.xlu0 0
        %2062 = vperm.xlu0 %2061, %v2039
        %v2063 = vpop.permute.xlu0 %2062
        %vm2064 = vcmp.eq.s32.totalorder %v2042, 1
        %vm2065 = vcmp.eq.s32.totalorder %v2045, 1
        %vm2066 = vcmp.eq.s32.totalorder %v2048, 1
        %vm2067 = vcmp.eq.s32.totalorder %v2051, 1
        %vm2068 = vcmp.eq.s32.totalorder %v2054, 1
        %vm2069 = vcmp.eq.s32.totalorder %v2057, 1
        %vm2070 = vcmp.eq.s32.totalorder %v2060, 1
        %vm2071 = vcmp.eq.s32.totalorder %v2063, 1
        %v2072 = vsel %vm2064, %v1976, 0.0
        %v2073 = vsel %vm2065, %v1977, 0.0
        %v2074 = vsel %vm2066, %v1978, 0.0
        %v2075 = vsel %vm2067, %v1979, 0.0
        %v2076 = vsel %vm2068, %v1980, 0.0
        %v2077 = vsel %vm2069, %v1981, 0.0
        %v2078 = vsel %vm2070, %v1982, 0.0
        %v2079 = vsel %vm2071, %v1983, 0.0
        %v2080 = vpack.c.bf16 %v2073, %v2072
        %v2081 = vpack.c.bf16 %v2075, %v2074
        %v2082 = vpack.c.bf16 %v2077, %v2076
        %v2083 = vpack.c.bf16 %v2079, %v2078
        %v2084 = vld [vmem:[#allocation3 + $0x180] sm:$0xf]
        %v2085 = vld [vmem:[#allocation3 + $0x184] sm:$0xf]
        %v2086 = vld [vmem:[#allocation3 + $0x188] sm:$0xf]
        %v2087 = vld [vmem:[#allocation3 + $0x18c] sm:$0xf]
        %v2088 = vld [vmem:[#allocation3 + $0x190] sm:$0xf]
        %v2089 = vld [vmem:[#allocation3 + $0x194] sm:$0xf]
        %v2090 = vld [vmem:[#allocation3 + $0x198] sm:$0xf]
        %v2091 = vld [vmem:[#allocation3 + $0x19c] sm:$0xf]
        %v2092 = vld [vmem:[#allocation3 + $0x1a0] sm:$0xf]
        %v2093 = vld [vmem:[#allocation3 + $0x1a4] sm:$0xf]
        %v2094 = vld [vmem:[#allocation3 + $0x1a8] sm:$0xf]
        %v2095 = vld [vmem:[#allocation3 + $0x1ac] sm:$0xf]
        %v2096 = vld [vmem:[#allocation3 + $0x1b0] sm:$0xf]
        %v2097 = vld [vmem:[#allocation3 + $0x1b4] sm:$0xf]
        %v2098 = vld [vmem:[#allocation3 + $0x1b8] sm:$0xf]
        %v2099 = vld [vmem:[#allocation3 + $0x1bc] sm:$0xf]
        %v2116 = vunpack.c.l.b16 %v2084
        %v2117 = vunpack.c.l.b16 %v2085
        %v2118 = vunpack.c.l.b16 %v2086
        %v2119 = vunpack.c.l.b16 %v2087
        %v2120 = vunpack.c.l.b16 %v2088
        %v2121 = vunpack.c.l.b16 %v2089
        %v2122 = vunpack.c.l.b16 %v2090
        %v2123 = vunpack.c.l.b16 %v2091
        %v2124 = vunpack.c.l.b16 %v2092
        %v2125 = vunpack.c.l.b16 %v2093
        %v2126 = vunpack.c.l.b16 %v2094
        %v2127 = vunpack.c.l.b16 %v2095
        %v2128 = vunpack.c.l.b16 %v2096
        %v2129 = vunpack.c.l.b16 %v2097
        %v2130 = vunpack.c.l.b16 %v2098
        %v2131 = vunpack.c.l.b16 %v2099
        %v2132 = vpack.c.b16 %v2117, %v2116
        %v2133 = vpack.c.b16 %v2119, %v2118
        %v2134 = vpack.c.b16 %v2121, %v2120
        %v2135 = vpack.c.b16 %v2123, %v2122
        %v2136 = vpack.c.b16 %v2125, %v2124
        %v2137 = vpack.c.b16 %v2127, %v2126
        %v2138 = vpack.c.b16 %v2129, %v2128
        %v2139 = vpack.c.b16 %v2131, %v2130
        %2148 = vmatprep.subr.bf16.mxu0 0
        %2149 = vmatpush1.bf16.msra.mxu0 %v2132
        %2150 = vmatprep.subr.bf16.mxu0 0
        %2151 = vmatpush1.bf16.msra.mxu0 %v2133
        %2152 = vmatprep.subr.bf16.mxu0 0
        %2153 = vmatpush1.bf16.msra.mxu0 %v2134
        %2154 = vmatprep.subr.bf16.mxu0 0
        %2155 = vmatpush1.bf16.msra.mxu0 %v2135
        %2156 = vmatprep.subr.bf16.mxu0 0
        %2157 = vmatpush1.bf16.msra.mxu0 %v2136
        %2158 = vmatprep.subr.bf16.mxu0 0
        %2159 = vmatpush1.bf16.msra.mxu0 %v2137
        %2160 = vmatprep.subr.bf16.mxu0 0
        %2161 = vmatpush1.bf16.msra.mxu0 %v2138
        %2162 = vmatprep.subr.bf16.mxu0 0
        %2163 = vmatpush1.bf16.msra.mxu0 %v2139
        %2164 = vmatprep.subr.bf16.mxu0 0
        %2165 = vmatpush1.bf16.msra.mxu0 0
        %2166 = vmatprep.subr.bf16.mxu0 0
        %2167 = vmatpush1.bf16.msra.mxu0 0
        %2168 = vmatprep.subr.bf16.mxu0 0
        %2169 = vmatpush1.bf16.msra.mxu0 0
        %2170 = vmatprep.subr.bf16.mxu0 0
        %2171 = vmatpush1.bf16.msra.mxu0 0
        %2172 = vmatprep.subr.bf16.mxu0 0
        %2173 = vmatpush1.bf16.msra.mxu0 0
        %2174 = vmatprep.subr.bf16.mxu0 0
        %2175 = vmatpush1.bf16.msra.mxu0 0
        %2176 = vmatprep.subr.bf16.mxu0 0
        %2177 = vmatpush1.bf16.msra.mxu0 0
        %2178 = vmatprep.subr.bf16.mxu0 0
        %2179 = vmatpush1.bf16.msra.mxu0 0
        %2180 = vmatprep.mubr.bf16.mxu0 0
        %2181 = vmatmul.mubr.bf16.gmra.mrb[0].mxu0 %v2080
        %v2182 = vpop.f32.mrb[0].mxu0
        %v2183 = vadd.f32 0.0, %v2182
        %v2184 = vpop.f32.mrb[0].mxu0
        %v2185 = vpop.f32.mrb[0].mxu0
        %v2186 = vadd.f32 0.0, %v2185
        %v2187 = vpop.f32.mrb[0].mxu0
        %2188 = vmatprep.mubr.bf16.mxu0 0
        %2189 = vmatmul.mubr.bf16.gmra.mrb[0].mxu0 %v2081
        %v2190 = vpop.f32.mrb[0].mxu0
        %v2191 = vadd.f32 0.0, %v2190
        %v2192 = vpop.f32.mrb[0].mxu0
        %v2193 = vpop.f32.mrb[0].mxu0
        %v2194 = vadd.f32 0.0, %v2193
        %v2195 = vpop.f32.mrb[0].mxu0
        %2196 = vmatprep.mubr.bf16.mxu0 0
        %2197 = vmatmul.mubr.bf16.gmra.mrb[0].mxu0 %v2082
        %v2198 = vpop.f32.mrb[0].mxu0
        %v2199 = vadd.f32 0.0, %v2198
        %v2200 = vpop.f32.mrb[0].mxu0
        %v2201 = vpop.f32.mrb[0].mxu0
        %v2202 = vadd.f32 0.0, %v2201
        %v2203 = vpop.f32.mrb[0].mxu0
        %2204 = vmatprep.mubr.bf16.mxu0 0
        %2205 = vmatmul.mubr.bf16.gmra.mrb[0].mxu0 %v2083
        %v2206 = vpop.f32.mrb[0].mxu0
        %v2207 = vadd.f32 0.0, %v2206
        %v2208 = vpop.f32.mrb[0].mxu0
        %v2209 = vpop.f32.mrb[0].mxu0
        %v2210 = vadd.f32 0.0, %v2209
        %v2211 = vpop.f32.mrb[0].mxu0
        %2212 = vdwg.mxu0
        %v2213 = vadd.f32 %v1968, %v2183
        %v2214 = vadd.f32 %v1969, %v2186
        %v2215 = vadd.f32 %v1970, %v2191
        %v2216 = vadd.f32 %v1971, %v2194
        %v2217 = vadd.f32 %v1972, %v2199
        %v2218 = vadd.f32 %v1973, %v2202
        %v2219 = vadd.f32 %v1974, %v2207
        %v2220 = vadd.f32 %v1975, %v2210
        %v2221 = vld [vmem:[#allocation2 + $0x18] sm:$0xff]
        %v2222 = vld [vmem:[#allocation2 + $0x20] sm:$0xff]
        %v2223 = vld [vmem:[#allocation2 + $0x28] sm:$0xff]
        %v2224 = vld [vmem:[#allocation2 + $0x30] sm:$0xff]
        %v2225 = vld [vmem:[#allocation2 + $0x38] sm:$0xff]
        %v2226 = vld [vmem:[#allocation2 + $0x40] sm:$0xff]
        %v2227 = vld [vmem:[#allocation2 + $0x48] sm:$0xff]
        %v2228 = vld [vmem:[#allocation2 + $0x50] sm:$0xff]
        %vm2229 = vmand %vm2008, %vm750
        %vm2230 = vmand %vm2009, %vm751
        %vm2231 = vmand %vm2010, %vm752
        %vm2232 = vmand %vm2011, %vm753
        %vm2233 = vmand %vm2012, %vm754
        %vm2234 = vmand %vm2013, %vm755
        %vm2235 = vmand %vm2014, %vm756
        %vm2236 = vmand %vm2015, %vm757
        %vm2237 = vmand %vm2229, %vm766
        %vm2238 = vmand %vm2230, %vm767
        %vm2239 = vmand %vm2231, %vm768
        %vm2240 = vmand %vm2232, %vm769
        %vm2241 = vmand %vm2233, %vm770
        %vm2242 = vmand %vm2234, %vm771
        %vm2243 = vmand %vm2235, %vm772
        %vm2244 = vmand %vm2236, %vm773
        %v2245 = vsel %vm2237, 1, 0
        %v2246 = vsel %vm2238, 1, 0
        %v2247 = vsel %vm2239, 1, 0
        %v2248 = vsel %vm2240, 1, 0
        %v2249 = vsel %vm2241, 1, 0
        %v2250 = vsel %vm2242, 1, 0
        %v2251 = vsel %vm2243, 1, 0
        %v2252 = vsel %vm2244, 1, 0
        %2253 = vset.pattern.permute.xlu0 0
        %2254 = vperm.xlu0 %2253, %v2245
        %v2255 = vpop.permute.xlu0 %2254
        %2256 = vset.pattern.permute.xlu0 0
        %2257 = vperm.xlu0 %2256, %v2246
        %v2258 = vpop.permute.xlu0 %2257
        %2259 = vset.pattern.permute.xlu0 0
        %2260 = vperm.xlu0 %2259, %v2247
        %v2261 = vpop.permute.xlu0 %2260
        %2262 = vset.pattern.permute.xlu0 0
        %2263 = vperm.xlu0 %2262, %v2248
        %v2264 = vpop.permute.xlu0 %2263
        %2265 = vset.pattern.permute.xlu0 0
        %2266 = vperm.xlu0 %2265, %v2249
        %v2267 = vpop.permute.xlu0 %2266
        %2268 = vset.pattern.permute.xlu0 0
        %2269 = vperm.xlu0 %2268, %v2250
        %v2270 = vpop.permute.xlu0 %2269
        %2271 = vset.pattern.permute.xlu0 0
        %2272 = vperm.xlu0 %2271, %v2251
        %v2273 = vpop.permute.xlu0 %2272
        %2274 = vset.pattern.permute.xlu0 0
        %2275 = vperm.xlu0 %2274, %v2252
        %v2276 = vpop.permute.xlu0 %2275
        %vm2277 = vcmp.eq.s32.totalorder %v2255, 1
        %vm2278 = vcmp.eq.s32.totalorder %v2258, 1
        %vm2279 = vcmp.eq.s32.totalorder %v2261, 1
        %vm2280 = vcmp.eq.s32.totalorder %v2264, 1
        %vm2281 = vcmp.eq.s32.totalorder %v2267, 1
        %vm2282 = vcmp.eq.s32.totalorder %v2270, 1
        %vm2283 = vcmp.eq.s32.totalorder %v2273, 1
        %vm2284 = vcmp.eq.s32.totalorder %v2276, 1
        %v2285 = vsel %vm2277, %v2221, 0.0
        %v2286 = vsel %vm2278, %v2222, 0.0
        %v2287 = vsel %vm2279, %v2223, 0.0
        %v2288 = vsel %vm2280, %v2224, 0.0
        %v2289 = vsel %vm2281, %v2225, 0.0
        %v2290 = vsel %vm2282, %v2226, 0.0
        %v2291 = vsel %vm2283, %v2227, 0.0
        %v2292 = vsel %vm2284, %v2228, 0.0
        %v2293 = vpack.c.bf16 %v2286, %v2285
        %v2294 = vpack.c.bf16 %v2288, %v2287
        %v2295 = vpack.c.bf16 %v2290, %v2289
        %v2296 = vpack.c.bf16 %v2292, %v2291
        %v2297 = vld [vmem:[#allocation3 + $0x1c0] sm:$0xf]
        %v2298 = vld [vmem:[#allocation3 + $0x1c4] sm:$0xf]
        %v2299 = vld [vmem:[#allocation3 + $0x1c8] sm:$0xf]
        %v2300 = vld [vmem:[#allocation3 + $0x1cc] sm:$0xf]
        %v2301 = vld [vmem:[#allocation3 + $0x1d0] sm:$0xf]
        %v2302 = vld [vmem:[#allocation3 + $0x1d4] sm:$0xf]
        %v2303 = vld [vmem:[#allocation3 + $0x1d8] sm:$0xf]
        %v2304 = vld [vmem:[#allocation3 + $0x1dc] sm:$0xf]
        %v2305 = vld [vmem:[#allocation3 + $0x1e0] sm:$0xf]
        %v2306 = vld [vmem:[#allocation3 + $0x1e4] sm:$0xf]
        %v2307 = vld [vmem:[#allocation3 + $0x1e8] sm:$0xf]
        %v2308 = vld [vmem:[#allocation3 + $0x1ec] sm:$0xf]
        %v2309 = vld [vmem:[#allocation3 + $0x1f0] sm:$0xf]
        %v2310 = vld [vmem:[#allocation3 + $0x1f4] sm:$0xf]
        %v2311 = vld [vmem:[#allocation3 + $0x1f8] sm:$0xf]
        %v2312 = vld [vmem:[#allocation3 + $0x1fc] sm:$0xf]
        %v2329 = vunpack.c.l.b16 %v2297
        %v2330 = vunpack.c.l.b16 %v2298
        %v2331 = vunpack.c.l.b16 %v2299
        %v2332 = vunpack.c.l.b16 %v2300
        %v2333 = vunpack.c.l.b16 %v2301
        %v2334 = vunpack.c.l.b16 %v2302
        %v2335 = vunpack.c.l.b16 %v2303
        %v2336 = vunpack.c.l.b16 %v2304
        %v2337 = vunpack.c.l.b16 %v2305
        %v2338 = vunpack.c.l.b16 %v2306
        %v2339 = vunpack.c.l.b16 %v2307
        %v2340 = vunpack.c.l.b16 %v2308
        %v2341 = vunpack.c.l.b16 %v2309
        %v2342 = vunpack.c.l.b16 %v2310
        %v2343 = vunpack.c.l.b16 %v2311
        %v2344 = vunpack.c.l.b16 %v2312
        %v2345 = vpack.c.b16 %v2330, %v2329
        %v2346 = vpack.c.b16 %v2332, %v2331
        %v2347 = vpack.c.b16 %v2334, %v2333
        %v2348 = vpack.c.b16 %v2336, %v2335
        %v2349 = vpack.c.b16 %v2338, %v2337
        %v2350 = vpack.c.b16 %v2340, %v2339
        %v2351 = vpack.c.b16 %v2342, %v2341
        %v2352 = vpack.c.b16 %v2344, %v2343
        %2361 = vmatprep.subr.bf16.mxu0 0
        %2362 = vmatpush1.bf16.msra.mxu0 %v2345
        %2363 = vmatprep.subr.bf16.mxu0 0
        %2364 = vmatpush1.bf16.msra.mxu0 %v2346
        %2365 = vmatprep.subr.bf16.mxu0 0
        %2366 = vmatpush1.bf16.msra.mxu0 %v2347
        %2367 = vmatprep.subr.bf16.mxu0 0
        %2368 = vmatpush1.bf16.msra.mxu0 %v2348
        %2369 = vmatprep.subr.bf16.mxu0 0
        %2370 = vmatpush1.bf16.msra.mxu0 %v2349
        %2371 = vmatprep.subr.bf16.mxu0 0
        %2372 = vmatpush1.bf16.msra.mxu0 %v2350
        %2373 = vmatprep.subr.bf16.mxu0 0
        %2374 = vmatpush1.bf16.msra.mxu0 %v2351
        %2375 = vmatprep.subr.bf16.mxu0 0
        %2376 = vmatpush1.bf16.msra.mxu0 %v2352
        %2377 = vmatprep.subr.bf16.mxu0 0
        %2378 = vmatpush1.bf16.msra.mxu0 0
        %2379 = vmatprep.subr.bf16.mxu0 0
        %2380 = vmatpush1.bf16.msra.mxu0 0
        %2381 = vmatprep.subr.bf16.mxu0 0
        %2382 = vmatpush1.bf16.msra.mxu0 0
        %2383 = vmatprep.subr.bf16.mxu0 0
        %2384 = vmatpush1.bf16.msra.mxu0 0
        %2385 = vmatprep.subr.bf16.mxu0 0
        %2386 = vmatpush1.bf16.msra.mxu0 0
        %2387 = vmatprep.subr.bf16.mxu0 0
        %2388 = vmatpush1.bf16.msra.mxu0 0
        %2389 = vmatprep.subr.bf16.mxu0 0
        %2390 = vmatpush1.bf16.msra.mxu0 0
        %2391 = vmatprep.subr.bf16.mxu0 0
        %2392 = vmatpush1.bf16.msra.mxu0 0
        %2393 = vmatprep.mubr.bf16.mxu0 0
        %2394 = vmatmul.mubr.bf16.gmra.mrb[0].mxu0 %v2293
        %v2395 = vpop.f32.mrb[0].mxu0
        %v2396 = vadd.f32 0.0, %v2395
        %v2397 = vpop.f32.mrb[0].mxu0
        %v2398 = vpop.f32.mrb[0].mxu0
        %v2399 = vadd.f32 0.0, %v2398
        %v2400 = vpop.f32.mrb[0].mxu0
        %2401 = vmatprep.mubr.bf16.mxu0 0
        %2402 = vmatmul.mubr.bf16.gmra.mrb[0].mxu0 %v2294
        %v2403 = vpop.f32.mrb[0].mxu0
        %v2404 = vadd.f32 0.0, %v2403
        %v2405 = vpop.f32.mrb[0].mxu0
        %v2406 = vpop.f32.mrb[0].mxu0
        %v2407 = vadd.f32 0.0, %v2406
        %v2408 = vpop.f32.mrb[0].mxu0
        %2409 = vmatprep.mubr.bf16.mxu0 0
        %2410 = vmatmul.mubr.bf16.gmra.mrb[0].mxu0 %v2295
        %v2411 = vpop.f32.mrb[0].mxu0
        %v2412 = vadd.f32 0.0, %v2411
        %v2413 = vpop.f32.mrb[0].mxu0
        %v2414 = vpop.f32.mrb[0].mxu0
        %v2415 = vadd.f32 0.0, %v2414
        %v2416 = vpop.f32.mrb[0].mxu0
        %2417 = vmatprep.mubr.bf16.mxu0 0
        %2418 = vmatmul.mubr.bf16.gmra.mrb[0].mxu0 %v2296
        %v2419 = vpop.f32.mrb[0].mxu0
        %v2420 = vadd.f32 0.0, %v2419
        %v2421 = vpop.f32.mrb[0].mxu0
        %v2422 = vpop.f32.mrb[0].mxu0
        %v2423 = vadd.f32 0.0, %v2422
        %v2424 = vpop.f32.mrb[0].mxu0
        %2425 = vdwg.mxu0
        %v2426 = vadd.f32 %v2213, %v2396
        %v2427 = vadd.f32 %v2214, %v2399
        %v2428 = vadd.f32 %v2215, %v2404
        %v2429 = vadd.f32 %v2216, %v2407
        %v2430 = vadd.f32 %v2217, %v2412
        %v2431 = vadd.f32 %v2218, %v2415
        %v2432 = vadd.f32 %v2219, %v2420
        %v2433 = vadd.f32 %v2220, %v2423
        %v2434 = vld [vmem:[#allocation2 + $0x19] sm:$0xff]
        %v2435 = vld [vmem:[#allocation2 + $0x21] sm:$0xff]
        %v2436 = vld [vmem:[#allocation2 + $0x29] sm:$0xff]
        %v2437 = vld [vmem:[#allocation2 + $0x31] sm:$0xff]
        %v2438 = vld [vmem:[#allocation2 + $0x39] sm:$0xff]
        %v2439 = vld [vmem:[#allocation2 + $0x41] sm:$0xff]
        %v2440 = vld [vmem:[#allocation2 + $0x49] sm:$0xff]
        %v2441 = vld [vmem:[#allocation2 + $0x51] sm:$0xff]
        %vm2442 = vmand %vm2008, %vm1092
        %vm2443 = vmand %vm2009, %vm1093
        %vm2444 = vmand %vm2010, %vm1094
        %vm2445 = vmand %vm2011, %vm1095
        %vm2446 = vmand %vm2012, %vm1096
        %vm2447 = vmand %vm2013, %vm1097
        %vm2448 = vmand %vm2014, %vm1098
        %vm2449 = vmand %vm2015, %vm1099
        %vm2450 = vmand %vm2442, %vm1108
        %vm2451 = vmand %vm2443, %vm1109
        %vm2452 = vmand %vm2444, %vm1110
        %vm2453 = vmand %vm2445, %vm1111
        %vm2454 = vmand %vm2446, %vm1112
        %vm2455 = vmand %vm2447, %vm1113
        %vm2456 = vmand %vm2448, %vm1114
        %vm2457 = vmand %vm2449, %vm1115
        %v2458 = vsel %vm2450, 1, 0
        %v2459 = vsel %vm2451, 1, 0
        %v2460 = vsel %vm2452, 1, 0
        %v2461 = vsel %vm2453, 1, 0
        %v2462 = vsel %vm2454, 1, 0
        %v2463 = vsel %vm2455, 1, 0
        %v2464 = vsel %vm2456, 1, 0
        %v2465 = vsel %vm2457, 1, 0
        %2466 = vset.pattern.permute.xlu0 0
        %2467 = vperm.xlu0 %2466, %v2458
        %v2468 = vpop.permute.xlu0 %2467
        %2469 = vset.pattern.permute.xlu0 0
        %2470 = vperm.xlu0 %2469, %v2459
        %v2471 = vpop.permute.xlu0 %2470
        %2472 = vset.pattern.permute.xlu0 0
        %2473 = vperm.xlu0 %2472, %v2460
        %v2474 = vpop.permute.xlu0 %2473
        %2475 = vset.pattern.permute.xlu0 0
        %2476 = vperm.xlu0 %2475, %v2461
        %v2477 = vpop.permute.xlu0 %2476
        %2478 = vset.pattern.permute.xlu0 0
        %2479 = vperm.xlu0 %2478, %v2462
        %v2480 = vpop.permute.xlu0 %2479
        %2481 = vset.pattern.permute.xlu0 0
        %2482 = vperm.xlu0 %2481, %v2463
        %v2483 = vpop.permute.xlu0 %2482
        %2484 = vset.pattern.permute.xlu0 0
        %2485 = vperm.xlu0 %2484, %v2464
        %v2486 = vpop.permute.xlu0 %2485
        %2487 = vset.pattern.permute.xlu0 0
        %2488 = vperm.xlu0 %2487, %v2465
        %v2489 = vpop.permute.xlu0 %2488
        %vm2490 = vcmp.eq.s32.totalorder %v2468, 1
        %vm2491 = vcmp.eq.s32.totalorder %v2471, 1
        %vm2492 = vcmp.eq.s32.totalorder %v2474, 1
        %vm2493 = vcmp.eq.s32.totalorder %v2477, 1
        %vm2494 = vcmp.eq.s32.totalorder %v2480, 1
        %vm2495 = vcmp.eq.s32.totalorder %v2483, 1
        %vm2496 = vcmp.eq.s32.totalorder %v2486, 1
        %vm2497 = vcmp.eq.s32.totalorder %v2489, 1
        %v2498 = vsel %vm2490, %v2434, 0.0
        %v2499 = vsel %vm2491, %v2435, 0.0
        %v2500 = vsel %vm2492, %v2436, 0.0
        %v2501 = vsel %vm2493, %v2437, 0.0
        %v2502 = vsel %vm2494, %v2438, 0.0
        %v2503 = vsel %vm2495, %v2439, 0.0
        %v2504 = vsel %vm2496, %v2440, 0.0
        %v2505 = vsel %vm2497, %v2441, 0.0
        %v2506 = vpack.c.bf16 %v2499, %v2498
        %v2507 = vpack.c.bf16 %v2501, %v2500
        %v2508 = vpack.c.bf16 %v2503, %v2502
        %v2509 = vpack.c.bf16 %v2505, %v2504
        %v2510 = vld [vmem:[#allocation3 + $0x200] sm:$0xf]
        %v2511 = vld [vmem:[#allocation3 + $0x204] sm:$0xf]
        %v2512 = vld [vmem:[#allocation3 + $0x208] sm:$0xf]
        %v2513 = vld [vmem:[#allocation3 + $0x20c] sm:$0xf]
        %v2514 = vld [vmem:[#allocation3 + $0x210] sm:$0xf]
        %v2515 = vld [vmem:[#allocation3 + $0x214] sm:$0xf]
        %v2516 = vld [vmem:[#allocation3 + $0x218] sm:$0xf]
        %v2517 = vld [vmem:[#allocation3 + $0x21c] sm:$0xf]
        %v2518 = vld [vmem:[#allocation3 + $0x220] sm:$0xf]
        %v2519 = vld [vmem:[#allocation3 + $0x224] sm:$0xf]
        %v2520 = vld [vmem:[#allocation3 + $0x228] sm:$0xf]
        %v2521 = vld [vmem:[#allocation3 + $0x22c] sm:$0xf]
        %v2522 = vld [vmem:[#allocation3 + $0x230] sm:$0xf]
        %v2523 = vld [vmem:[#allocation3 + $0x234] sm:$0xf]
        %v2524 = vld [vmem:[#allocation3 + $0x238] sm:$0xf]
        %v2525 = vld [vmem:[#allocation3 + $0x23c] sm:$0xf]
        %v2542 = vunpack.c.l.b16 %v2510
        %v2543 = vunpack.c.l.b16 %v2511
        %v2544 = vunpack.c.l.b16 %v2512
        %v2545 = vunpack.c.l.b16 %v2513
        %v2546 = vunpack.c.l.b16 %v2514
        %v2547 = vunpack.c.l.b16 %v2515
        %v2548 = vunpack.c.l.b16 %v2516
        %v2549 = vunpack.c.l.b16 %v2517
        %v2550 = vunpack.c.l.b16 %v2518
        %v2551 = vunpack.c.l.b16 %v2519
        %v2552 = vunpack.c.l.b16 %v2520
        %v2553 = vunpack.c.l.b16 %v2521
        %v2554 = vunpack.c.l.b16 %v2522
        %v2555 = vunpack.c.l.b16 %v2523
        %v2556 = vunpack.c.l.b16 %v2524
        %v2557 = vunpack.c.l.b16 %v2525
        %v2558 = vpack.c.b16 %v2543, %v2542
        %v2559 = vpack.c.b16 %v2545, %v2544
        %v2560 = vpack.c.b16 %v2547, %v2546
        %v2561 = vpack.c.b16 %v2549, %v2548
        %v2562 = vpack.c.b16 %v2551, %v2550
        %v2563 = vpack.c.b16 %v2553, %v2552
        %v2564 = vpack.c.b16 %v2555, %v2554
        %v2565 = vpack.c.b16 %v2557, %v2556
        %2574 = vmatprep.subr.bf16.mxu0 0
        %2575 = vmatpush1.bf16.msra.mxu0 %v2558
        %2576 = vmatprep.subr.bf16.mxu0 0
        %2577 = vmatpush1.bf16.msra.mxu0 %v2559
        %2578 = vmatprep.subr.bf16.mxu0 0
        %2579 = vmatpush1.bf16.msra.mxu0 %v2560
        %2580 = vmatprep.subr.bf16.mxu0 0
        %2581 = vmatpush1.bf16.msra.mxu0 %v2561
        %2582 = vmatprep.subr.bf16.mxu0 0
        %2583 = vmatpush1.bf16.msra.mxu0 %v2562
        %2584 = vmatprep.subr.bf16.mxu0 0
        %2585 = vmatpush1.bf16.msra.mxu0 %v2563
        %2586 = vmatprep.subr.bf16.mxu0 0
        %2587 = vmatpush1.bf16.msra.mxu0 %v2564
        %2588 = vmatprep.subr.bf16.mxu0 0
        %2589 = vmatpush1.bf16.msra.mxu0 %v2565
        %2590 = vmatprep.subr.bf16.mxu0 0
        %2591 = vmatpush1.bf16.msra.mxu0 0
        %2592 = vmatprep.subr.bf16.mxu0 0
        %2593 = vmatpush1.bf16.msra.mxu0 0
        %2594 = vmatprep.subr.bf16.mxu0 0
        %2595 = vmatpush1.bf16.msra.mxu0 0
        %2596 = vmatprep.subr.bf16.mxu0 0
        %2597 = vmatpush1.bf16.msra.mxu0 0
        %2598 = vmatprep.subr.bf16.mxu0 0
        %2599 = vmatpush1.bf16.msra.mxu0 0
        %2600 = vmatprep.subr.bf16.mxu0 0
        %2601 = vmatpush1.bf16.msra.mxu0 0
        %2602 = vmatprep.subr.bf16.mxu0 0
        %2603 = vmatpush1.bf16.msra.mxu0 0
        %2604 = vmatprep.subr.bf16.mxu0 0
        %2605 = vmatpush1.bf16.msra.mxu0 0
        %2606 = vmatprep.mubr.bf16.mxu0 0
        %2607 = vmatmul.mubr.bf16.gmra.mrb[0].mxu0 %v2506
        %v2608 = vpop.f32.mrb[0].mxu0
        %v2609 = vadd.f32 0.0, %v2608
        %v2610 = vpop.f32.mrb[0].mxu0
        %v2611 = vpop.f32.mrb[0].mxu0
        %v2612 = vadd.f32 0.0, %v2611
        %v2613 = vpop.f32.mrb[0].mxu0
        %2614 = vmatprep.mubr.bf16.mxu0 0
        %2615 = vmatmul.mubr.bf16.gmra.mrb[0].mxu0 %v2507
        %v2616 = vpop.f32.mrb[0].mxu0
        %v2617 = vadd.f32 0.0, %v2616
        %v2618 = vpop.f32.mrb[0].mxu0
        %v2619 = vpop.f32.mrb[0].mxu0
        %v2620 = vadd.f32 0.0, %v2619
        %v2621 = vpop.f32.mrb[0].mxu0
        %2622 = vmatprep.mubr.bf16.mxu0 0
        %2623 = vmatmul.mubr.bf16.gmra.mrb[0].mxu0 %v2508
        %v2624 = vpop.f32.mrb[0].mxu0
        %v2625 = vadd.f32 0.0, %v2624
        %v2626 = vpop.f32.mrb[0].mxu0
        %v2627 = vpop.f32.mrb[0].mxu0
        %v2628 = vadd.f32 0.0, %v2627
        %v2629 = vpop.f32.mrb[0].mxu0
        %2630 = vmatprep.mubr.bf16.mxu0 0
        %2631 = vmatmul.mubr.bf16.gmra.mrb[0].mxu0 %v2509
        %v2632 = vpop.f32.mrb[0].mxu0
        %v2633 = vadd.f32 0.0, %v2632
        %v2634 = vpop.f32.mrb[0].mxu0
        %v2635 = vpop.f32.mrb[0].mxu0
        %v2636 = vadd.f32 0.0, %v2635
        %v2637 = vpop.f32.mrb[0].mxu0
        %2638 = vdwg.mxu0
        %v2639 = vadd.f32 %v2426, %v2609
        %v2640 = vadd.f32 %v2427, %v2612
        %v2641 = vadd.f32 %v2428, %v2617
        %v2642 = vadd.f32 %v2429, %v2620
        %v2643 = vadd.f32 %v2430, %v2625
        %v2644 = vadd.f32 %v2431, %v2628
        %v2645 = vadd.f32 %v2432, %v2633
        %v2646 = vadd.f32 %v2433, %v2636
        %v2647 = vld [vmem:[%s7] sm:$0x1]
        %v2649 = vlaneseq
        %v2650 = vshrl.u32 %v2649, 7
        %v2651 = vsub.s32 0, %v2650
        %v2652 = vrot.slane %v2647, %v2651
        %v2654 = vadd.f32 %v2639, %v2652
        %v2655 = vadd.f32 %v2640, %v2652
        %v2656 = vadd.f32 %v2641, %v2652
        %v2657 = vadd.f32 %v2642, %v2652
        %v2658 = vadd.f32 %v2643, %v2652
        %v2659 = vadd.f32 %v2644, %v2652
        %v2660 = vadd.f32 %v2645, %v2652
        %v2661 = vadd.f32 %v2646, %v2652
        %v2662 = vmax.f32 %v2654, 0.0
        %v2663 = vmax.f32 %v2655, 0.0
        %v2664 = vmax.f32 %v2656, 0.0
        %v2665 = vmax.f32 %v2657, 0.0
        %v2666 = vmax.f32 %v2658, 0.0
        %v2667 = vmax.f32 %v2659, 0.0
        %v2668 = vmax.f32 %v2660, 0.0
        %v2669 = vmax.f32 %v2661, 0.0
        %v2670 = vpack.c.bf16 %v2663, %v2662
        %v2671 = vpack.c.bf16 %v2665, %v2664
        %v2672 = vpack.c.bf16 %v2667, %v2666
        %v2673 = vpack.c.bf16 %v2669, %v2668
        %v2674 = vld [vmem:[%s5] sm:$0xf]
        %v2675 = vld [vmem:[%s5 + $0x4] sm:$0xf]
        %v2676 = vld [vmem:[%s5 + $0x8] sm:$0xf]
        %v2677 = vld [vmem:[%s5 + $0xc] sm:$0xf]
        %v2678 = vld [vmem:[%s5 + $0x10] sm:$0xf]
        %v2679 = vld [vmem:[%s5 + $0x14] sm:$0xf]
        %v2680 = vld [vmem:[%s5 + $0x18] sm:$0xf]
        %v2681 = vld [vmem:[%s5 + $0x1c] sm:$0xf]
        %v2682 = vld [vmem:[%s5 + $0x20] sm:$0xf]
        %v2683 = vld [vmem:[%s5 + $0x24] sm:$0xf]
        %v2684 = vld [vmem:[%s5 + $0x28] sm:$0xf]
        %v2685 = vld [vmem:[%s5 + $0x2c] sm:$0xf]
        %v2686 = vld [vmem:[%s5 + $0x30] sm:$0xf]
        %v2687 = vld [vmem:[%s5 + $0x34] sm:$0xf]
        %v2688 = vld [vmem:[%s5 + $0x38] sm:$0xf]
        %v2689 = vld [vmem:[%s5 + $0x3c] sm:$0xf]
        %v2690 = vld [vmem:[%s8] sm:$0x1]
        %v2692 = vlaneseq
        %v2693 = vshrl.u32 %v2692, 7
        %v2694 = vsub.s32 0, %v2693
        %v2695 = vrot.slane %v2690, %v2694
        %v2713 = vunpack.c.l.b16 %v2674
        %v2714 = vunpack.c.l.b16 %v2675
        %v2715 = vunpack.c.l.b16 %v2676
        %v2716 = vunpack.c.l.b16 %v2677
        %v2717 = vunpack.c.l.b16 %v2678
        %v2718 = vunpack.c.l.b16 %v2679
        %v2719 = vunpack.c.l.b16 %v2680
        %v2720 = vunpack.c.l.b16 %v2681
        %v2721 = vunpack.c.l.b16 %v2682
        %v2722 = vunpack.c.l.b16 %v2683
        %v2723 = vunpack.c.l.b16 %v2684
        %v2724 = vunpack.c.l.b16 %v2685
        %v2725 = vunpack.c.l.b16 %v2686
        %v2726 = vunpack.c.l.b16 %v2687
        %v2727 = vunpack.c.l.b16 %v2688
        %v2728 = vunpack.c.l.b16 %v2689
        %v2729 = vpack.c.b16 %v2714, %v2713
        %v2730 = vpack.c.b16 %v2716, %v2715
        %v2731 = vpack.c.b16 %v2718, %v2717
        %v2732 = vpack.c.b16 %v2720, %v2719
        %v2733 = vpack.c.b16 %v2722, %v2721
        %v2734 = vpack.c.b16 %v2724, %v2723
        %v2735 = vpack.c.b16 %v2726, %v2725
        %v2736 = vpack.c.b16 %v2728, %v2727
        %2745 = vmatprep.subr.bf16.mxu0 0
        %2746 = vmatpush1.bf16.msra.mxu0 %v2729
        %2747 = vmatprep.subr.bf16.mxu0 0
        %2748 = vmatpush1.bf16.msra.mxu0 %v2730
        %2749 = vmatprep.subr.bf16.mxu0 0
        %2750 = vmatpush1.bf16.msra.mxu0 %v2731
        %2751 = vmatprep.subr.bf16.mxu0 0
        %2752 = vmatpush1.bf16.msra.mxu0 %v2732
        %2753 = vmatprep.subr.bf16.mxu0 0
        %2754 = vmatpush1.bf16.msra.mxu0 %v2733
        %2755 = vmatprep.subr.bf16.mxu0 0
        %2756 = vmatpush1.bf16.msra.mxu0 %v2734
        %2757 = vmatprep.subr.bf16.mxu0 0
        %2758 = vmatpush1.bf16.msra.mxu0 %v2735
        %2759 = vmatprep.subr.bf16.mxu0 0
        %2760 = vmatpush1.bf16.msra.mxu0 %v2736
        %2761 = vmatprep.subr.bf16.mxu0 0
        %2762 = vmatpush1.bf16.msra.mxu0 0
        %2763 = vmatprep.subr.bf16.mxu0 0
        %2764 = vmatpush1.bf16.msra.mxu0 0
        %2765 = vmatprep.subr.bf16.mxu0 0
        %2766 = vmatpush1.bf16.msra.mxu0 0
        %2767 = vmatprep.subr.bf16.mxu0 0
        %2768 = vmatpush1.bf16.msra.mxu0 0
        %2769 = vmatprep.subr.bf16.mxu0 0
        %2770 = vmatpush1.bf16.msra.mxu0 0
        %2771 = vmatprep.subr.bf16.mxu0 0
        %2772 = vmatpush1.bf16.msra.mxu0 0
        %2773 = vmatprep.subr.bf16.mxu0 0
        %2774 = vmatpush1.bf16.msra.mxu0 0
        %2775 = vmatprep.subr.bf16.mxu0 0
        %2776 = vmatpush1.bf16.msra.mxu0 0
        %2777 = vmatprep.mubr.bf16.mxu0 0
        %2778 = vmatmul.mubr.bf16.gmra.mrb[0].mxu0 %v2670
        %v2779 = vpop.f32.mrb[0].mxu0
        %v2780 = vadd.f32 %v2695, %v2779
        %v2781 = vpop.f32.mrb[0].mxu0
        %v2782 = vpop.f32.mrb[0].mxu0
        %v2783 = vadd.f32 %v2695, %v2782
        %v2784 = vpop.f32.mrb[0].mxu0
        %2785 = vmatprep.mubr.bf16.mxu0 0
        %2786 = vmatmul.mubr.bf16.gmra.mrb[0].mxu0 %v2671
        %v2787 = vpop.f32.mrb[0].mxu0
        %v2788 = vadd.f32 %v2695, %v2787
        %v2789 = vpop.f32.mrb[0].mxu0
        %v2790 = vpop.f32.mrb[0].mxu0
        %v2791 = vadd.f32 %v2695, %v2790
        %v2792 = vpop.f32.mrb[0].mxu0
        %2793 = vmatprep.mubr.bf16.mxu0 0
        %2794 = vmatmul.mubr.bf16.gmra.mrb[0].mxu0 %v2672
        %v2795 = vpop.f32.mrb[0].mxu0
        %v2796 = vadd.f32 %v2695, %v2795
        %v2797 = vpop.f32.mrb[0].mxu0
        %v2798 = vpop.f32.mrb[0].mxu0
        %v2799 = vadd.f32 %v2695, %v2798
        %v2800 = vpop.f32.mrb[0].mxu0
        %2801 = vmatprep.mubr.bf16.mxu0 0
        %2802 = vmatmul.mubr.bf16.gmra.mrb[0].mxu0 %v2673
        %v2803 = vpop.f32.mrb[0].mxu0
        %v2804 = vadd.f32 %v2695, %v2803
        %v2805 = vpop.f32.mrb[0].mxu0
        %v2806 = vpop.f32.mrb[0].mxu0
        %v2807 = vadd.f32 %v2695, %v2806
        %v2808 = vpop.f32.mrb[0].mxu0
        %2809 = vdwg.mxu0
        %v2810 = vunpack.c.l.bf16 %v394
        %v2811 = vunpack.c.l.bf16 %v395
        %v2812 = vunpack.c.l.bf16 %v396
        %v2813 = vunpack.c.l.bf16 %v397
        %v2814 = vunpack.c.l.bf16 %v398
        %v2815 = vunpack.c.l.bf16 %v399
        %v2816 = vunpack.c.l.bf16 %v400
        %v2817 = vunpack.c.l.bf16 %v401
        %v2818 = vadd.f32 %v2780, %v2810
        %v2819 = vadd.f32 %v2783, %v2811
        %v2820 = vadd.f32 %v2788, %v2812
        %v2821 = vadd.f32 %v2791, %v2813
        %v2822 = vadd.f32 %v2796, %v2814
        %v2823 = vadd.f32 %v2799, %v2815
        %v2824 = vadd.f32 %v2804, %v2816
        %v2825 = vadd.f32 %v2807, %v2817
        %v2826 = vmax.f32 %v2818, 0.0
        %v2827 = vmax.f32 %v2819, 0.0
        %v2828 = vmax.f32 %v2820, 0.0
        %v2829 = vmax.f32 %v2821, 0.0
        %v2830 = vmax.f32 %v2822, 0.0
        %v2831 = vmax.f32 %v2823, 0.0
        %v2832 = vmax.f32 %v2824, 0.0
        %v2833 = vmax.f32 %v2825, 0.0
        %2834 = vst [vmem:[%s373] sm:$0xff] %v2826
        %2835 = vst [vmem:[%s373 + $0x8] sm:$0xff] %v2827
        %2836 = vst [vmem:[%s373 + $0x10] sm:$0xff] %v2828
        %2837 = vst [vmem:[%s373 + $0x18] sm:$0xff] %v2829
        %2838 = vst [vmem:[%s373 + $0x20] sm:$0xff] %v2830
        %2839 = vst [vmem:[%s373 + $0x28] sm:$0xff] %v2831
        %2840 = vst [vmem:[%s373 + $0x30] sm:$0xff] %v2832
        %2841 = vst [vmem:[%s373 + $0x38] sm:$0xff] %v2833
        %s2842 = sand.u32 %s236, 1
        %s2843 = scalar_lea.sflag [#allocation5], %s2842
        %s2844 = sand.u32 %s236, 1
        %s2845 = smul.addr %s2844, 64
        %s2846 = scalar_lea.vmem [#allocation6], %s2845
        // Predicated region
        $region61: #{tpu_custom_call.1} parent=55 // pred_check
          %p2847 = pneg %p246
        $region62: #{tpu_custom_call.1} parent=55 // pred_check_branch
          %2849 = sbr.rel (%p2847) target = $region64
        $region63: #{tpu_custom_call.1} parent=55 // pred_region
          %s2850 = smul.u32 8, %s24
          %s2852 = ssub.s32 1024, 1024
          %2853 = vsyncadd %s2843, %s2852
          %s2854 = smul.addr %s2850, 128
          %s2855 = scalar_lea.hbm %s9, %s2854
          %s2856 = sshll.u32 %s2846, 4
          %s2857 = int_to_ptr.vmem [resolvable:$true] %s2856
          %2862 = dma.vmem_to_hbm [thread:$0]  %s2857, 1024, %s2855, %s2843, 128, 128, 8
        $region64: #{tpu_custom_call.1} parent=55 // pred_fallthru
          _
      $region56: #{tpu_custom_call.1} parent=5 // pred_fallthru
        _
      %p2863 = scmp.le.s32.totalorder 2, %s19
      // Predicated region
      $region65: #{tpu_custom_call.1} parent=5 // pred_check
        %p2864 = pneg %p2863
      $region66: #{tpu_custom_call.1} parent=5 // pred_check_branch
        %2866 = sbr.rel (%p2864) target = $region68
      $region67: #{tpu_custom_call.1} parent=5 // pred_region
        %s2867 = ssub.s32 %s19, 2
        // Predicated region
        $region69: #{tpu_custom_call.1} parent=67 // pred_check
          %p2868 = pneg %p252
        $region70: #{tpu_custom_call.1} parent=67 // pred_check_branch
          %2870 = sbr.rel (%p2868) target = $region72
        $region71: #{tpu_custom_call.1} parent=67 // pred_region
          %s2871 = sand.u32 %s237, 1
          %s2872 = scalar_lea.sflag [#allocation5], %s2871
          %s2873 = sand.u32 %s237, 1
          %s2874 = smul.addr %s2873, 64
          %s2875 = scalar_lea.vmem [#allocation6], %s2874
          %2876 = dma.done %s2872, 1024
        $region72: #{tpu_custom_call.1} parent=67 // pred_fallthru
          _
      $region68: #{tpu_custom_call.1} parent=5 // pred_fallthru
        _
    $region6: #{tpu_custom_call.1} parent=1 // loop_footer
      %s23 = sadd.s32 1, %s19
    $region7: #{tpu_custom_call.1} parent=1 // loop_footer_branch
      %18 = sbr.rel target = $region3
    $region8: #{tpu_custom_call.1} parent=1 // loop_exit
      _
    %2877 = vsyncpa [#allocation4], 1
    %s2878 = scalar_lea.sflag [#allocation4], 1
    %2879 = vsyncpa %s2878, 1
    %2880 = vsyncpa [#allocation5], 1
    %s2881 = scalar_lea.sflag [#allocation5], 1
    %2882 = vsyncpa %s2881, 1

</llo_original>
